<compile_context>
chip_gen: v6e
topology: v6e:2x2x1
jax: 0.10.0
libtpu: 0.0.40
codegen_flags: <defaults>
</compile_context>

<pallas_src>
import numpy as np
import jax
import jax.numpy as jnp
from jax.experimental import pallas as pl
from jax.experimental.pallas import tpu as pltpu

_EPS = 1e-5          # PyTorch InstanceNorm2d default eps
_SKIP_DIM = 5        # hard-coded in ContentEncoderUnet.forward


# ---------------------------------------------------------------------------
# Host-side constant builders
# ---------------------------------------------------------------------------
def _reflect(i, n):
    if i < 0:
        return -i
    if i >= n:
        return 2 * (n - 1) - i
    return i


def _gather_matrix(h, w, k, stride, pad):
    """0/1 bf16 matrix (h*w, k*k*hout*wout) mapping a dense (C, h*w) frame to its
    tap-major im2col columns; reflect padding and stride are folded into it."""
    hout = (h + 2 * pad - k) // stride + 1
    wout = (w + 2 * pad - k) // stride + 1
    lout = hout * wout
    g = np.zeros((h * w, k * k * lout), np.float32)
    for kh in range(k):
        for kw in range(k):
            t = kh * k + kw
            for oh in range(hout):
                ih = _reflect(oh * stride + kh - pad, h)
                for ow in range(wout):
                    iw = _reflect(ow * stride + kw - pad, w)
                    g[ih * w + iw, t * lout + oh * wout + ow] = 1.0
    return jnp.asarray(g, jnp.bfloat16), hout, wout


def _flatten_weight(w):
    """(Cout, Cin, K, K) -> lane-dense (Cout, K*K*Cin) bf16, col = (kh*K+kw)*Cin + c."""
    cout, cin, k, _ = w.shape
    wf = jnp.transpose(w, (2, 3, 1, 0)).reshape(k * k * cin, cout).T
    return wf.astype(jnp.bfloat16)


def _prep_im2col(x, k, pad):
    """im2col of the network input for the 9x9 stride-1 prep conv (reflect pad).
    Rows ordered (kh*K + kw)*Cin + c to match _flatten_weight."""
    n, c, h, w = x.shape
    xp = jnp.pad(x, ((0, 0), (0, 0), (pad, pad), (pad, pad)), mode="reflect")
    cols = [xp[:, :, kh:kh + h, kw:kw + w] for kh in range(k) for kw in range(k)]
    b = jnp.stack(cols, axis=1)                       # (N, K*K, C, H, W)
    return b.reshape(n, k * k * c, h * w).astype(jnp.bfloat16)


# ---------------------------------------------------------------------------
# In-kernel helpers / kernel body
# ---------------------------------------------------------------------------
def _instance_norm(y):
    """InstanceNorm2d (affine=False) over the flattened spatial lane axis, f32."""
    mean = jnp.mean(y, axis=-1, keepdims=True)
    d = y - mean
    var = jnp.mean(d * d, axis=-1, keepdims=True)
    return d * jax.lax.rsqrt(var + _EPS)


def _make_kernel(dim, num_blocks):
    d1, d2, d4 = dim, 2 * dim, 4 * dim

    def kernel(bprep, wp, bp, g1, w1, b1, g2, w2, b2, gr, *rest):
        res_w = rest[:4 * num_blocks]
        out0, out1, out2 = rest[4 * num_blocks:4 * num_blocks + 3]
        sB1, sB2, sBr = rest[4 * num_blocks + 3:]
        l1 = out1.shape[1]
        l2 = out2.shape[1]

        # ---- stage 0: 9x9 prep conv (one K = 81*Cin matmul) + IN + ReLU ----
        y0 = jnp.dot(wp[...], bprep[...], preferred_element_type=jnp.float32) + bp[...]
        y0 = jnp.maximum(_instance_norm(y0), 0.0)                      # (dim, H*W)
        out0[...] = y0[:_SKIP_DIM, :]

        # ---- stage 1: 6x6 stride-2 downsample ----
        # gather matmul -> (dim, 36*l1); static-slice relayout -> (36*dim, l1);
        # then one K = 36*dim weight matmul.
        a = jnp.dot(y0.astype(jnp.bfloat16), g1[...], preferred_element_type=jnp.float32)
        for t in range(36):
            sB1[t * d1:(t + 1) * d1, :] = a[:, t * l1:(t + 1) * l1]
        y1 = jnp.dot(w1[...], sB1[...].astype(jnp.bfloat16),
                     preferred_element_type=jnp.float32) + b1[...]
        y1 = jnp.maximum(_instance_norm(y1), 0.0)                      # (2*dim, l1)
        out1[...] = y1[:_SKIP_DIM, :]

        # ---- stage 2: 6x6 stride-2 downsample ----
        a = jnp.dot(y1.astype(jnp.bfloat16), g2[...], preferred_element_type=jnp.float32)
        for t in range(36):
            sB2[t * d2:(t + 1) * d2, :] = a[:, t * l2:(t + 1) * l2]
        y2 = jnp.dot(w2[...], sB2[...].astype(jnp.bfloat16),
                     preferred_element_type=jnp.float32) + b2[...]
        y2 = jnp.maximum(_instance_norm(y2), 0.0)                      # (4*dim, l2)

        # ---- stage 3: ResBlocks (conv3x3+IN+ReLU -> conv3x3+IN -> +residual) ----
        x = y2
        for rb in range(num_blocks):
            wr1, br1, wr2, br2 = res_w[4 * rb:4 * rb + 4]
            a = jnp.dot(x.astype(jnp.bfloat16), gr[...], preferred_element_type=jnp.float32)
            for t in range(9):
                sBr[t * d4:(t + 1) * d4, :] = a[:, t * l2:(t + 1) * l2]
            hid = jnp.dot(wr1[...], sBr[...].astype(jnp.bfloat16),
                          preferred_element_type=jnp.float32) + br1[...]
            hid = jnp.maximum(_instance_norm(hid), 0.0)
            a = jnp.dot(hid.astype(jnp.bfloat16), gr[...], preferred_element_type=jnp.float32)
            for t in range(9):
                sBr[t * d4:(t + 1) * d4, :] = a[:, t * l2:(t + 1) * l2]
            y = jnp.dot(wr2[...], sBr[...].astype(jnp.bfloat16),
                        preferred_element_type=jnp.float32) + br2[...]
            x = _instance_norm(y) + x

        out2[...] = x

    return kernel


# ---------------------------------------------------------------------------
# Wrapper: builds constants + the fused pallas_call forward
# ---------------------------------------------------------------------------
def build_content_encoder(params, input_dim, dim, h, w, num_blocks):
    """Returns forward(x) for the fixed ContentEncoderUnet topology (2 downsamples)."""
    g1, h1, w1s = _gather_matrix(h, w, 6, 2, 2)       # dense HxW      -> 36-tap im2col
    g2, h2, w2s = _gather_matrix(h1, w1s, 6, 2, 2)    # dense H/2xW/2  -> 36-tap im2col
    gr, _, _ = _gather_matrix(h2, w2s, 3, 1, 1)       # dense H/4xW/4  -> 9-tap im2col
    l0, l1, l2 = h * w, h1 * w1s, h2 * w2s
    d4 = 4 * dim

    def _bias(b):
        return b.reshape(-1, 1).astype(jnp.float32)

    consts = [
        _flatten_weight(params["prep"]["w"]), _bias(params["prep"]["b"]),
        g1, _flatten_weight(params["down"][0]["w"]), _bias(params["down"][0]["b"]),
        g2, _flatten_weight(params["down"][1]["w"]), _bias(params["down"][1]["b"]),
        gr,
    ]
    for rp in params["res"]:
        consts += [_flatten_weight(rp["w1"]), _bias(rp["b1"]),
                   _flatten_weight(rp["w2"]), _bias(rp["b2"])]

    kernel = _make_kernel(dim, num_blocks)

    in_specs = ([pl.BlockSpec((None, 81 * input_dim, l0), lambda i: (i, 0, 0))] +
                [pl.BlockSpec(c.shape, lambda i: (0, 0)) for c in consts])
    out_specs = (
        pl.BlockSpec((None, _SKIP_DIM, l0), lambda i: (i, 0, 0)),
        pl.BlockSpec((None, _SKIP_DIM, l1), lambda i: (i, 0, 0)),
        pl.BlockSpec((None, d4, l2), lambda i: (i, 0, 0)),
    )
    scratch_shapes = [
        pltpu.VMEM((36 * dim, l1), jnp.float32),      # down1 im2col (36*dim, l1)
        pltpu.VMEM((36 * 2 * dim, l2), jnp.float32),  # down2 im2col (72*dim, l2)
        pltpu.VMEM((9 * d4, l2), jnp.float32),        # res   im2col (36*dim, l2)
    ]

    const_bytes = sum(int(c.size) * c.dtype.itemsize for c in consts)
    flops_per_sample = int(
        2 * dim * (81 * input_dim) * l0
        + 2 * dim * l0 * 36 * l1 + 2 * (2 * dim) * (36 * dim) * l1
        + 2 * (2 * dim) * l1 * 36 * l2 + 2 * d4 * (36 * 2 * dim) * l2
        + num_blocks * 2 * (2 * d4 * l2 * 9 * l2 + 2 * d4 * (9 * d4) * l2))

    def forward(x):
        n = x.shape[0]
        bprep = _prep_im2col(x, k=9, pad=4)           # (N, 81*Cin, H*W) bf16
        cost = pl.CostEstimate(
            flops=n * flops_per_sample,
            transcendentals=n * (dim + 2 * dim + d4 + num_blocks * 2 * d4),
            bytes_accessed=int(bprep.size * 2 + const_bytes
                               + n * 4 * (_SKIP_DIM * (l0 + l1) + d4 * l2)))
        out0, out1, out2 = pl.pallas_call(
            kernel,
            grid=(n,),
            in_specs=in_specs,
            out_specs=out_specs,
            out_shape=(
                jax.ShapeDtypeStruct((n, _SKIP_DIM, l0), jnp.float32),
                jax.ShapeDtypeStruct((n, _SKIP_DIM, l1), jnp.float32),
                jax.ShapeDtypeStruct((n, d4, l2), jnp.float32),
            ),
            scratch_shapes=scratch_shapes,
            compiler_params=pltpu.CompilerParams(
                dimension_semantics=("parallel",)),
            cost_estimate=cost,
        )(bprep, *consts)
        # output_reversed = [res_out, down1 skip, prep skip]
        return [out2.reshape(n, d4, h2, w2s),
                out1.reshape(n, _SKIP_DIM, h1, w1s),
                out0.reshape(n, _SKIP_DIM, h, w)]

    return forward


# ---------------------------------------------------------------------------
# Parameter init (synthetic, PyTorch module shapes) + pure-JAX reference
# ---------------------------------------------------------------------------
def init_params(key, input_dim, dim, num_downsamples, num_blocks):
    nconv = 1 + num_downsamples + 2 * num_blocks
    keys = iter(jax.random.split(key, 2 * nconv))

    def conv(cin, cout, k):
        wgt = jax.random.normal(next(keys), (cout, cin, k, k), jnp.float32)
        wgt = wgt / np.sqrt(float(cin * k * k))
        bias = jax.random.normal(next(keys), (cout,), jnp.float32) * 0.01
        return {"w": wgt, "b": bias}

    params = {"prep": conv(input_dim, dim, 9), "down": [], "res": []}
    d = dim
    for _ in range(num_downsamples):
        params["down"].append(conv(d, 2 * d, 6))
        d *= 2
    for _ in range(num_blocks):
        c1, c2 = conv(d, d, 3), conv(d, d, 3)
        params["res"].append({"w1": c1["w"], "b1": c1["b"],
                              "w2": c2["w"], "b2": c2["b"]})
    return params


def _ref_conv_block(x, w, b, stride, pad, relu=True):
    xp = jnp.pad(x, ((0, 0), (0, 0), (pad, pad), (pad, pad)), mode="reflect")
    y = jax.lax.conv_general_dilated(
        xp.astype(jnp.bfloat16), w.astype(jnp.bfloat16),
        window_strides=(stride, stride), padding="VALID",
        dimension_numbers=("NCHW", "OIHW", "NCHW"),
        preferred_element_type=jnp.float32)
    y = y + b.reshape(1, -1, 1, 1)
    mean = jnp.mean(y, axis=(2, 3), keepdims=True)
    var = jnp.mean((y - mean) ** 2, axis=(2, 3), keepdims=True)
    y = (y - mean) * jax.lax.rsqrt(var + _EPS)
    return jnp.maximum(y, 0.0) if relu else y


def reference_forward(params, x):
    t = _ref_conv_block(x, params["prep"]["w"], params["prep"]["b"], 1, 4)
    outputs = []
    for dp in params["down"]:
        outputs.append(t[:, :_SKIP_DIM])
        t = _ref_conv_block(t, dp["w"], dp["b"], 2, 2)
    for rp in params["res"]:
        hid = _ref_conv_block(t, rp["w1"], rp["b1"], 1, 1)
        t = _ref_conv_block(hid, rp["w2"], rp["b2"], 1, 1, relu=False) + t
    outputs.append(t)
    return [outputs[2], outputs[1], outputs[0]]


# ---------------------------------------------------------------------------
if __name__ == "__main__":
    key = jax.random.PRNGKey(0)
    pkey, xkey = jax.random.split(key)

    N, CIN, H, W = 2, 3, 16, 16
    DIM, NUM_DOWN, NUM_BLOCKS = 8, 2, 1

    params = init_params(pkey, CIN, DIM, NUM_DOWN, NUM_BLOCKS)
    x = jax.random.normal(xkey, (N, CIN, H, W), jnp.float32)

    fwd = jax.jit(build_content_encoder(params, CIN, DIM, H, W, NUM_BLOCKS))
    outs = fwd(x)
    for o in outs:
        jax.block_until_ready(o)

    # U-Net skip-pyramid shapes (output_reversed ordering).
    assert outs[0].shape == (N, 4 * DIM, H // 4, W // 4), outs[0].shape  # (2, 32, 4, 4)
    assert outs[1].shape == (N, _SKIP_DIM, H // 2, W // 2), outs[1].shape  # (2, 5, 8, 8)
    assert outs[2].shape == (N, _SKIP_DIM, H, W), outs[2].shape           # (2, 5, 16, 16)
    assert all(bool(jnp.all(jnp.isfinite(o))) for o in outs)

    # Numerical check against a pure-JAX reference with matching bf16 numerics.
    refs = jax.jit(reference_forward)(params, x)
    for o, r in zip(outs, refs):
        assert o.shape == r.shape
        err = float(jnp.max(jnp.abs(o - r)))
        assert err < 5e-2, f"max abs err {err}"

    print("KERNEL_OK")
</pallas_src>

<mosaic_0001>
module attributes {stable_mosaic.version = 11 : i64} {
  func.func @kernel(%arg0: i32, %arg1: memref<1x243x256xbf16, #tpu.memory_space<vmem>>, %arg2: memref<8x243xbf16, #tpu.memory_space<vmem>>, %arg3: memref<8x1xf32, #tpu.memory_space<vmem>>, %arg4: memref<256x2304xbf16, #tpu.memory_space<vmem>>, %arg5: memref<16x288xbf16, #tpu.memory_space<vmem>>, %arg6: memref<16x1xf32, #tpu.memory_space<vmem>>, %arg7: memref<64x576xbf16, #tpu.memory_space<vmem>>, %arg8: memref<32x576xbf16, #tpu.memory_space<vmem>>, %arg9: memref<32x1xf32, #tpu.memory_space<vmem>>, %arg10: memref<16x144xbf16, #tpu.memory_space<vmem>>, %arg11: memref<32x288xbf16, #tpu.memory_space<vmem>>, %arg12: memref<32x1xf32, #tpu.memory_space<vmem>>, %arg13: memref<32x288xbf16, #tpu.memory_space<vmem>>, %arg14: memref<32x1xf32, #tpu.memory_space<vmem>>, %arg15: memref<1x5x256xf32, #tpu.memory_space<vmem>>, %arg16: memref<1x5x64xf32, #tpu.memory_space<vmem>>, %arg17: memref<1x32x16xf32, #tpu.memory_space<vmem>>, %arg18: memref<288x64xf32, #tpu.memory_space<vmem>>, %arg19: memref<576x16xf32, #tpu.memory_space<vmem>>, %arg20: memref<288x16xf32, #tpu.memory_space<vmem>>) attributes {dimension_semantics = [#tpu.dimension_semantics<parallel>], iteration_bounds = array<i64: 2>, scalar_prefetch = 0 : i64, scratch_operands = 3 : i64, tpu.core_type = #tpu.core_type<tc>, window_params = [{transform_indices = @transform_0, window_bounds = array<i64: 1, 243, 256>}, {pipeline_mode = #tpu.pipeline_mode<synchronous>, transform_indices = @transform_1, window_bounds = array<i64: 8, 243>}, {pipeline_mode = #tpu.pipeline_mode<synchronous>, transform_indices = @transform_2, window_bounds = array<i64: 8, 1>}, {pipeline_mode = #tpu.pipeline_mode<synchronous>, transform_indices = @transform_3, window_bounds = array<i64: 256, 2304>}, {pipeline_mode = #tpu.pipeline_mode<synchronous>, transform_indices = @transform_4, window_bounds = array<i64: 16, 288>}, {pipeline_mode = #tpu.pipeline_mode<synchronous>, transform_indices = @transform_5, window_bounds = array<i64: 16, 1>}, {pipeline_mode = #tpu.pipeline_mode<synchronous>, transform_indices = @transform_6, window_bounds = array<i64: 64, 576>}, {pipeline_mode = #tpu.pipeline_mode<synchronous>, transform_indices = @transform_7, window_bounds = array<i64: 32, 576>}, {pipeline_mode = #tpu.pipeline_mode<synchronous>, transform_indices = @transform_8, window_bounds = array<i64: 32, 1>}, {pipeline_mode = #tpu.pipeline_mode<synchronous>, transform_indices = @transform_9, window_bounds = array<i64: 16, 144>}, {pipeline_mode = #tpu.pipeline_mode<synchronous>, transform_indices = @transform_10, window_bounds = array<i64: 32, 288>}, {pipeline_mode = #tpu.pipeline_mode<synchronous>, transform_indices = @transform_11, window_bounds = array<i64: 32, 1>}, {pipeline_mode = #tpu.pipeline_mode<synchronous>, transform_indices = @transform_12, window_bounds = array<i64: 32, 288>}, {pipeline_mode = #tpu.pipeline_mode<synchronous>, transform_indices = @transform_13, window_bounds = array<i64: 32, 1>}, {transform_indices = @transform_14, window_bounds = array<i64: 1, 5, 256>}, {transform_indices = @transform_15, window_bounds = array<i64: 1, 5, 64>}, {transform_indices = @transform_16, window_bounds = array<i64: 1, 32, 16>}]} {
    %c0 = arith.constant 0 : index
    %c0_0 = arith.constant 0 : index
    %0 = vector.load %arg2[%c0, %c0_0] : memref<8x243xbf16, #tpu.memory_space<vmem>>, vector<8x243xbf16>
    %c0_1 = arith.constant 0 : index
    %c0_2 = arith.constant 0 : index
    %c0_3 = arith.constant 0 : index
    %1 = vector.load %arg1[%c0_1, %c0_2, %c0_3] : memref<1x243x256xbf16, #tpu.memory_space<vmem>>, vector<1x243x256xbf16>
    %2 = vector.shape_cast %1 : vector<1x243x256xbf16> to vector<243x256xbf16>
    %cst = arith.constant dense<0.000000e+00> : vector<8x256xf32>
    %3 = tpu.matmul %0, %2, %cst {dimension_numbers = #tpu.dot_dimension_numbers<[1], [0], [0], [1], [0, 0, 1, 1], [], []>} : vector<8x243xbf16>, vector<243x256xbf16>, vector<8x256xf32> -> vector<8x256xf32>
    %c0_4 = arith.constant 0 : index
    %c0_5 = arith.constant 0 : index
    %4 = vector.load %arg3[%c0_4, %c0_5] : memref<8x1xf32, #tpu.memory_space<vmem>>, vector<8x1xf32>
    %5 = vector.broadcast %4 : vector<8x1xf32> to vector<8x256xf32>
    %6 = arith.addf %3, %5 : vector<8x256xf32>
    %cst_6 = arith.constant dense<0.000000e+00> : vector<8xf32>
    %7 = vector.multi_reduction <add>, %6, %cst_6 [1] : vector<8x256xf32> to vector<8xf32>
    %8 = vector.shape_cast %7 : vector<8xf32> to vector<8x1xf32>
    %cst_7 = arith.constant 2.560000e+02 : f32
    %9 = vector.broadcast %cst_7 : f32 to vector<8x1xf32>
    %10 = arith.divf %8, %9 : vector<8x1xf32>
    %11 = vector.broadcast %10 : vector<8x1xf32> to vector<8x256xf32>
    %12 = arith.subf %6, %11 : vector<8x256xf32>
    %13 = arith.mulf %12, %12 : vector<8x256xf32>
    %cst_8 = arith.constant dense<0.000000e+00> : vector<8xf32>
    %14 = vector.multi_reduction <add>, %13, %cst_8 [1] : vector<8x256xf32> to vector<8xf32>
    %15 = vector.shape_cast %14 : vector<8xf32> to vector<8x1xf32>
    %cst_9 = arith.constant 2.560000e+02 : f32
    %16 = vector.broadcast %cst_9 : f32 to vector<8x1xf32>
    %17 = arith.divf %15, %16 : vector<8x1xf32>
    %cst_10 = arith.constant 9.99999974E-6 : f32
    %18 = vector.broadcast %cst_10 : f32 to vector<8x1xf32>
    %19 = arith.addf %17, %18 : vector<8x1xf32>
    %20 = math.rsqrt %19 : vector<8x1xf32>
    %21 = vector.broadcast %20 : vector<8x1xf32> to vector<8x256xf32>
    %22 = arith.mulf %12, %21 : vector<8x256xf32>
    %cst_11 = arith.constant 0.000000e+00 : f32
    %23 = vector.broadcast %cst_11 : f32 to vector<8x256xf32>
    %24 = arith.maximumf %22, %23 : vector<8x256xf32>
    %25 = vector.extract_strided_slice %24 {offsets = [0, 0], sizes = [5, 256], strides = [1, 1]} : vector<8x256xf32> to vector<5x256xf32>
    %c0_12 = arith.constant 0 : index
    %c0_13 = arith.constant 0 : index
    %c0_14 = arith.constant 0 : index
    %26 = vector.load %arg15[%c0_12, %c0_13, %c0_14] : memref<1x5x256xf32, #tpu.memory_space<vmem>>, vector<1x5x256xf32>
    %27 = vector.shape_cast %26 : vector<1x5x256xf32> to vector<5x256xf32>
    %28 = vector.shape_cast %25 : vector<5x256xf32> to vector<1x5x256xf32>
    tpu.vector_store %arg15[%c0_12, %c0_13, %c0_14], %28 {strides = array<i32>} : memref<1x5x256xf32, #tpu.memory_space<vmem>>, vector<1x5x256xf32>,
    %29 = arith.truncf %24 : vector<8x256xf32> to vector<8x256xbf16>
    %c0_15 = arith.constant 0 : index
    %c0_16 = arith.constant 0 : index
    %30 = vector.load %arg4[%c0_15, %c0_16] : memref<256x2304xbf16, #tpu.memory_space<vmem>>, vector<256x2304xbf16>
    %cst_17 = arith.constant dense<0.000000e+00> : vector<8x2304xf32>
    %31 = tpu.matmul %29, %30, %cst_17 {dimension_numbers = #tpu.dot_dimension_numbers<[1], [0], [0], [1], [0, 0, 1, 1], [], []>} : vector<8x256xbf16>, vector<256x2304xbf16>, vector<8x2304xf32> -> vector<8x2304xf32>
    %32 = vector.extract_strided_slice %31 {offsets = [0, 0], sizes = [8, 64], strides = [1, 1]} : vector<8x2304xf32> to vector<8x64xf32>
    %c0_18 = arith.constant 0 : index
    %c0_19 = arith.constant 0 : index
    %33 = vector.load %arg18[%c0_18, %c0_19] : memref<288x64xf32, #tpu.memory_space<vmem>>, vector<8x64xf32>
    tpu.vector_store %arg18[%c0_18, %c0_19], %32 {strides = array<i32>} : memref<288x64xf32, #tpu.memory_space<vmem>>, vector<8x64xf32>,
    %34 = vector.extract_strided_slice %31 {offsets = [0, 64], sizes = [8, 64], strides = [1, 1]} : vector<8x2304xf32> to vector<8x64xf32>
    %c8 = arith.constant 8 : index
    %c0_20 = arith.constant 0 : index
    %35 = vector.load %arg18[%c8, %c0_20] : memref<288x64xf32, #tpu.memory_space<vmem>>, vector<8x64xf32>
    tpu.vector_store %arg18[%c8, %c0_20], %34 {strides = array<i32>} : memref<288x64xf32, #tpu.memory_space<vmem>>, vector<8x64xf32>,
    %36 = vector.extract_strided_slice %31 {offsets = [0, 128], sizes = [8, 64], strides = [1, 1]} : vector<8x2304xf32> to vector<8x64xf32>
    %c16 = arith.constant 16 : index
    %c0_21 = arith.constant 0 : index
    %37 = vector.load %arg18[%c16, %c0_21] : memref<288x64xf32, #tpu.memory_space<vmem>>, vector<8x64xf32>
    tpu.vector_store %arg18[%c16, %c0_21], %36 {strides = array<i32>} : memref<288x64xf32, #tpu.memory_space<vmem>>, vector<8x64xf32>,
    %38 = vector.extract_strided_slice %31 {offsets = [0, 192], sizes = [8, 64], strides = [1, 1]} : vector<8x2304xf32> to vector<8x64xf32>
    %c24 = arith.constant 24 : index
    %c0_22 = arith.constant 0 : index
    %39 = vector.load %arg18[%c24, %c0_22] : memref<288x64xf32, #tpu.memory_space<vmem>>, vector<8x64xf32>
    tpu.vector_store %arg18[%c24, %c0_22], %38 {strides = array<i32>} : memref<288x64xf32, #tpu.memory_space<vmem>>, vector<8x64xf32>,
    %40 = vector.extract_strided_slice %31 {offsets = [0, 256], sizes = [8, 64], strides = [1, 1]} : vector<8x2304xf32> to vector<8x64xf32>
    %c32 = arith.constant 32 : index
    %c0_23 = arith.constant 0 : index
    %41 = vector.load %arg18[%c32, %c0_23] : memref<288x64xf32, #tpu.memory_space<vmem>>, vector<8x64xf32>
    tpu.vector_store %arg18[%c32, %c0_23], %40 {strides = array<i32>} : memref<288x64xf32, #tpu.memory_space<vmem>>, vector<8x64xf32>,
    %42 = vector.extract_strided_slice %31 {offsets = [0, 320], sizes = [8, 64], strides = [1, 1]} : vector<8x2304xf32> to vector<8x64xf32>
    %c40 = arith.constant 40 : index
    %c0_24 = arith.constant 0 : index
    %43 = vector.load %arg18[%c40, %c0_24] : memref<288x64xf32, #tpu.memory_space<vmem>>, vector<8x64xf32>
    tpu.vector_store %arg18[%c40, %c0_24], %42 {strides = array<i32>} : memref<288x64xf32, #tpu.memory_space<vmem>>, vector<8x64xf32>,
    %44 = vector.extract_strided_slice %31 {offsets = [0, 384], sizes = [8, 64], strides = [1, 1]} : vector<8x2304xf32> to vector<8x64xf32>
    %c48 = arith.constant 48 : index
    %c0_25 = arith.constant 0 : index
    %45 = vector.load %arg18[%c48, %c0_25] : memref<288x64xf32, #tpu.memory_space<vmem>>, vector<8x64xf32>
    tpu.vector_store %arg18[%c48, %c0_25], %44 {strides = array<i32>} : memref<288x64xf32, #tpu.memory_space<vmem>>, vector<8x64xf32>,
    %46 = vector.extract_strided_slice %31 {offsets = [0, 448], sizes = [8, 64], strides = [1, 1]} : vector<8x2304xf32> to vector<8x64xf32>
    %c56 = arith.constant 56 : index
    %c0_26 = arith.constant 0 : index
    %47 = vector.load %arg18[%c56, %c0_26] : memref<288x64xf32, #tpu.memory_space<vmem>>, vector<8x64xf32>
    tpu.vector_store %arg18[%c56, %c0_26], %46 {strides = array<i32>} : memref<288x64xf32, #tpu.memory_space<vmem>>, vector<8x64xf32>,
    %48 = vector.extract_strided_slice %31 {offsets = [0, 512], sizes = [8, 64], strides = [1, 1]} : vector<8x2304xf32> to vector<8x64xf32>
    %c64 = arith.constant 64 : index
    %c0_27 = arith.constant 0 : index
    %49 = vector.load %arg18[%c64, %c0_27] : memref<288x64xf32, #tpu.memory_space<vmem>>, vector<8x64xf32>
    tpu.vector_store %arg18[%c64, %c0_27], %48 {strides = array<i32>} : memref<288x64xf32, #tpu.memory_space<vmem>>, vector<8x64xf32>,
    %50 = vector.extract_strided_slice %31 {offsets = [0, 576], sizes = [8, 64], strides = [1, 1]} : vector<8x2304xf32> to vector<8x64xf32>
    %c72 = arith.constant 72 : index
    %c0_28 = arith.constant 0 : index
    %51 = vector.load %arg18[%c72, %c0_28] : memref<288x64xf32, #tpu.memory_space<vmem>>, vector<8x64xf32>
    tpu.vector_store %arg18[%c72, %c0_28], %50 {strides = array<i32>} : memref<288x64xf32, #tpu.memory_space<vmem>>, vector<8x64xf32>,
    %52 = vector.extract_strided_slice %31 {offsets = [0, 640], sizes = [8, 64], strides = [1, 1]} : vector<8x2304xf32> to vector<8x64xf32>
    %c80 = arith.constant 80 : index
    %c0_29 = arith.constant 0 : index
    %53 = vector.load %arg18[%c80, %c0_29] : memref<288x64xf32, #tpu.memory_space<vmem>>, vector<8x64xf32>
    tpu.vector_store %arg18[%c80, %c0_29], %52 {strides = array<i32>} : memref<288x64xf32, #tpu.memory_space<vmem>>, vector<8x64xf32>,
    %54 = vector.extract_strided_slice %31 {offsets = [0, 704], sizes = [8, 64], strides = [1, 1]} : vector<8x2304xf32> to vector<8x64xf32>
    %c88 = arith.constant 88 : index
    %c0_30 = arith.constant 0 : index
    %55 = vector.load %arg18[%c88, %c0_30] : memref<288x64xf32, #tpu.memory_space<vmem>>, vector<8x64xf32>
    tpu.vector_store %arg18[%c88, %c0_30], %54 {strides = array<i32>} : memref<288x64xf32, #tpu.memory_space<vmem>>, vector<8x64xf32>,
    %56 = vector.extract_strided_slice %31 {offsets = [0, 768], sizes = [8, 64], strides = [1, 1]} : vector<8x2304xf32> to vector<8x64xf32>
    %c96 = arith.constant 96 : index
    %c0_31 = arith.constant 0 : index
    %57 = vector.load %arg18[%c96, %c0_31] : memref<288x64xf32, #tpu.memory_space<vmem>>, vector<8x64xf32>
    tpu.vector_store %arg18[%c96, %c0_31], %56 {strides = array<i32>} : memref<288x64xf32, #tpu.memory_space<vmem>>, vector<8x64xf32>,
    %58 = vector.extract_strided_slice %31 {offsets = [0, 832], sizes = [8, 64], strides = [1, 1]} : vector<8x2304xf32> to vector<8x64xf32>
    %c104 = arith.constant 104 : index
    %c0_32 = arith.constant 0 : index
    %59 = vector.load %arg18[%c104, %c0_32] : memref<288x64xf32, #tpu.memory_space<vmem>>, vector<8x64xf32>
    tpu.vector_store %arg18[%c104, %c0_32], %58 {strides = array<i32>} : memref<288x64xf32, #tpu.memory_space<vmem>>, vector<8x64xf32>,
    %60 = vector.extract_strided_slice %31 {offsets = [0, 896], sizes = [8, 64], strides = [1, 1]} : vector<8x2304xf32> to vector<8x64xf32>
    %c112 = arith.constant 112 : index
    %c0_33 = arith.constant 0 : index
    %61 = vector.load %arg18[%c112, %c0_33] : memref<288x64xf32, #tpu.memory_space<vmem>>, vector<8x64xf32>
    tpu.vector_store %arg18[%c112, %c0_33], %60 {strides = array<i32>} : memref<288x64xf32, #tpu.memory_space<vmem>>, vector<8x64xf32>,
    %62 = vector.extract_strided_slice %31 {offsets = [0, 960], sizes = [8, 64], strides = [1, 1]} : vector<8x2304xf32> to vector<8x64xf32>
    %c120 = arith.constant 120 : index
    %c0_34 = arith.constant 0 : index
    %63 = vector.load %arg18[%c120, %c0_34] : memref<288x64xf32, #tpu.memory_space<vmem>>, vector<8x64xf32>
    tpu.vector_store %arg18[%c120, %c0_34], %62 {strides = array<i32>} : memref<288x64xf32, #tpu.memory_space<vmem>>, vector<8x64xf32>,
    %64 = vector.extract_strided_slice %31 {offsets = [0, 1024], sizes = [8, 64], strides = [1, 1]} : vector<8x2304xf32> to vector<8x64xf32>
    %c128 = arith.constant 128 : index
    %c0_35 = arith.constant 0 : index
    %65 = vector.load %arg18[%c128, %c0_35] : memref<288x64xf32, #tpu.memory_space<vmem>>, vector<8x64xf32>
    tpu.vector_store %arg18[%c128, %c0_35], %64 {strides = array<i32>} : memref<288x64xf32, #tpu.memory_space<vmem>>, vector<8x64xf32>,
    %66 = vector.extract_strided_slice %31 {offsets = [0, 1088], sizes = [8, 64], strides = [1, 1]} : vector<8x2304xf32> to vector<8x64xf32>
    %c136 = arith.constant 136 : index
    %c0_36 = arith.constant 0 : index
    %67 = vector.load %arg18[%c136, %c0_36] : memref<288x64xf32, #tpu.memory_space<vmem>>, vector<8x64xf32>
    tpu.vector_store %arg18[%c136, %c0_36], %66 {strides = array<i32>} : memref<288x64xf32, #tpu.memory_space<vmem>>, vector<8x64xf32>,
    %68 = vector.extract_strided_slice %31 {offsets = [0, 1152], sizes = [8, 64], strides = [1, 1]} : vector<8x2304xf32> to vector<8x64xf32>
    %c144 = arith.constant 144 : index
    %c0_37 = arith.constant 0 : index
    %69 = vector.load %arg18[%c144, %c0_37] : memref<288x64xf32, #tpu.memory_space<vmem>>, vector<8x64xf32>
    tpu.vector_store %arg18[%c144, %c0_37], %68 {strides = array<i32>} : memref<288x64xf32, #tpu.memory_space<vmem>>, vector<8x64xf32>,
    %70 = vector.extract_strided_slice %31 {offsets = [0, 1216], sizes = [8, 64], strides = [1, 1]} : vector<8x2304xf32> to vector<8x64xf32>
    %c152 = arith.constant 152 : index
    %c0_38 = arith.constant 0 : index
    %71 = vector.load %arg18[%c152, %c0_38] : memref<288x64xf32, #tpu.memory_space<vmem>>, vector<8x64xf32>
    tpu.vector_store %arg18[%c152, %c0_38], %70 {strides = array<i32>} : memref<288x64xf32, #tpu.memory_space<vmem>>, vector<8x64xf32>,
    %72 = vector.extract_strided_slice %31 {offsets = [0, 1280], sizes = [8, 64], strides = [1, 1]} : vector<8x2304xf32> to vector<8x64xf32>
    %c160 = arith.constant 160 : index
    %c0_39 = arith.constant 0 : index
    %73 = vector.load %arg18[%c160, %c0_39] : memref<288x64xf32, #tpu.memory_space<vmem>>, vector<8x64xf32>
    tpu.vector_store %arg18[%c160, %c0_39], %72 {strides = array<i32>} : memref<288x64xf32, #tpu.memory_space<vmem>>, vector<8x64xf32>,
    %74 = vector.extract_strided_slice %31 {offsets = [0, 1344], sizes = [8, 64], strides = [1, 1]} : vector<8x2304xf32> to vector<8x64xf32>
    %c168 = arith.constant 168 : index
    %c0_40 = arith.constant 0 : index
    %75 = vector.load %arg18[%c168, %c0_40] : memref<288x64xf32, #tpu.memory_space<vmem>>, vector<8x64xf32>
    tpu.vector_store %arg18[%c168, %c0_40], %74 {strides = array<i32>} : memref<288x64xf32, #tpu.memory_space<vmem>>, vector<8x64xf32>,
    %76 = vector.extract_strided_slice %31 {offsets = [0, 1408], sizes = [8, 64], strides = [1, 1]} : vector<8x2304xf32> to vector<8x64xf32>
    %c176 = arith.constant 176 : index
    %c0_41 = arith.constant 0 : index
    %77 = vector.load %arg18[%c176, %c0_41] : memref<288x64xf32, #tpu.memory_space<vmem>>, vector<8x64xf32>
    tpu.vector_store %arg18[%c176, %c0_41], %76 {strides = array<i32>} : memref<288x64xf32, #tpu.memory_space<vmem>>, vector<8x64xf32>,
    %78 = vector.extract_strided_slice %31 {offsets = [0, 1472], sizes = [8, 64], strides = [1, 1]} : vector<8x2304xf32> to vector<8x64xf32>
    %c184 = arith.constant 184 : index
    %c0_42 = arith.constant 0 : index
    %79 = vector.load %arg18[%c184, %c0_42] : memref<288x64xf32, #tpu.memory_space<vmem>>, vector<8x64xf32>
    tpu.vector_store %arg18[%c184, %c0_42], %78 {strides = array<i32>} : memref<288x64xf32, #tpu.memory_space<vmem>>, vector<8x64xf32>,
    %80 = vector.extract_strided_slice %31 {offsets = [0, 1536], sizes = [8, 64], strides = [1, 1]} : vector<8x2304xf32> to vector<8x64xf32>
    %c192 = arith.constant 192 : index
    %c0_43 = arith.constant 0 : index
    %81 = vector.load %arg18[%c192, %c0_43] : memref<288x64xf32, #tpu.memory_space<vmem>>, vector<8x64xf32>
    tpu.vector_store %arg18[%c192, %c0_43], %80 {strides = array<i32>} : memref<288x64xf32, #tpu.memory_space<vmem>>, vector<8x64xf32>,
    %82 = vector.extract_strided_slice %31 {offsets = [0, 1600], sizes = [8, 64], strides = [1, 1]} : vector<8x2304xf32> to vector<8x64xf32>
    %c200 = arith.constant 200 : index
    %c0_44 = arith.constant 0 : index
    %83 = vector.load %arg18[%c200, %c0_44] : memref<288x64xf32, #tpu.memory_space<vmem>>, vector<8x64xf32>
    tpu.vector_store %arg18[%c200, %c0_44], %82 {strides = array<i32>} : memref<288x64xf32, #tpu.memory_space<vmem>>, vector<8x64xf32>,
    %84 = vector.extract_strided_slice %31 {offsets = [0, 1664], sizes = [8, 64], strides = [1, 1]} : vector<8x2304xf32> to vector<8x64xf32>
    %c208 = arith.constant 208 : index
    %c0_45 = arith.constant 0 : index
    %85 = vector.load %arg18[%c208, %c0_45] : memref<288x64xf32, #tpu.memory_space<vmem>>, vector<8x64xf32>
    tpu.vector_store %arg18[%c208, %c0_45], %84 {strides = array<i32>} : memref<288x64xf32, #tpu.memory_space<vmem>>, vector<8x64xf32>,
    %86 = vector.extract_strided_slice %31 {offsets = [0, 1728], sizes = [8, 64], strides = [1, 1]} : vector<8x2304xf32> to vector<8x64xf32>
    %c216 = arith.constant 216 : index
    %c0_46 = arith.constant 0 : index
    %87 = vector.load %arg18[%c216, %c0_46] : memref<288x64xf32, #tpu.memory_space<vmem>>, vector<8x64xf32>
    tpu.vector_store %arg18[%c216, %c0_46], %86 {strides = array<i32>} : memref<288x64xf32, #tpu.memory_space<vmem>>, vector<8x64xf32>,
    %88 = vector.extract_strided_slice %31 {offsets = [0, 1792], sizes = [8, 64], strides = [1, 1]} : vector<8x2304xf32> to vector<8x64xf32>
    %c224 = arith.constant 224 : index
    %c0_47 = arith.constant 0 : index
    %89 = vector.load %arg18[%c224, %c0_47] : memref<288x64xf32, #tpu.memory_space<vmem>>, vector<8x64xf32>
    tpu.vector_store %arg18[%c224, %c0_47], %88 {strides = array<i32>} : memref<288x64xf32, #tpu.memory_space<vmem>>, vector<8x64xf32>,
    %90 = vector.extract_strided_slice %31 {offsets = [0, 1856], sizes = [8, 64], strides = [1, 1]} : vector<8x2304xf32> to vector<8x64xf32>
    %c232 = arith.constant 232 : index
    %c0_48 = arith.constant 0 : index
    %91 = vector.load %arg18[%c232, %c0_48] : memref<288x64xf32, #tpu.memory_space<vmem>>, vector<8x64xf32>
    tpu.vector_store %arg18[%c232, %c0_48], %90 {strides = array<i32>} : memref<288x64xf32, #tpu.memory_space<vmem>>, vector<8x64xf32>,
    %92 = vector.extract_strided_slice %31 {offsets = [0, 1920], sizes = [8, 64], strides = [1, 1]} : vector<8x2304xf32> to vector<8x64xf32>
    %c240 = arith.constant 240 : index
    %c0_49 = arith.constant 0 : index
    %93 = vector.load %arg18[%c240, %c0_49] : memref<288x64xf32, #tpu.memory_space<vmem>>, vector<8x64xf32>
    tpu.vector_store %arg18[%c240, %c0_49], %92 {strides = array<i32>} : memref<288x64xf32, #tpu.memory_space<vmem>>, vector<8x64xf32>,
    %94 = vector.extract_strided_slice %31 {offsets = [0, 1984], sizes = [8, 64], strides = [1, 1]} : vector<8x2304xf32> to vector<8x64xf32>
    %c248 = arith.constant 248 : index
    %c0_50 = arith.constant 0 : index
    %95 = vector.load %arg18[%c248, %c0_50] : memref<288x64xf32, #tpu.memory_space<vmem>>, vector<8x64xf32>
    tpu.vector_store %arg18[%c248, %c0_50], %94 {strides = array<i32>} : memref<288x64xf32, #tpu.memory_space<vmem>>, vector<8x64xf32>,
    %96 = vector.extract_strided_slice %31 {offsets = [0, 2048], sizes = [8, 64], strides = [1, 1]} : vector<8x2304xf32> to vector<8x64xf32>
    %c256 = arith.constant 256 : index
    %c0_51 = arith.constant 0 : index
    %97 = vector.load %arg18[%c256, %c0_51] : memref<288x64xf32, #tpu.memory_space<vmem>>, vector<8x64xf32>
    tpu.vector_store %arg18[%c256, %c0_51], %96 {strides = array<i32>} : memref<288x64xf32, #tpu.memory_space<vmem>>, vector<8x64xf32>,
    %98 = vector.extract_strided_slice %31 {offsets = [0, 2112], sizes = [8, 64], strides = [1, 1]} : vector<8x2304xf32> to vector<8x64xf32>
    %c264 = arith.constant 264 : index
    %c0_52 = arith.constant 0 : index
    %99 = vector.load %arg18[%c264, %c0_52] : memref<288x64xf32, #tpu.memory_space<vmem>>, vector<8x64xf32>
    tpu.vector_store %arg18[%c264, %c0_52], %98 {strides = array<i32>} : memref<288x64xf32, #tpu.memory_space<vmem>>, vector<8x64xf32>,
    %100 = vector.extract_strided_slice %31 {offsets = [0, 2176], sizes = [8, 64], strides = [1, 1]} : vector<8x2304xf32> to vector<8x64xf32>
    %c272 = arith.constant 272 : index
    %c0_53 = arith.constant 0 : index
    %101 = vector.load %arg18[%c272, %c0_53] : memref<288x64xf32, #tpu.memory_space<vmem>>, vector<8x64xf32>
    tpu.vector_store %arg18[%c272, %c0_53], %100 {strides = array<i32>} : memref<288x64xf32, #tpu.memory_space<vmem>>, vector<8x64xf32>,
    %102 = vector.extract_strided_slice %31 {offsets = [0, 2240], sizes = [8, 64], strides = [1, 1]} : vector<8x2304xf32> to vector<8x64xf32>
    %c280 = arith.constant 280 : index
    %c0_54 = arith.constant 0 : index
    %103 = vector.load %arg18[%c280, %c0_54] : memref<288x64xf32, #tpu.memory_space<vmem>>, vector<8x64xf32>
    tpu.vector_store %arg18[%c280, %c0_54], %102 {strides = array<i32>} : memref<288x64xf32, #tpu.memory_space<vmem>>, vector<8x64xf32>,
    %c0_55 = arith.constant 0 : index
    %c0_56 = arith.constant 0 : index
    %104 = vector.load %arg5[%c0_55, %c0_56] : memref<16x288xbf16, #tpu.memory_space<vmem>>, vector<16x288xbf16>
    %c0_57 = arith.constant 0 : index
    %c0_58 = arith.constant 0 : index
    %105 = vector.load %arg18[%c0_57, %c0_58] : memref<288x64xf32, #tpu.memory_space<vmem>>, vector<288x64xf32>
    %106 = arith.truncf %105 : vector<288x64xf32> to vector<288x64xbf16>
    %cst_59 = arith.constant dense<0.000000e+00> : vector<16x64xf32>
    %107 = tpu.matmul %104, %106, %cst_59 {dimension_numbers = #tpu.dot_dimension_numbers<[1], [0], [0], [1], [0, 0, 1, 1], [], []>} : vector<16x288xbf16>, vector<288x64xbf16>, vector<16x64xf32> -> vector<16x64xf32>
    %c0_60 = arith.constant 0 : index
    %c0_61 = arith.constant 0 : index
    %108 = vector.load %arg6[%c0_60, %c0_61] : memref<16x1xf32, #tpu.memory_space<vmem>>, vector<16x1xf32>
    %109 = vector.broadcast %108 : vector<16x1xf32> to vector<16x64xf32>
    %110 = arith.addf %107, %109 : vector<16x64xf32>
    %cst_62 = arith.constant dense<0.000000e+00> : vector<16xf32>
    %111 = vector.multi_reduction <add>, %110, %cst_62 [1] : vector<16x64xf32> to vector<16xf32>
    %112 = vector.shape_cast %111 : vector<16xf32> to vector<16x1xf32>
    %cst_63 = arith.constant 6.400000e+01 : f32
    %113 = vector.broadcast %cst_63 : f32 to vector<16x1xf32>
    %114 = arith.divf %112, %113 : vector<16x1xf32>
    %115 = vector.broadcast %114 : vector<16x1xf32> to vector<16x64xf32>
    %116 = arith.subf %110, %115 : vector<16x64xf32>
    %117 = arith.mulf %116, %116 : vector<16x64xf32>
    %cst_64 = arith.constant dense<0.000000e+00> : vector<16xf32>
    %118 = vector.multi_reduction <add>, %117, %cst_64 [1] : vector<16x64xf32> to vector<16xf32>
    %119 = vector.shape_cast %118 : vector<16xf32> to vector<16x1xf32>
    %cst_65 = arith.constant 6.400000e+01 : f32
    %120 = vector.broadcast %cst_65 : f32 to vector<16x1xf32>
    %121 = arith.divf %119, %120 : vector<16x1xf32>
    %cst_66 = arith.constant 9.99999974E-6 : f32
    %122 = vector.broadcast %cst_66 : f32 to vector<16x1xf32>
    %123 = arith.addf %121, %122 : vector<16x1xf32>
    %124 = math.rsqrt %123 : vector<16x1xf32>
    %125 = vector.broadcast %124 : vector<16x1xf32> to vector<16x64xf32>
    %126 = arith.mulf %116, %125 : vector<16x64xf32>
    %cst_67 = arith.constant 0.000000e+00 : f32
    %127 = vector.broadcast %cst_67 : f32 to vector<16x64xf32>
    %128 = arith.maximumf %126, %127 : vector<16x64xf32>
    %129 = vector.extract_strided_slice %128 {offsets = [0, 0], sizes = [5, 64], strides = [1, 1]} : vector<16x64xf32> to vector<5x64xf32>
    %c0_68 = arith.constant 0 : index
    %c0_69 = arith.constant 0 : index
    %c0_70 = arith.constant 0 : index
    %130 = vector.load %arg16[%c0_68, %c0_69, %c0_70] : memref<1x5x64xf32, #tpu.memory_space<vmem>>, vector<1x5x64xf32>
    %131 = vector.shape_cast %130 : vector<1x5x64xf32> to vector<5x64xf32>
    %132 = vector.shape_cast %129 : vector<5x64xf32> to vector<1x5x64xf32>
    tpu.vector_store %arg16[%c0_68, %c0_69, %c0_70], %132 {strides = array<i32>} : memref<1x5x64xf32, #tpu.memory_space<vmem>>, vector<1x5x64xf32>,
    %133 = arith.truncf %128 : vector<16x64xf32> to vector<16x64xbf16>
    %c0_71 = arith.constant 0 : index
    %c0_72 = arith.constant 0 : index
    %134 = vector.load %arg7[%c0_71, %c0_72] : memref<64x576xbf16, #tpu.memory_space<vmem>>, vector<64x576xbf16>
    %cst_73 = arith.constant dense<0.000000e+00> : vector<16x576xf32>
    %135 = tpu.matmul %133, %134, %cst_73 {dimension_numbers = #tpu.dot_dimension_numbers<[1], [0], [0], [1], [0, 0, 1, 1], [], []>} : vector<16x64xbf16>, vector<64x576xbf16>, vector<16x576xf32> -> vector<16x576xf32>
    %136 = vector.extract_strided_slice %135 {offsets = [0, 0], sizes = [16, 16], strides = [1, 1]} : vector<16x576xf32> to vector<16x16xf32>
    %c0_74 = arith.constant 0 : index
    %c0_75 = arith.constant 0 : index
    %137 = vector.load %arg19[%c0_74, %c0_75] : memref<576x16xf32, #tpu.memory_space<vmem>>, vector<16x16xf32>
    tpu.vector_store %arg19[%c0_74, %c0_75], %136 {strides = array<i32>} : memref<576x16xf32, #tpu.memory_space<vmem>>, vector<16x16xf32>,
    %138 = vector.extract_strided_slice %135 {offsets = [0, 16], sizes = [16, 16], strides = [1, 1]} : vector<16x576xf32> to vector<16x16xf32>
    %c16_76 = arith.constant 16 : index
    %c0_77 = arith.constant 0 : index
    %139 = vector.load %arg19[%c16_76, %c0_77] : memref<576x16xf32, #tpu.memory_space<vmem>>, vector<16x16xf32>
    tpu.vector_store %arg19[%c16_76, %c0_77], %138 {strides = array<i32>} : memref<576x16xf32, #tpu.memory_space<vmem>>, vector<16x16xf32>,
    %140 = vector.extract_strided_slice %135 {offsets = [0, 32], sizes = [16, 16], strides = [1, 1]} : vector<16x576xf32> to vector<16x16xf32>
    %c32_78 = arith.constant 32 : index
    %c0_79 = arith.constant 0 : index
    %141 = vector.load %arg19[%c32_78, %c0_79] : memref<576x16xf32, #tpu.memory_space<vmem>>, vector<16x16xf32>
    tpu.vector_store %arg19[%c32_78, %c0_79], %140 {strides = array<i32>} : memref<576x16xf32, #tpu.memory_space<vmem>>, vector<16x16xf32>,
    %142 = vector.extract_strided_slice %135 {offsets = [0, 48], sizes = [16, 16], strides = [1, 1]} : vector<16x576xf32> to vector<16x16xf32>
    %c48_80 = arith.constant 48 : index
    %c0_81 = arith.constant 0 : index
    %143 = vector.load %arg19[%c48_80, %c0_81] : memref<576x16xf32, #tpu.memory_space<vmem>>, vector<16x16xf32>
    tpu.vector_store %arg19[%c48_80, %c0_81], %142 {strides = array<i32>} : memref<576x16xf32, #tpu.memory_space<vmem>>, vector<16x16xf32>,
    %144 = vector.extract_strided_slice %135 {offsets = [0, 64], sizes = [16, 16], strides = [1, 1]} : vector<16x576xf32> to vector<16x16xf32>
    %c64_82 = arith.constant 64 : index
    %c0_83 = arith.constant 0 : index
    %145 = vector.load %arg19[%c64_82, %c0_83] : memref<576x16xf32, #tpu.memory_space<vmem>>, vector<16x16xf32>
    tpu.vector_store %arg19[%c64_82, %c0_83], %144 {strides = array<i32>} : memref<576x16xf32, #tpu.memory_space<vmem>>, vector<16x16xf32>,
    %146 = vector.extract_strided_slice %135 {offsets = [0, 80], sizes = [16, 16], strides = [1, 1]} : vector<16x576xf32> to vector<16x16xf32>
    %c80_84 = arith.constant 80 : index
    %c0_85 = arith.constant 0 : index
    %147 = vector.load %arg19[%c80_84, %c0_85] : memref<576x16xf32, #tpu.memory_space<vmem>>, vector<16x16xf32>
    tpu.vector_store %arg19[%c80_84, %c0_85], %146 {strides = array<i32>} : memref<576x16xf32, #tpu.memory_space<vmem>>, vector<16x16xf32>,
    %148 = vector.extract_strided_slice %135 {offsets = [0, 96], sizes = [16, 16], strides = [1, 1]} : vector<16x576xf32> to vector<16x16xf32>
    %c96_86 = arith.constant 96 : index
    %c0_87 = arith.constant 0 : index
    %149 = vector.load %arg19[%c96_86, %c0_87] : memref<576x16xf32, #tpu.memory_space<vmem>>, vector<16x16xf32>
    tpu.vector_store %arg19[%c96_86, %c0_87], %148 {strides = array<i32>} : memref<576x16xf32, #tpu.memory_space<vmem>>, vector<16x16xf32>,
    %150 = vector.extract_strided_slice %135 {offsets = [0, 112], sizes = [16, 16], strides = [1, 1]} : vector<16x576xf32> to vector<16x16xf32>
    %c112_88 = arith.constant 112 : index
    %c0_89 = arith.constant 0 : index
    %151 = vector.load %arg19[%c112_88, %c0_89] : memref<576x16xf32, #tpu.memory_space<vmem>>, vector<16x16xf32>
    tpu.vector_store %arg19[%c112_88, %c0_89], %150 {strides = array<i32>} : memref<576x16xf32, #tpu.memory_space<vmem>>, vector<16x16xf32>,
    %152 = vector.extract_strided_slice %135 {offsets = [0, 128], sizes = [16, 16], strides = [1, 1]} : vector<16x576xf32> to vector<16x16xf32>
    %c128_90 = arith.constant 128 : index
    %c0_91 = arith.constant 0 : index
    %153 = vector.load %arg19[%c128_90, %c0_91] : memref<576x16xf32, #tpu.memory_space<vmem>>, vector<16x16xf32>
    tpu.vector_store %arg19[%c128_90, %c0_91], %152 {strides = array<i32>} : memref<576x16xf32, #tpu.memory_space<vmem>>, vector<16x16xf32>,
    %154 = vector.extract_strided_slice %135 {offsets = [0, 144], sizes = [16, 16], strides = [1, 1]} : vector<16x576xf32> to vector<16x16xf32>
    %c144_92 = arith.constant 144 : index
    %c0_93 = arith.constant 0 : index
    %155 = vector.load %arg19[%c144_92, %c0_93] : memref<576x16xf32, #tpu.memory_space<vmem>>, vector<16x16xf32>
    tpu.vector_store %arg19[%c144_92, %c0_93], %154 {strides = array<i32>} : memref<576x16xf32, #tpu.memory_space<vmem>>, vector<16x16xf32>,
    %156 = vector.extract_strided_slice %135 {offsets = [0, 160], sizes = [16, 16], strides = [1, 1]} : vector<16x576xf32> to vector<16x16xf32>
    %c160_94 = arith.constant 160 : index
    %c0_95 = arith.constant 0 : index
    %157 = vector.load %arg19[%c160_94, %c0_95] : memref<576x16xf32, #tpu.memory_space<vmem>>, vector<16x16xf32>
    tpu.vector_store %arg19[%c160_94, %c0_95], %156 {strides = array<i32>} : memref<576x16xf32, #tpu.memory_space<vmem>>, vector<16x16xf32>,
    %158 = vector.extract_strided_slice %135 {offsets = [0, 176], sizes = [16, 16], strides = [1, 1]} : vector<16x576xf32> to vector<16x16xf32>
    %c176_96 = arith.constant 176 : index
    %c0_97 = arith.constant 0 : index
    %159 = vector.load %arg19[%c176_96, %c0_97] : memref<576x16xf32, #tpu.memory_space<vmem>>, vector<16x16xf32>
    tpu.vector_store %arg19[%c176_96, %c0_97], %158 {strides = array<i32>} : memref<576x16xf32, #tpu.memory_space<vmem>>, vector<16x16xf32>,
    %160 = vector.extract_strided_slice %135 {offsets = [0, 192], sizes = [16, 16], strides = [1, 1]} : vector<16x576xf32> to vector<16x16xf32>
    %c192_98 = arith.constant 192 : index
    %c0_99 = arith.constant 0 : index
    %161 = vector.load %arg19[%c192_98, %c0_99] : memref<576x16xf32, #tpu.memory_space<vmem>>, vector<16x16xf32>
    tpu.vector_store %arg19[%c192_98, %c0_99], %160 {strides = array<i32>} : memref<576x16xf32, #tpu.memory_space<vmem>>, vector<16x16xf32>,
    %162 = vector.extract_strided_slice %135 {offsets = [0, 208], sizes = [16, 16], strides = [1, 1]} : vector<16x576xf32> to vector<16x16xf32>
    %c208_100 = arith.constant 208 : index
    %c0_101 = arith.constant 0 : index
    %163 = vector.load %arg19[%c208_100, %c0_101] : memref<576x16xf32, #tpu.memory_space<vmem>>, vector<16x16xf32>
    tpu.vector_store %arg19[%c208_100, %c0_101], %162 {strides = array<i32>} : memref<576x16xf32, #tpu.memory_space<vmem>>, vector<16x16xf32>,
    %164 = vector.extract_strided_slice %135 {offsets = [0, 224], sizes = [16, 16], strides = [1, 1]} : vector<16x576xf32> to vector<16x16xf32>
    %c224_102 = arith.constant 224 : index
    %c0_103 = arith.constant 0 : index
    %165 = vector.load %arg19[%c224_102, %c0_103] : memref<576x16xf32, #tpu.memory_space<vmem>>, vector<16x16xf32>
    tpu.vector_store %arg19[%c224_102, %c0_103], %164 {strides = array<i32>} : memref<576x16xf32, #tpu.memory_space<vmem>>, vector<16x16xf32>,
    %166 = vector.extract_strided_slice %135 {offsets = [0, 240], sizes = [16, 16], strides = [1, 1]} : vector<16x576xf32> to vector<16x16xf32>
    %c240_104 = arith.constant 240 : index
    %c0_105 = arith.constant 0 : index
    %167 = vector.load %arg19[%c240_104, %c0_105] : memref<576x16xf32, #tpu.memory_space<vmem>>, vector<16x16xf32>
    tpu.vector_store %arg19[%c240_104, %c0_105], %166 {strides = array<i32>} : memref<576x16xf32, #tpu.memory_space<vmem>>, vector<16x16xf32>,
    %168 = vector.extract_strided_slice %135 {offsets = [0, 256], sizes = [16, 16], strides = [1, 1]} : vector<16x576xf32> to vector<16x16xf32>
    %c256_106 = arith.constant 256 : index
    %c0_107 = arith.constant 0 : index
    %169 = vector.load %arg19[%c256_106, %c0_107] : memref<576x16xf32, #tpu.memory_space<vmem>>, vector<16x16xf32>
    tpu.vector_store %arg19[%c256_106, %c0_107], %168 {strides = array<i32>} : memref<576x16xf32, #tpu.memory_space<vmem>>, vector<16x16xf32>,
    %170 = vector.extract_strided_slice %135 {offsets = [0, 272], sizes = [16, 16], strides = [1, 1]} : vector<16x576xf32> to vector<16x16xf32>
    %c272_108 = arith.constant 272 : index
    %c0_109 = arith.constant 0 : index
    %171 = vector.load %arg19[%c272_108, %c0_109] : memref<576x16xf32, #tpu.memory_space<vmem>>, vector<16x16xf32>
    tpu.vector_store %arg19[%c272_108, %c0_109], %170 {strides = array<i32>} : memref<576x16xf32, #tpu.memory_space<vmem>>, vector<16x16xf32>,
    %172 = vector.extract_strided_slice %135 {offsets = [0, 288], sizes = [16, 16], strides = [1, 1]} : vector<16x576xf32> to vector<16x16xf32>
    %c288 = arith.constant 288 : index
    %c0_110 = arith.constant 0 : index
    %173 = vector.load %arg19[%c288, %c0_110] : memref<576x16xf32, #tpu.memory_space<vmem>>, vector<16x16xf32>
    tpu.vector_store %arg19[%c288, %c0_110], %172 {strides = array<i32>} : memref<576x16xf32, #tpu.memory_space<vmem>>, vector<16x16xf32>,
    %174 = vector.extract_strided_slice %135 {offsets = [0, 304], sizes = [16, 16], strides = [1, 1]} : vector<16x576xf32> to vector<16x16xf32>
    %c304 = arith.constant 304 : index
    %c0_111 = arith.constant 0 : index
    %175 = vector.load %arg19[%c304, %c0_111] : memref<576x16xf32, #tpu.memory_space<vmem>>, vector<16x16xf32>
    tpu.vector_store %arg19[%c304, %c0_111], %174 {strides = array<i32>} : memref<576x16xf32, #tpu.memory_space<vmem>>, vector<16x16xf32>,
    %176 = vector.extract_strided_slice %135 {offsets = [0, 320], sizes = [16, 16], strides = [1, 1]} : vector<16x576xf32> to vector<16x16xf32>
    %c320 = arith.constant 320 : index
    %c0_112 = arith.constant 0 : index
    %177 = vector.load %arg19[%c320, %c0_112] : memref<576x16xf32, #tpu.memory_space<vmem>>, vector<16x16xf32>
    tpu.vector_store %arg19[%c320, %c0_112], %176 {strides = array<i32>} : memref<576x16xf32, #tpu.memory_space<vmem>>, vector<16x16xf32>,
    %178 = vector.extract_strided_slice %135 {offsets = [0, 336], sizes = [16, 16], strides = [1, 1]} : vector<16x576xf32> to vector<16x16xf32>
    %c336 = arith.constant 336 : index
    %c0_113 = arith.constant 0 : index
    %179 = vector.load %arg19[%c336, %c0_113] : memref<576x16xf32, #tpu.memory_space<vmem>>, vector<16x16xf32>
    tpu.vector_store %arg19[%c336, %c0_113], %178 {strides = array<i32>} : memref<576x16xf32, #tpu.memory_space<vmem>>, vector<16x16xf32>,
    %180 = vector.extract_strided_slice %135 {offsets = [0, 352], sizes = [16, 16], strides = [1, 1]} : vector<16x576xf32> to vector<16x16xf32>
    %c352 = arith.constant 352 : index
    %c0_114 = arith.constant 0 : index
    %181 = vector.load %arg19[%c352, %c0_114] : memref<576x16xf32, #tpu.memory_space<vmem>>, vector<16x16xf32>
    tpu.vector_store %arg19[%c352, %c0_114], %180 {strides = array<i32>} : memref<576x16xf32, #tpu.memory_space<vmem>>, vector<16x16xf32>,
    %182 = vector.extract_strided_slice %135 {offsets = [0, 368], sizes = [16, 16], strides = [1, 1]} : vector<16x576xf32> to vector<16x16xf32>
    %c368 = arith.constant 368 : index
    %c0_115 = arith.constant 0 : index
    %183 = vector.load %arg19[%c368, %c0_115] : memref<576x16xf32, #tpu.memory_space<vmem>>, vector<16x16xf32>
    tpu.vector_store %arg19[%c368, %c0_115], %182 {strides = array<i32>} : memref<576x16xf32, #tpu.memory_space<vmem>>, vector<16x16xf32>,
    %184 = vector.extract_strided_slice %135 {offsets = [0, 384], sizes = [16, 16], strides = [1, 1]} : vector<16x576xf32> to vector<16x16xf32>
    %c384 = arith.constant 384 : index
    %c0_116 = arith.constant 0 : index
    %185 = vector.load %arg19[%c384, %c0_116] : memref<576x16xf32, #tpu.memory_space<vmem>>, vector<16x16xf32>
    tpu.vector_store %arg19[%c384, %c0_116], %184 {strides = array<i32>} : memref<576x16xf32, #tpu.memory_space<vmem>>, vector<16x16xf32>,
    %186 = vector.extract_strided_slice %135 {offsets = [0, 400], sizes = [16, 16], strides = [1, 1]} : vector<16x576xf32> to vector<16x16xf32>
    %c400 = arith.constant 400 : index
    %c0_117 = arith.constant 0 : index
    %187 = vector.load %arg19[%c400, %c0_117] : memref<576x16xf32, #tpu.memory_space<vmem>>, vector<16x16xf32>
    tpu.vector_store %arg19[%c400, %c0_117], %186 {strides = array<i32>} : memref<576x16xf32, #tpu.memory_space<vmem>>, vector<16x16xf32>,
    %188 = vector.extract_strided_slice %135 {offsets = [0, 416], sizes = [16, 16], strides = [1, 1]} : vector<16x576xf32> to vector<16x16xf32>
    %c416 = arith.constant 416 : index
    %c0_118 = arith.constant 0 : index
    %189 = vector.load %arg19[%c416, %c0_118] : memref<576x16xf32, #tpu.memory_space<vmem>>, vector<16x16xf32>
    tpu.vector_store %arg19[%c416, %c0_118], %188 {strides = array<i32>} : memref<576x16xf32, #tpu.memory_space<vmem>>, vector<16x16xf32>,
    %190 = vector.extract_strided_slice %135 {offsets = [0, 432], sizes = [16, 16], strides = [1, 1]} : vector<16x576xf32> to vector<16x16xf32>
    %c432 = arith.constant 432 : index
    %c0_119 = arith.constant 0 : index
    %191 = vector.load %arg19[%c432, %c0_119] : memref<576x16xf32, #tpu.memory_space<vmem>>, vector<16x16xf32>
    tpu.vector_store %arg19[%c432, %c0_119], %190 {strides = array<i32>} : memref<576x16xf32, #tpu.memory_space<vmem>>, vector<16x16xf32>,
    %192 = vector.extract_strided_slice %135 {offsets = [0, 448], sizes = [16, 16], strides = [1, 1]} : vector<16x576xf32> to vector<16x16xf32>
    %c448 = arith.constant 448 : index
    %c0_120 = arith.constant 0 : index
    %193 = vector.load %arg19[%c448, %c0_120] : memref<576x16xf32, #tpu.memory_space<vmem>>, vector<16x16xf32>
    tpu.vector_store %arg19[%c448, %c0_120], %192 {strides = array<i32>} : memref<576x16xf32, #tpu.memory_space<vmem>>, vector<16x16xf32>,
    %194 = vector.extract_strided_slice %135 {offsets = [0, 464], sizes = [16, 16], strides = [1, 1]} : vector<16x576xf32> to vector<16x16xf32>
    %c464 = arith.constant 464 : index
    %c0_121 = arith.constant 0 : index
    %195 = vector.load %arg19[%c464, %c0_121] : memref<576x16xf32, #tpu.memory_space<vmem>>, vector<16x16xf32>
    tpu.vector_store %arg19[%c464, %c0_121], %194 {strides = array<i32>} : memref<576x16xf32, #tpu.memory_space<vmem>>, vector<16x16xf32>,
    %196 = vector.extract_strided_slice %135 {offsets = [0, 480], sizes = [16, 16], strides = [1, 1]} : vector<16x576xf32> to vector<16x16xf32>
    %c480 = arith.constant 480 : index
    %c0_122 = arith.constant 0 : index
    %197 = vector.load %arg19[%c480, %c0_122] : memref<576x16xf32, #tpu.memory_space<vmem>>, vector<16x16xf32>
    tpu.vector_store %arg19[%c480, %c0_122], %196 {strides = array<i32>} : memref<576x16xf32, #tpu.memory_space<vmem>>, vector<16x16xf32>,
    %198 = vector.extract_strided_slice %135 {offsets = [0, 496], sizes = [16, 16], strides = [1, 1]} : vector<16x576xf32> to vector<16x16xf32>
    %c496 = arith.constant 496 : index
    %c0_123 = arith.constant 0 : index
    %199 = vector.load %arg19[%c496, %c0_123] : memref<576x16xf32, #tpu.memory_space<vmem>>, vector<16x16xf32>
    tpu.vector_store %arg19[%c496, %c0_123], %198 {strides = array<i32>} : memref<576x16xf32, #tpu.memory_space<vmem>>, vector<16x16xf32>,
    %200 = vector.extract_strided_slice %135 {offsets = [0, 512], sizes = [16, 16], strides = [1, 1]} : vector<16x576xf32> to vector<16x16xf32>
    %c512 = arith.constant 512 : index
    %c0_124 = arith.constant 0 : index
    %201 = vector.load %arg19[%c512, %c0_124] : memref<576x16xf32, #tpu.memory_space<vmem>>, vector<16x16xf32>
    tpu.vector_store %arg19[%c512, %c0_124], %200 {strides = array<i32>} : memref<576x16xf32, #tpu.memory_space<vmem>>, vector<16x16xf32>,
    %202 = vector.extract_strided_slice %135 {offsets = [0, 528], sizes = [16, 16], strides = [1, 1]} : vector<16x576xf32> to vector<16x16xf32>
    %c528 = arith.constant 528 : index
    %c0_125 = arith.constant 0 : index
    %203 = vector.load %arg19[%c528, %c0_125] : memref<576x16xf32, #tpu.memory_space<vmem>>, vector<16x16xf32>
    tpu.vector_store %arg19[%c528, %c0_125], %202 {strides = array<i32>} : memref<576x16xf32, #tpu.memory_space<vmem>>, vector<16x16xf32>,
    %204 = vector.extract_strided_slice %135 {offsets = [0, 544], sizes = [16, 16], strides = [1, 1]} : vector<16x576xf32> to vector<16x16xf32>
    %c544 = arith.constant 544 : index
    %c0_126 = arith.constant 0 : index
    %205 = vector.load %arg19[%c544, %c0_126] : memref<576x16xf32, #tpu.memory_space<vmem>>, vector<16x16xf32>
    tpu.vector_store %arg19[%c544, %c0_126], %204 {strides = array<i32>} : memref<576x16xf32, #tpu.memory_space<vmem>>, vector<16x16xf32>,
    %206 = vector.extract_strided_slice %135 {offsets = [0, 560], sizes = [16, 16], strides = [1, 1]} : vector<16x576xf32> to vector<16x16xf32>
    %c560 = arith.constant 560 : index
    %c0_127 = arith.constant 0 : index
    %207 = vector.load %arg19[%c560, %c0_127] : memref<576x16xf32, #tpu.memory_space<vmem>>, vector<16x16xf32>
    tpu.vector_store %arg19[%c560, %c0_127], %206 {strides = array<i32>} : memref<576x16xf32, #tpu.memory_space<vmem>>, vector<16x16xf32>,
    %c0_128 = arith.constant 0 : index
    %c0_129 = arith.constant 0 : index
    %208 = vector.load %arg8[%c0_128, %c0_129] : memref<32x576xbf16, #tpu.memory_space<vmem>>, vector<32x576xbf16>
    %c0_130 = arith.constant 0 : index
    %c0_131 = arith.constant 0 : index
    %209 = vector.load %arg19[%c0_130, %c0_131] : memref<576x16xf32, #tpu.memory_space<vmem>>, vector<576x16xf32>
    %210 = arith.truncf %209 : vector<576x16xf32> to vector<576x16xbf16>
    %cst_132 = arith.constant dense<0.000000e+00> : vector<32x16xf32>
    %211 = tpu.matmul %208, %210, %cst_132 {dimension_numbers = #tpu.dot_dimension_numbers<[1], [0], [0], [1], [0, 0, 1, 1], [], []>} : vector<32x576xbf16>, vector<576x16xbf16>, vector<32x16xf32> -> vector<32x16xf32>
    %c0_133 = arith.constant 0 : index
    %c0_134 = arith.constant 0 : index
    %212 = vector.load %arg9[%c0_133, %c0_134] : memref<32x1xf32, #tpu.memory_space<vmem>>, vector<32x1xf32>
    %213 = vector.broadcast %212 : vector<32x1xf32> to vector<32x16xf32>
    %214 = arith.addf %211, %213 : vector<32x16xf32>
    %cst_135 = arith.constant dense<0.000000e+00> : vector<32xf32>
    %215 = vector.multi_reduction <add>, %214, %cst_135 [1] : vector<32x16xf32> to vector<32xf32>
    %216 = vector.shape_cast %215 : vector<32xf32> to vector<32x1xf32>
    %cst_136 = arith.constant 1.600000e+01 : f32
    %217 = vector.broadcast %cst_136 : f32 to vector<32x1xf32>
    %218 = arith.divf %216, %217 : vector<32x1xf32>
    %219 = vector.broadcast %218 : vector<32x1xf32> to vector<32x16xf32>
    %220 = arith.subf %214, %219 : vector<32x16xf32>
    %221 = arith.mulf %220, %220 : vector<32x16xf32>
    %cst_137 = arith.constant dense<0.000000e+00> : vector<32xf32>
    %222 = vector.multi_reduction <add>, %221, %cst_137 [1] : vector<32x16xf32> to vector<32xf32>
    %223 = vector.shape_cast %222 : vector<32xf32> to vector<32x1xf32>
    %cst_138 = arith.constant 1.600000e+01 : f32
    %224 = vector.broadcast %cst_138 : f32 to vector<32x1xf32>
    %225 = arith.divf %223, %224 : vector<32x1xf32>
    %cst_139 = arith.constant 9.99999974E-6 : f32
    %226 = vector.broadcast %cst_139 : f32 to vector<32x1xf32>
    %227 = arith.addf %225, %226 : vector<32x1xf32>
    %228 = math.rsqrt %227 : vector<32x1xf32>
    %229 = vector.broadcast %228 : vector<32x1xf32> to vector<32x16xf32>
    %230 = arith.mulf %220, %229 : vector<32x16xf32>
    %cst_140 = arith.constant 0.000000e+00 : f32
    %231 = vector.broadcast %cst_140 : f32 to vector<32x16xf32>
    %232 = arith.maximumf %230, %231 : vector<32x16xf32>
    %233 = arith.truncf %232 : vector<32x16xf32> to vector<32x16xbf16>
    %c0_141 = arith.constant 0 : index
    %c0_142 = arith.constant 0 : index
    %234 = vector.load %arg10[%c0_141, %c0_142] : memref<16x144xbf16, #tpu.memory_space<vmem>>, vector<16x144xbf16>
    %cst_143 = arith.constant dense<0.000000e+00> : vector<32x144xf32>
    %235 = tpu.matmul %233, %234, %cst_143 {dimension_numbers = #tpu.dot_dimension_numbers<[1], [0], [0], [1], [0, 0, 1, 1], [], []>} : vector<32x16xbf16>, vector<16x144xbf16>, vector<32x144xf32> -> vector<32x144xf32>
    %236 = vector.extract_strided_slice %235 {offsets = [0, 0], sizes = [32, 16], strides = [1, 1]} : vector<32x144xf32> to vector<32x16xf32>
    %c0_144 = arith.constant 0 : index
    %c0_145 = arith.constant 0 : index
    %237 = vector.load %arg20[%c0_144, %c0_145] : memref<288x16xf32, #tpu.memory_space<vmem>>, vector<32x16xf32>
    tpu.vector_store %arg20[%c0_144, %c0_145], %236 {strides = array<i32>} : memref<288x16xf32, #tpu.memory_space<vmem>>, vector<32x16xf32>,
    %238 = vector.extract_strided_slice %235 {offsets = [0, 16], sizes = [32, 16], strides = [1, 1]} : vector<32x144xf32> to vector<32x16xf32>
    %c32_146 = arith.constant 32 : index
    %c0_147 = arith.constant 0 : index
    %239 = vector.load %arg20[%c32_146, %c0_147] : memref<288x16xf32, #tpu.memory_space<vmem>>, vector<32x16xf32>
    tpu.vector_store %arg20[%c32_146, %c0_147], %238 {strides = array<i32>} : memref<288x16xf32, #tpu.memory_space<vmem>>, vector<32x16xf32>,
    %240 = vector.extract_strided_slice %235 {offsets = [0, 32], sizes = [32, 16], strides = [1, 1]} : vector<32x144xf32> to vector<32x16xf32>
    %c64_148 = arith.constant 64 : index
    %c0_149 = arith.constant 0 : index
    %241 = vector.load %arg20[%c64_148, %c0_149] : memref<288x16xf32, #tpu.memory_space<vmem>>, vector<32x16xf32>
    tpu.vector_store %arg20[%c64_148, %c0_149], %240 {strides = array<i32>} : memref<288x16xf32, #tpu.memory_space<vmem>>, vector<32x16xf32>,
    %242 = vector.extract_strided_slice %235 {offsets = [0, 48], sizes = [32, 16], strides = [1, 1]} : vector<32x144xf32> to vector<32x16xf32>
    %c96_150 = arith.constant 96 : index
    %c0_151 = arith.constant 0 : index
    %243 = vector.load %arg20[%c96_150, %c0_151] : memref<288x16xf32, #tpu.memory_space<vmem>>, vector<32x16xf32>
    tpu.vector_store %arg20[%c96_150, %c0_151], %242 {strides = array<i32>} : memref<288x16xf32, #tpu.memory_space<vmem>>, vector<32x16xf32>,
    %244 = vector.extract_strided_slice %235 {offsets = [0, 64], sizes = [32, 16], strides = [1, 1]} : vector<32x144xf32> to vector<32x16xf32>
    %c128_152 = arith.constant 128 : index
    %c0_153 = arith.constant 0 : index
    %245 = vector.load %arg20[%c128_152, %c0_153] : memref<288x16xf32, #tpu.memory_space<vmem>>, vector<32x16xf32>
    tpu.vector_store %arg20[%c128_152, %c0_153], %244 {strides = array<i32>} : memref<288x16xf32, #tpu.memory_space<vmem>>, vector<32x16xf32>,
    %246 = vector.extract_strided_slice %235 {offsets = [0, 80], sizes = [32, 16], strides = [1, 1]} : vector<32x144xf32> to vector<32x16xf32>
    %c160_154 = arith.constant 160 : index
    %c0_155 = arith.constant 0 : index
    %247 = vector.load %arg20[%c160_154, %c0_155] : memref<288x16xf32, #tpu.memory_space<vmem>>, vector<32x16xf32>
    tpu.vector_store %arg20[%c160_154, %c0_155], %246 {strides = array<i32>} : memref<288x16xf32, #tpu.memory_space<vmem>>, vector<32x16xf32>,
    %248 = vector.extract_strided_slice %235 {offsets = [0, 96], sizes = [32, 16], strides = [1, 1]} : vector<32x144xf32> to vector<32x16xf32>
    %c192_156 = arith.constant 192 : index
    %c0_157 = arith.constant 0 : index
    %249 = vector.load %arg20[%c192_156, %c0_157] : memref<288x16xf32, #tpu.memory_space<vmem>>, vector<32x16xf32>
    tpu.vector_store %arg20[%c192_156, %c0_157], %248 {strides = array<i32>} : memref<288x16xf32, #tpu.memory_space<vmem>>, vector<32x16xf32>,
    %250 = vector.extract_strided_slice %235 {offsets = [0, 112], sizes = [32, 16], strides = [1, 1]} : vector<32x144xf32> to vector<32x16xf32>
    %c224_158 = arith.constant 224 : index
    %c0_159 = arith.constant 0 : index
    %251 = vector.load %arg20[%c224_158, %c0_159] : memref<288x16xf32, #tpu.memory_space<vmem>>, vector<32x16xf32>
    tpu.vector_store %arg20[%c224_158, %c0_159], %250 {strides = array<i32>} : memref<288x16xf32, #tpu.memory_space<vmem>>, vector<32x16xf32>,
    %252 = vector.extract_strided_slice %235 {offsets = [0, 128], sizes = [32, 16], strides = [1, 1]} : vector<32x144xf32> to vector<32x16xf32>
    %c256_160 = arith.constant 256 : index
    %c0_161 = arith.constant 0 : index
    %253 = vector.load %arg20[%c256_160, %c0_161] : memref<288x16xf32, #tpu.memory_space<vmem>>, vector<32x16xf32>
    tpu.vector_store %arg20[%c256_160, %c0_161], %252 {strides = array<i32>} : memref<288x16xf32, #tpu.memory_space<vmem>>, vector<32x16xf32>,
    %c0_162 = arith.constant 0 : index
    %c0_163 = arith.constant 0 : index
    %254 = vector.load %arg11[%c0_162, %c0_163] : memref<32x288xbf16, #tpu.memory_space<vmem>>, vector<32x288xbf16>
    %c0_164 = arith.constant 0 : index
    %c0_165 = arith.constant 0 : index
    %255 = vector.load %arg20[%c0_164, %c0_165] : memref<288x16xf32, #tpu.memory_space<vmem>>, vector<288x16xf32>
    %256 = arith.truncf %255 : vector<288x16xf32> to vector<288x16xbf16>
    %cst_166 = arith.constant dense<0.000000e+00> : vector<32x16xf32>
    %257 = tpu.matmul %254, %256, %cst_166 {dimension_numbers = #tpu.dot_dimension_numbers<[1], [0], [0], [1], [0, 0, 1, 1], [], []>} : vector<32x288xbf16>, vector<288x16xbf16>, vector<32x16xf32> -> vector<32x16xf32>
    %c0_167 = arith.constant 0 : index
    %c0_168 = arith.constant 0 : index
    %258 = vector.load %arg12[%c0_167, %c0_168] : memref<32x1xf32, #tpu.memory_space<vmem>>, vector<32x1xf32>
    %259 = vector.broadcast %258 : vector<32x1xf32> to vector<32x16xf32>
    %260 = arith.addf %257, %259 : vector<32x16xf32>
    %cst_169 = arith.constant dense<0.000000e+00> : vector<32xf32>
    %261 = vector.multi_reduction <add>, %260, %cst_169 [1] : vector<32x16xf32> to vector<32xf32>
    %262 = vector.shape_cast %261 : vector<32xf32> to vector<32x1xf32>
    %cst_170 = arith.constant 1.600000e+01 : f32
    %263 = vector.broadcast %cst_170 : f32 to vector<32x1xf32>
    %264 = arith.divf %262, %263 : vector<32x1xf32>
    %265 = vector.broadcast %264 : vector<32x1xf32> to vector<32x16xf32>
    %266 = arith.subf %260, %265 : vector<32x16xf32>
    %267 = arith.mulf %266, %266 : vector<32x16xf32>
    %cst_171 = arith.constant dense<0.000000e+00> : vector<32xf32>
    %268 = vector.multi_reduction <add>, %267, %cst_171 [1] : vector<32x16xf32> to vector<32xf32>
    %269 = vector.shape_cast %268 : vector<32xf32> to vector<32x1xf32>
    %cst_172 = arith.constant 1.600000e+01 : f32
    %270 = vector.broadcast %cst_172 : f32 to vector<32x1xf32>
    %271 = arith.divf %269, %270 : vector<32x1xf32>
    %cst_173 = arith.constant 9.99999974E-6 : f32
    %272 = vector.broadcast %cst_173 : f32 to vector<32x1xf32>
    %273 = arith.addf %271, %272 : vector<32x1xf32>
    %274 = math.rsqrt %273 : vector<32x1xf32>
    %275 = vector.broadcast %274 : vector<32x1xf32> to vector<32x16xf32>
    %276 = arith.mulf %266, %275 : vector<32x16xf32>
    %cst_174 = arith.constant 0.000000e+00 : f32
    %277 = vector.broadcast %cst_174 : f32 to vector<32x16xf32>
    %278 = arith.maximumf %276, %277 : vector<32x16xf32>
    %279 = arith.truncf %278 : vector<32x16xf32> to vector<32x16xbf16>
    %c0_175 = arith.constant 0 : index
    %c0_176 = arith.constant 0 : index
    %280 = vector.load %arg10[%c0_175, %c0_176] : memref<16x144xbf16, #tpu.memory_space<vmem>>, vector<16x144xbf16>
    %cst_177 = arith.constant dense<0.000000e+00> : vector<32x144xf32>
    %281 = tpu.matmul %279, %280, %cst_177 {dimension_numbers = #tpu.dot_dimension_numbers<[1], [0], [0], [1], [0, 0, 1, 1], [], []>} : vector<32x16xbf16>, vector<16x144xbf16>, vector<32x144xf32> -> vector<32x144xf32>
    %282 = vector.extract_strided_slice %281 {offsets = [0, 0], sizes = [32, 16], strides = [1, 1]} : vector<32x144xf32> to vector<32x16xf32>
    %c0_178 = arith.constant 0 : index
    %c0_179 = arith.constant 0 : index
    %283 = vector.load %arg20[%c0_178, %c0_179] : memref<288x16xf32, #tpu.memory_space<vmem>>, vector<32x16xf32>
    tpu.vector_store %arg20[%c0_178, %c0_179], %282 {strides = array<i32>} : memref<288x16xf32, #tpu.memory_space<vmem>>, vector<32x16xf32>,
    %284 = vector.extract_strided_slice %281 {offsets = [0, 16], sizes = [32, 16], strides = [1, 1]} : vector<32x144xf32> to vector<32x16xf32>
    %c32_180 = arith.constant 32 : index
    %c0_181 = arith.constant 0 : index
    %285 = vector.load %arg20[%c32_180, %c0_181] : memref<288x16xf32, #tpu.memory_space<vmem>>, vector<32x16xf32>
    tpu.vector_store %arg20[%c32_180, %c0_181], %284 {strides = array<i32>} : memref<288x16xf32, #tpu.memory_space<vmem>>, vector<32x16xf32>,
    %286 = vector.extract_strided_slice %281 {offsets = [0, 32], sizes = [32, 16], strides = [1, 1]} : vector<32x144xf32> to vector<32x16xf32>
    %c64_182 = arith.constant 64 : index
    %c0_183 = arith.constant 0 : index
    %287 = vector.load %arg20[%c64_182, %c0_183] : memref<288x16xf32, #tpu.memory_space<vmem>>, vector<32x16xf32>
    tpu.vector_store %arg20[%c64_182, %c0_183], %286 {strides = array<i32>} : memref<288x16xf32, #tpu.memory_space<vmem>>, vector<32x16xf32>,
    %288 = vector.extract_strided_slice %281 {offsets = [0, 48], sizes = [32, 16], strides = [1, 1]} : vector<32x144xf32> to vector<32x16xf32>
    %c96_184 = arith.constant 96 : index
    %c0_185 = arith.constant 0 : index
    %289 = vector.load %arg20[%c96_184, %c0_185] : memref<288x16xf32, #tpu.memory_space<vmem>>, vector<32x16xf32>
    tpu.vector_store %arg20[%c96_184, %c0_185], %288 {strides = array<i32>} : memref<288x16xf32, #tpu.memory_space<vmem>>, vector<32x16xf32>,
    %290 = vector.extract_strided_slice %281 {offsets = [0, 64], sizes = [32, 16], strides = [1, 1]} : vector<32x144xf32> to vector<32x16xf32>
    %c128_186 = arith.constant 128 : index
    %c0_187 = arith.constant 0 : index
    %291 = vector.load %arg20[%c128_186, %c0_187] : memref<288x16xf32, #tpu.memory_space<vmem>>, vector<32x16xf32>
    tpu.vector_store %arg20[%c128_186, %c0_187], %290 {strides = array<i32>} : memref<288x16xf32, #tpu.memory_space<vmem>>, vector<32x16xf32>,
    %292 = vector.extract_strided_slice %281 {offsets = [0, 80], sizes = [32, 16], strides = [1, 1]} : vector<32x144xf32> to vector<32x16xf32>
    %c160_188 = arith.constant 160 : index
    %c0_189 = arith.constant 0 : index
    %293 = vector.load %arg20[%c160_188, %c0_189] : memref<288x16xf32, #tpu.memory_space<vmem>>, vector<32x16xf32>
    tpu.vector_store %arg20[%c160_188, %c0_189], %292 {strides = array<i32>} : memref<288x16xf32, #tpu.memory_space<vmem>>, vector<32x16xf32>,
    %294 = vector.extract_strided_slice %281 {offsets = [0, 96], sizes = [32, 16], strides = [1, 1]} : vector<32x144xf32> to vector<32x16xf32>
    %c192_190 = arith.constant 192 : index
    %c0_191 = arith.constant 0 : index
    %295 = vector.load %arg20[%c192_190, %c0_191] : memref<288x16xf32, #tpu.memory_space<vmem>>, vector<32x16xf32>
    tpu.vector_store %arg20[%c192_190, %c0_191], %294 {strides = array<i32>} : memref<288x16xf32, #tpu.memory_space<vmem>>, vector<32x16xf32>,
    %296 = vector.extract_strided_slice %281 {offsets = [0, 112], sizes = [32, 16], strides = [1, 1]} : vector<32x144xf32> to vector<32x16xf32>
    %c224_192 = arith.constant 224 : index
    %c0_193 = arith.constant 0 : index
    %297 = vector.load %arg20[%c224_192, %c0_193] : memref<288x16xf32, #tpu.memory_space<vmem>>, vector<32x16xf32>
    tpu.vector_store %arg20[%c224_192, %c0_193], %296 {strides = array<i32>} : memref<288x16xf32, #tpu.memory_space<vmem>>, vector<32x16xf32>,
    %298 = vector.extract_strided_slice %281 {offsets = [0, 128], sizes = [32, 16], strides = [1, 1]} : vector<32x144xf32> to vector<32x16xf32>
    %c256_194 = arith.constant 256 : index
    %c0_195 = arith.constant 0 : index
    %299 = vector.load %arg20[%c256_194, %c0_195] : memref<288x16xf32, #tpu.memory_space<vmem>>, vector<32x16xf32>
    tpu.vector_store %arg20[%c256_194, %c0_195], %298 {strides = array<i32>} : memref<288x16xf32, #tpu.memory_space<vmem>>, vector<32x16xf32>,
    %c0_196 = arith.constant 0 : index
    %c0_197 = arith.constant 0 : index
    %300 = vector.load %arg13[%c0_196, %c0_197] : memref<32x288xbf16, #tpu.memory_space<vmem>>, vector<32x288xbf16>
    %c0_198 = arith.constant 0 : index
    %c0_199 = arith.constant 0 : index
    %301 = vector.load %arg20[%c0_198, %c0_199] : memref<288x16xf32, #tpu.memory_space<vmem>>, vector<288x16xf32>
    %302 = arith.truncf %301 : vector<288x16xf32> to vector<288x16xbf16>
    %cst_200 = arith.constant dense<0.000000e+00> : vector<32x16xf32>
    %303 = tpu.matmul %300, %302, %cst_200 {dimension_numbers = #tpu.dot_dimension_numbers<[1], [0], [0], [1], [0, 0, 1, 1], [], []>} : vector<32x288xbf16>, vector<288x16xbf16>, vector<32x16xf32> -> vector<32x16xf32>
    %c0_201 = arith.constant 0 : index
    %c0_202 = arith.constant 0 : index
    %304 = vector.load %arg14[%c0_201, %c0_202] : memref<32x1xf32, #tpu.memory_space<vmem>>, vector<32x1xf32>
    %305 = vector.broadcast %304 : vector<32x1xf32> to vector<32x16xf32>
    %306 = arith.addf %303, %305 : vector<32x16xf32>
    %cst_203 = arith.constant dense<0.000000e+00> : vector<32xf32>
    %307 = vector.multi_reduction <add>, %306, %cst_203 [1] : vector<32x16xf32> to vector<32xf32>
    %308 = vector.shape_cast %307 : vector<32xf32> to vector<32x1xf32>
    %cst_204 = arith.constant 1.600000e+01 : f32
    %309 = vector.broadcast %cst_204 : f32 to vector<32x1xf32>
    %310 = arith.divf %308, %309 : vector<32x1xf32>
    %311 = vector.broadcast %310 : vector<32x1xf32> to vector<32x16xf32>
    %312 = arith.subf %306, %311 : vector<32x16xf32>
    %313 = arith.mulf %312, %312 : vector<32x16xf32>
    %cst_205 = arith.constant dense<0.000000e+00> : vector<32xf32>
    %314 = vector.multi_reduction <add>, %313, %cst_205 [1] : vector<32x16xf32> to vector<32xf32>
    %315 = vector.shape_cast %314 : vector<32xf32> to vector<32x1xf32>
    %cst_206 = arith.constant 1.600000e+01 : f32
    %316 = vector.broadcast %cst_206 : f32 to vector<32x1xf32>
    %317 = arith.divf %315, %316 : vector<32x1xf32>
    %cst_207 = arith.constant 9.99999974E-6 : f32
    %318 = vector.broadcast %cst_207 : f32 to vector<32x1xf32>
    %319 = arith.addf %317, %318 : vector<32x1xf32>
    %320 = math.rsqrt %319 : vector<32x1xf32>
    %321 = vector.broadcast %320 : vector<32x1xf32> to vector<32x16xf32>
    %322 = arith.mulf %312, %321 : vector<32x16xf32>
    %323 = arith.addf %322, %232 : vector<32x16xf32>
    %c0_208 = arith.constant 0 : index
    %c0_209 = arith.constant 0 : index
    %c0_210 = arith.constant 0 : index
    %324 = vector.load %arg17[%c0_208, %c0_209, %c0_210] : memref<1x32x16xf32, #tpu.memory_space<vmem>>, vector<1x32x16xf32>
    %325 = vector.shape_cast %324 : vector<1x32x16xf32> to vector<32x16xf32>
    %326 = vector.shape_cast %323 : vector<32x16xf32> to vector<1x32x16xf32>
    tpu.vector_store %arg17[%c0_208, %c0_209, %c0_210], %326 {strides = array<i32>} : memref<1x32x16xf32, #tpu.memory_space<vmem>>, vector<1x32x16xf32>,
    return
  }
  func.func @transform_0(%arg0: i32) -> (i32, i32, i32) {
    %c0_i32 = arith.constant 0 : i32
    %c0_i32_0 = arith.constant 0 : i32
    %c0_i32_1 = arith.constant 0 : i32
    return %arg0, %c0_i32, %c0_i32_0 : i32, i32, i32
  }
  func.func @transform_1(%arg0: i32) -> (i32, i32) {
    %c0_i32 = arith.constant 0 : i32
    %c0_i32_0 = arith.constant 0 : i32
    %c0_i32_1 = arith.constant 0 : i32
    return %c0_i32, %c0_i32_0 : i32, i32
  }
  func.func @transform_2(%arg0: i32) -> (i32, i32) {
    %c0_i32 = arith.constant 0 : i32
    %c0_i32_0 = arith.constant 0 : i32
    %c0_i32_1 = arith.constant 0 : i32
    return %c0_i32, %c0_i32_0 : i32, i32
  }
  func.func @transform_3(%arg0: i32) -> (i32, i32) {
    %c0_i32 = arith.constant 0 : i32
    %c0_i32_0 = arith.constant 0 : i32
    %c0_i32_1 = arith.constant 0 : i32
    return %c0_i32, %c0_i32_0 : i32, i32
  }
  func.func @transform_4(%arg0: i32) -> (i32, i32) {
    %c0_i32 = arith.constant 0 : i32
    %c0_i32_0 = arith.constant 0 : i32
    %c0_i32_1 = arith.constant 0 : i32
    return %c0_i32, %c0_i32_0 : i32, i32
  }
  func.func @transform_5(%arg0: i32) -> (i32, i32) {
    %c0_i32 = arith.constant 0 : i32
    %c0_i32_0 = arith.constant 0 : i32
    %c0_i32_1 = arith.constant 0 : i32
    return %c0_i32, %c0_i32_0 : i32, i32
  }
  func.func @transform_6(%arg0: i32) -> (i32, i32) {
    %c0_i32 = arith.constant 0 : i32
    %c0_i32_0 = arith.constant 0 : i32
    %c0_i32_1 = arith.constant 0 : i32
    return %c0_i32, %c0_i32_0 : i32, i32
  }
  func.func @transform_7(%arg0: i32) -> (i32, i32) {
    %c0_i32 = arith.constant 0 : i32
    %c0_i32_0 = arith.constant 0 : i32
    %c0_i32_1 = arith.constant 0 : i32
    return %c0_i32, %c0_i32_0 : i32, i32
  }
  func.func @transform_8(%arg0: i32) -> (i32, i32) {
    %c0_i32 = arith.constant 0 : i32
    %c0_i32_0 = arith.constant 0 : i32
    %c0_i32_1 = arith.constant 0 : i32
    return %c0_i32, %c0_i32_0 : i32, i32
  }
  func.func @transform_9(%arg0: i32) -> (i32, i32) {
    %c0_i32 = arith.constant 0 : i32
    %c0_i32_0 = arith.constant 0 : i32
    %c0_i32_1 = arith.constant 0 : i32
    return %c0_i32, %c0_i32_0 : i32, i32
  }
  func.func @transform_10(%arg0: i32) -> (i32, i32) {
    %c0_i32 = arith.constant 0 : i32
    %c0_i32_0 = arith.constant 0 : i32
    %c0_i32_1 = arith.constant 0 : i32
    return %c0_i32, %c0_i32_0 : i32, i32
  }
  func.func @transform_11(%arg0: i32) -> (i32, i32) {
    %c0_i32 = arith.constant 0 : i32
    %c0_i32_0 = arith.constant 0 : i32
    %c0_i32_1 = arith.constant 0 : i32
    return %c0_i32, %c0_i32_0 : i32, i32
  }
  func.func @transform_12(%arg0: i32) -> (i32, i32) {
    %c0_i32 = arith.constant 0 : i32
    %c0_i32_0 = arith.constant 0 : i32
    %c0_i32_1 = arith.constant 0 : i32
    return %c0_i32, %c0_i32_0 : i32, i32
  }
  func.func @transform_13(%arg0: i32) -> (i32, i32) {
    %c0_i32 = arith.constant 0 : i32
    %c0_i32_0 = arith.constant 0 : i32
    %c0_i32_1 = arith.constant 0 : i32
    return %c0_i32, %c0_i32_0 : i32, i32
  }
  func.func @transform_14(%arg0: i32) -> (i32, i32, i32) {
    %c0_i32 = arith.constant 0 : i32
    %c0_i32_0 = arith.constant 0 : i32
    %c0_i32_1 = arith.constant 0 : i32
    return %arg0, %c0_i32, %c0_i32_0 : i32, i32, i32
  }
  func.func @transform_15(%arg0: i32) -> (i32, i32, i32) {
    %c0_i32 = arith.constant 0 : i32
    %c0_i32_0 = arith.constant 0 : i32
    %c0_i32_1 = arith.constant 0 : i32
    return %arg0, %c0_i32, %c0_i32_0 : i32, i32, i32
  }
  func.func @transform_16(%arg0: i32) -> (i32, i32, i32) {
    %c0_i32 = arith.constant 0 : i32
    %c0_i32_0 = arith.constant 0 : i32
    %c0_i32_1 = arith.constant 0 : i32
    return %arg0, %c0_i32, %c0_i32_0 : i32, i32, i32
  }
}

</mosaic_0001>

<llo_original>
// kernel: forward.1
$region0: #{forward.1}
  #allocation0 [shape = 'u32[]', space=smem, size = 0x4, offset = 0x4, fixed_abs, tag = 'smem constant byte address 0x4 - core index']
  #allocation1 [shape = 'u32[144,128]{1,0:T(1,128)}', space=vmem, size = 0x12000, scoped, tag = 'internal scratch']
  #allocation2 [shape = 'f32[288,64]{1,0:T(8,128)}', space=vmem, size = 0x24000, scoped, tag = 'scratch operand']
  #allocation3 [shape = 'f32[576,16]{1,0:T(8,128)}', space=vmem, size = 0x48000, scoped, tag = 'scratch operand']
  #allocation4 [shape = 'f32[288,16]{1,0:T(8,128)}', space=vmem, size = 0x24000, scoped, tag = 'scratch operand']
  %s0 = inlined_call_operand.vmem [shape: bf16[2,243,256], index: 0, kind: input, shape index: {}]
  %s1 = inlined_call_operand.vmem [shape: bf16[8,243], index: 1, kind: input, shape index: {}]
  %s2 = inlined_call_operand.vmem [shape: f32[8,1], index: 2, kind: input, shape index: {}]
  %s3 = inlined_call_operand.vmem [shape: bf16[256,2304], index: 3, kind: input, shape index: {}]
  %s4 = inlined_call_operand.vmem [shape: bf16[16,288], index: 4, kind: input, shape index: {}]
  %s5 = inlined_call_operand.vmem [shape: f32[16,1], index: 5, kind: input, shape index: {}]
  %s6 = inlined_call_operand.vmem [shape: bf16[64,576], index: 6, kind: input, shape index: {}]
  %s7 = inlined_call_operand.vmem [shape: bf16[32,576], index: 7, kind: input, shape index: {}]
  %s8 = inlined_call_operand.vmem [shape: f32[32,1], index: 8, kind: input, shape index: {}]
  %s9 = inlined_call_operand.vmem [shape: bf16[16,144], index: 9, kind: input, shape index: {}]
  %s10 = inlined_call_operand.vmem [shape: bf16[32,288], index: 10, kind: input, shape index: {}]
  %s11 = inlined_call_operand.vmem [shape: f32[32,1], index: 11, kind: input, shape index: {}]
  %s12 = inlined_call_operand.vmem [shape: bf16[32,288], index: 12, kind: input, shape index: {}]
  %s13 = inlined_call_operand.vmem [shape: f32[32,1], index: 13, kind: input, shape index: {}]
  %s14 = inlined_call_operand.vmem [shape: f32[2,5,256], index: 14, kind: output, shape index: {0}]
  %s15 = inlined_call_operand.vmem [shape: f32[2,5,64], index: 15, kind: output, shape index: {1}]
  %s16 = inlined_call_operand.vmem [shape: f32[2,32,16], index: 16, kind: output, shape index: {2}]
  %17 = xla_tuple %s14, %s15, %s16
  %s18 = sld [smem:[#allocation0]]
  $region105: #{forward.1} parent=0
    _
  %s20 = ssub.s32 1, %s18
  %s21 = scalar_select 0, %s20, %s18
  loop: start=0, step=1, limit=4
  $region2: #{forward.1} parent=0 // loop_pre_header
    _
  $region3: #{forward.1} parent=0 // loop_header
    %s23 = sphi 0, %s27
    %p24 = scmp.ge.s32.totalorder %s23, 4
    %s33 = sphi 0, %s35
    %s36 = sphi 0, %s33
    %s37 = sphi 0, %s36
    %s53 = sphi 0, %s37
    %s57 = sphi 0, %s57
    %s59 = sphi 0, %s57
    %s60 = sphi 0, %s59
    %s74 = sphi 0, %s60
    %s78 = sphi 0, %s78
    %s80 = sphi 0, %s78
    %s81 = sphi 0, %s80
    %s95 = sphi 0, %s81
    %s99 = sphi 0, %s99
    %s101 = sphi 0, %s99
    %s102 = sphi 0, %s101
    %s116 = sphi 0, %s102
    %s120 = sphi 0, %s120
    %s122 = sphi 0, %s120
    %s123 = sphi 0, %s122
    %s137 = sphi 0, %s123
    %s141 = sphi 0, %s141
    %s143 = sphi 0, %s141
    %s144 = sphi 0, %s143
    %s158 = sphi 0, %s144
    %s162 = sphi 0, %s162
    %s164 = sphi 0, %s162
    %s165 = sphi 0, %s164
    %s179 = sphi 0, %s165
    %s183 = sphi 0, %s183
    %s185 = sphi 0, %s183
    %s186 = sphi 0, %s185
    %s200 = sphi 0, %s186
    %s204 = sphi 0, %s204
    %s206 = sphi 0, %s204
    %s207 = sphi 0, %s206
    %s221 = sphi 0, %s207
    %s225 = sphi 0, %s225
    %s227 = sphi 0, %s225
    %s228 = sphi 0, %s227
    %s242 = sphi 0, %s228
    %s246 = sphi 0, %s246
    %s248 = sphi 0, %s246
    %s249 = sphi 0, %s248
    %s263 = sphi 0, %s249
    %s267 = sphi 0, %s267
    %s269 = sphi 0, %s267
    %s270 = sphi 0, %s269
    %s284 = sphi 0, %s270
    %s288 = sphi 0, %s288
    %s290 = sphi 0, %s288
    %s291 = sphi 0, %s290
    %s305 = sphi 0, %s291
    %s309 = sphi 0, %s309
    %s311 = sphi 0, %s309
    %s312 = sphi 0, %s311
    %s326 = sphi 0, %s312
    %s332 = sphi 0, %s334
    %s335 = sphi 0, %s332
    %s336 = sphi 0, %s335
    %s352 = sphi 0, %s336
    %s358 = sphi 0, %s360
    %s361 = sphi 0, %s358
    %s362 = sphi 0, %s361
    %s378 = sphi 0, %s362
    %s384 = sphi 0, %s386
    %s387 = sphi 0, %s384
    %s388 = sphi 0, %s387
    %s404 = sphi 0, %s388
  $region4: #{forward.1} parent=0 // loop_header_branch
    %26 = sbr.rel (%p24) target = $region8
  $region5: #{forward.1} parent=0 // loop_body
    %s28 = ssub.s32 %s23, 1
    %s29 = ssub.s32 %s23, 2
    %s30 = sadd.s32 %s23, 1
    %s31 = ssub.s32 %s23, %s30
    %p32 = scmp.eq.s32.totalorder %s31, 0
    %s34 = sadd.s32 %s33, 1
    %s35 = scalar_select %p32, %s33, %s34
    %p38 = pneg %p32
    %p39 = scmp.eq.s32.totalorder %s23, 1
    %p40 = por %p38, %p39
    %p41 = scmp.ne.s32.totalorder %s33, %s36
    %p42 = scmp.eq.s32.totalorder %s23, 0
    %p43 = por %p41, %p42
    %p44 = scmp.ne.s32.totalorder %s33, %s36
    %p45 = scmp.eq.s32.totalorder %s28, 1
    %p46 = por %p44, %p45
    %p47 = scmp.ne.s32.totalorder %s36, %s37
    %p48 = scmp.eq.s32.totalorder %s28, 0
    %p49 = por %p47, %p48
    %p50 = scmp.ne.s32.totalorder %s36, %s37
    %p51 = scmp.eq.s32.totalorder %s29, 1
    %p52 = por %p50, %p51
    %p54 = scmp.ne.s32.totalorder %s37, %s53
    %p55 = scmp.eq.s32.totalorder %s29, 0
    %p56 = por %p54, %p55
    %s58 = sadd.s32 %s57, 1
    %p61 = scmp.eq.s32.totalorder %s23, 1
    %p62 = scmp.ne.s32.totalorder %s57, %s59
    %p63 = scmp.eq.s32.totalorder %s23, 0
    %p64 = por %p62, %p63
    %p65 = scmp.ne.s32.totalorder %s57, %s59
    %p66 = scmp.eq.s32.totalorder %s28, 1
    %p67 = por %p65, %p66
    %p68 = scmp.ne.s32.totalorder %s59, %s60
    %p69 = scmp.eq.s32.totalorder %s28, 0
    %p70 = por %p68, %p69
    %p71 = scmp.ne.s32.totalorder %s59, %s60
    %p72 = scmp.eq.s32.totalorder %s29, 1
    %p73 = por %p71, %p72
    %p75 = scmp.ne.s32.totalorder %s60, %s74
    %p76 = scmp.eq.s32.totalorder %s29, 0
    %p77 = por %p75, %p76
    %s79 = sadd.s32 %s78, 1
    %p82 = scmp.eq.s32.totalorder %s23, 1
    %p83 = scmp.ne.s32.totalorder %s78, %s80
    %p84 = scmp.eq.s32.totalorder %s23, 0
    %p85 = por %p83, %p84
    %p86 = scmp.ne.s32.totalorder %s78, %s80
    %p87 = scmp.eq.s32.totalorder %s28, 1
    %p88 = por %p86, %p87
    %p89 = scmp.ne.s32.totalorder %s80, %s81
    %p90 = scmp.eq.s32.totalorder %s28, 0
    %p91 = por %p89, %p90
    %p92 = scmp.ne.s32.totalorder %s80, %s81
    %p93 = scmp.eq.s32.totalorder %s29, 1
    %p94 = por %p92, %p93
    %p96 = scmp.ne.s32.totalorder %s81, %s95
    %p97 = scmp.eq.s32.totalorder %s29, 0
    %p98 = por %p96, %p97
    %s100 = sadd.s32 %s99, 1
    %p103 = scmp.eq.s32.totalorder %s23, 1
    %p104 = scmp.ne.s32.totalorder %s99, %s101
    %p105 = scmp.eq.s32.totalorder %s23, 0
    %p106 = por %p104, %p105
    %p107 = scmp.ne.s32.totalorder %s99, %s101
    %p108 = scmp.eq.s32.totalorder %s28, 1
    %p109 = por %p107, %p108
    %p110 = scmp.ne.s32.totalorder %s101, %s102
    %p111 = scmp.eq.s32.totalorder %s28, 0
    %p112 = por %p110, %p111
    %p113 = scmp.ne.s32.totalorder %s101, %s102
    %p114 = scmp.eq.s32.totalorder %s29, 1
    %p115 = por %p113, %p114
    %p117 = scmp.ne.s32.totalorder %s102, %s116
    %p118 = scmp.eq.s32.totalorder %s29, 0
    %p119 = por %p117, %p118
    %s121 = sadd.s32 %s120, 1
    %p124 = scmp.eq.s32.totalorder %s23, 1
    %p125 = scmp.ne.s32.totalorder %s120, %s122
    %p126 = scmp.eq.s32.totalorder %s23, 0
    %p127 = por %p125, %p126
    %p128 = scmp.ne.s32.totalorder %s120, %s122
    %p129 = scmp.eq.s32.totalorder %s28, 1
    %p130 = por %p128, %p129
    %p131 = scmp.ne.s32.totalorder %s122, %s123
    %p132 = scmp.eq.s32.totalorder %s28, 0
    %p133 = por %p131, %p132
    %p134 = scmp.ne.s32.totalorder %s122, %s123
    %p135 = scmp.eq.s32.totalorder %s29, 1
    %p136 = por %p134, %p135
    %p138 = scmp.ne.s32.totalorder %s123, %s137
    %p139 = scmp.eq.s32.totalorder %s29, 0
    %p140 = por %p138, %p139
    %s142 = sadd.s32 %s141, 1
    %p145 = scmp.eq.s32.totalorder %s23, 1
    %p146 = scmp.ne.s32.totalorder %s141, %s143
    %p147 = scmp.eq.s32.totalorder %s23, 0
    %p148 = por %p146, %p147
    %p149 = scmp.ne.s32.totalorder %s141, %s143
    %p150 = scmp.eq.s32.totalorder %s28, 1
    %p151 = por %p149, %p150
    %p152 = scmp.ne.s32.totalorder %s143, %s144
    %p153 = scmp.eq.s32.totalorder %s28, 0
    %p154 = por %p152, %p153
    %p155 = scmp.ne.s32.totalorder %s143, %s144
    %p156 = scmp.eq.s32.totalorder %s29, 1
    %p157 = por %p155, %p156
    %p159 = scmp.ne.s32.totalorder %s144, %s158
    %p160 = scmp.eq.s32.totalorder %s29, 0
    %p161 = por %p159, %p160
    %s163 = sadd.s32 %s162, 1
    %p166 = scmp.eq.s32.totalorder %s23, 1
    %p167 = scmp.ne.s32.totalorder %s162, %s164
    %p168 = scmp.eq.s32.totalorder %s23, 0
    %p169 = por %p167, %p168
    %p170 = scmp.ne.s32.totalorder %s162, %s164
    %p171 = scmp.eq.s32.totalorder %s28, 1
    %p172 = por %p170, %p171
    %p173 = scmp.ne.s32.totalorder %s164, %s165
    %p174 = scmp.eq.s32.totalorder %s28, 0
    %p175 = por %p173, %p174
    %p176 = scmp.ne.s32.totalorder %s164, %s165
    %p177 = scmp.eq.s32.totalorder %s29, 1
    %p178 = por %p176, %p177
    %p180 = scmp.ne.s32.totalorder %s165, %s179
    %p181 = scmp.eq.s32.totalorder %s29, 0
    %p182 = por %p180, %p181
    %s184 = sadd.s32 %s183, 1
    %p187 = scmp.eq.s32.totalorder %s23, 1
    %p188 = scmp.ne.s32.totalorder %s183, %s185
    %p189 = scmp.eq.s32.totalorder %s23, 0
    %p190 = por %p188, %p189
    %p191 = scmp.ne.s32.totalorder %s183, %s185
    %p192 = scmp.eq.s32.totalorder %s28, 1
    %p193 = por %p191, %p192
    %p194 = scmp.ne.s32.totalorder %s185, %s186
    %p195 = scmp.eq.s32.totalorder %s28, 0
    %p196 = por %p194, %p195
    %p197 = scmp.ne.s32.totalorder %s185, %s186
    %p198 = scmp.eq.s32.totalorder %s29, 1
    %p199 = por %p197, %p198
    %p201 = scmp.ne.s32.totalorder %s186, %s200
    %p202 = scmp.eq.s32.totalorder %s29, 0
    %p203 = por %p201, %p202
    %s205 = sadd.s32 %s204, 1
    %p208 = scmp.eq.s32.totalorder %s23, 1
    %p209 = scmp.ne.s32.totalorder %s204, %s206
    %p210 = scmp.eq.s32.totalorder %s23, 0
    %p211 = por %p209, %p210
    %p212 = scmp.ne.s32.totalorder %s204, %s206
    %p213 = scmp.eq.s32.totalorder %s28, 1
    %p214 = por %p212, %p213
    %p215 = scmp.ne.s32.totalorder %s206, %s207
    %p216 = scmp.eq.s32.totalorder %s28, 0
    %p217 = por %p215, %p216
    %p218 = scmp.ne.s32.totalorder %s206, %s207
    %p219 = scmp.eq.s32.totalorder %s29, 1
    %p220 = por %p218, %p219
    %p222 = scmp.ne.s32.totalorder %s207, %s221
    %p223 = scmp.eq.s32.totalorder %s29, 0
    %p224 = por %p222, %p223
    %s226 = sadd.s32 %s225, 1
    %p229 = scmp.eq.s32.totalorder %s23, 1
    %p230 = scmp.ne.s32.totalorder %s225, %s227
    %p231 = scmp.eq.s32.totalorder %s23, 0
    %p232 = por %p230, %p231
    %p233 = scmp.ne.s32.totalorder %s225, %s227
    %p234 = scmp.eq.s32.totalorder %s28, 1
    %p235 = por %p233, %p234
    %p236 = scmp.ne.s32.totalorder %s227, %s228
    %p237 = scmp.eq.s32.totalorder %s28, 0
    %p238 = por %p236, %p237
    %p239 = scmp.ne.s32.totalorder %s227, %s228
    %p240 = scmp.eq.s32.totalorder %s29, 1
    %p241 = por %p239, %p240
    %p243 = scmp.ne.s32.totalorder %s228, %s242
    %p244 = scmp.eq.s32.totalorder %s29, 0
    %p245 = por %p243, %p244
    %s247 = sadd.s32 %s246, 1
    %p250 = scmp.eq.s32.totalorder %s23, 1
    %p251 = scmp.ne.s32.totalorder %s246, %s248
    %p252 = scmp.eq.s32.totalorder %s23, 0
    %p253 = por %p251, %p252
    %p254 = scmp.ne.s32.totalorder %s246, %s248
    %p255 = scmp.eq.s32.totalorder %s28, 1
    %p256 = por %p254, %p255
    %p257 = scmp.ne.s32.totalorder %s248, %s249
    %p258 = scmp.eq.s32.totalorder %s28, 0
    %p259 = por %p257, %p258
    %p260 = scmp.ne.s32.totalorder %s248, %s249
    %p261 = scmp.eq.s32.totalorder %s29, 1
    %p262 = por %p260, %p261
    %p264 = scmp.ne.s32.totalorder %s249, %s263
    %p265 = scmp.eq.s32.totalorder %s29, 0
    %p266 = por %p264, %p265
    %s268 = sadd.s32 %s267, 1
    %p271 = scmp.eq.s32.totalorder %s23, 1
    %p272 = scmp.ne.s32.totalorder %s267, %s269
    %p273 = scmp.eq.s32.totalorder %s23, 0
    %p274 = por %p272, %p273
    %p275 = scmp.ne.s32.totalorder %s267, %s269
    %p276 = scmp.eq.s32.totalorder %s28, 1
    %p277 = por %p275, %p276
    %p278 = scmp.ne.s32.totalorder %s269, %s270
    %p279 = scmp.eq.s32.totalorder %s28, 0
    %p280 = por %p278, %p279
    %p281 = scmp.ne.s32.totalorder %s269, %s270
    %p282 = scmp.eq.s32.totalorder %s29, 1
    %p283 = por %p281, %p282
    %p285 = scmp.ne.s32.totalorder %s270, %s284
    %p286 = scmp.eq.s32.totalorder %s29, 0
    %p287 = por %p285, %p286
    %s289 = sadd.s32 %s288, 1
    %p292 = scmp.eq.s32.totalorder %s23, 1
    %p293 = scmp.ne.s32.totalorder %s288, %s290
    %p294 = scmp.eq.s32.totalorder %s23, 0
    %p295 = por %p293, %p294
    %p296 = scmp.ne.s32.totalorder %s288, %s290
    %p297 = scmp.eq.s32.totalorder %s28, 1
    %p298 = por %p296, %p297
    %p299 = scmp.ne.s32.totalorder %s290, %s291
    %p300 = scmp.eq.s32.totalorder %s28, 0
    %p301 = por %p299, %p300
    %p302 = scmp.ne.s32.totalorder %s290, %s291
    %p303 = scmp.eq.s32.totalorder %s29, 1
    %p304 = por %p302, %p303
    %p306 = scmp.ne.s32.totalorder %s291, %s305
    %p307 = scmp.eq.s32.totalorder %s29, 0
    %p308 = por %p306, %p307
    %s310 = sadd.s32 %s309, 1
    %p313 = scmp.eq.s32.totalorder %s23, 1
    %p314 = scmp.ne.s32.totalorder %s309, %s311
    %p315 = scmp.eq.s32.totalorder %s23, 0
    %p316 = por %p314, %p315
    %p317 = scmp.ne.s32.totalorder %s309, %s311
    %p318 = scmp.eq.s32.totalorder %s28, 1
    %p319 = por %p317, %p318
    %p320 = scmp.ne.s32.totalorder %s311, %s312
    %p321 = scmp.eq.s32.totalorder %s28, 0
    %p322 = por %p320, %p321
    %p323 = scmp.ne.s32.totalorder %s311, %s312
    %p324 = scmp.eq.s32.totalorder %s29, 1
    %p325 = por %p323, %p324
    %p327 = scmp.ne.s32.totalorder %s312, %s326
    %p328 = scmp.eq.s32.totalorder %s29, 0
    %p329 = por %p327, %p328
    %s330 = ssub.s32 %s23, %s30
    %p331 = scmp.eq.s32.totalorder %s330, 0
    %s333 = sadd.s32 %s332, 1
    %s334 = scalar_select %p331, %s332, %s333
    %p337 = pneg %p331
    %p338 = scmp.eq.s32.totalorder %s23, 1
    %p339 = por %p337, %p338
    %p340 = scmp.ne.s32.totalorder %s332, %s335
    %p341 = scmp.eq.s32.totalorder %s23, 0
    %p342 = por %p340, %p341
    %p343 = scmp.ne.s32.totalorder %s332, %s335
    %p344 = scmp.eq.s32.totalorder %s28, 1
    %p345 = por %p343, %p344
    %p346 = scmp.ne.s32.totalorder %s335, %s336
    %p347 = scmp.eq.s32.totalorder %s28, 0
    %p348 = por %p346, %p347
    %p349 = scmp.ne.s32.totalorder %s335, %s336
    %p350 = scmp.eq.s32.totalorder %s29, 1
    %p351 = por %p349, %p350
    %p353 = scmp.ne.s32.totalorder %s336, %s352
    %p354 = scmp.eq.s32.totalorder %s29, 0
    %p355 = por %p353, %p354
    %s356 = ssub.s32 %s23, %s30
    %p357 = scmp.eq.s32.totalorder %s356, 0
    %s359 = sadd.s32 %s358, 1
    %s360 = scalar_select %p357, %s358, %s359
    %p363 = pneg %p357
    %p364 = scmp.eq.s32.totalorder %s23, 1
    %p365 = por %p363, %p364
    %p366 = scmp.ne.s32.totalorder %s358, %s361
    %p367 = scmp.eq.s32.totalorder %s23, 0
    %p368 = por %p366, %p367
    %p369 = scmp.ne.s32.totalorder %s358, %s361
    %p370 = scmp.eq.s32.totalorder %s28, 1
    %p371 = por %p369, %p370
    %p372 = scmp.ne.s32.totalorder %s361, %s362
    %p373 = scmp.eq.s32.totalorder %s28, 0
    %p374 = por %p372, %p373
    %p375 = scmp.ne.s32.totalorder %s361, %s362
    %p376 = scmp.eq.s32.totalorder %s29, 1
    %p377 = por %p375, %p376
    %p379 = scmp.ne.s32.totalorder %s362, %s378
    %p380 = scmp.eq.s32.totalorder %s29, 0
    %p381 = por %p379, %p380
    %s382 = ssub.s32 %s23, %s30
    %p383 = scmp.eq.s32.totalorder %s382, 0
    %s385 = sadd.s32 %s384, 1
    %s386 = scalar_select %p383, %s384, %s385
    %p389 = pneg %p383
    %p390 = scmp.eq.s32.totalorder %s23, 1
    %p391 = por %p389, %p390
    %p392 = scmp.ne.s32.totalorder %s384, %s387
    %p393 = scmp.eq.s32.totalorder %s23, 0
    %p394 = por %p392, %p393
    %p395 = scmp.ne.s32.totalorder %s384, %s387
    %p396 = scmp.eq.s32.totalorder %s28, 1
    %p397 = por %p395, %p396
    %p398 = scmp.ne.s32.totalorder %s387, %s388
    %p399 = scmp.eq.s32.totalorder %s28, 0
    %p400 = por %p398, %p399
    %p401 = scmp.ne.s32.totalorder %s387, %s388
    %p402 = scmp.eq.s32.totalorder %s29, 1
    %p403 = por %p401, %p402
    %p405 = scmp.ne.s32.totalorder %s388, %s404
    %p406 = scmp.eq.s32.totalorder %s29, 0
    %p407 = por %p405, %p406
    %p408 = scmp.le.s32.totalorder 1, %s23
    %p409 = scmp.lt.s32.totalorder %s23, 3
    %p410 = pnand %p408, %p409
    %p411 = pneg %p410
    // Predicated region
    $region9: #{forward.1} parent=5 // pred_check
      _
    $region10: #{forward.1} parent=5 // pred_check_branch
      %413 = sbr.rel (%p410) target = $region12
    $region11: #{forward.1} parent=5 // pred_region
      %s414 = ssub.s32 %s23, 1
      // Predicated region
      $region13: #{forward.1} parent=11 // pred_check
        %p415 = pneg %p70
      $region14: #{forward.1} parent=11 // pred_check_branch
        %417 = sbr.rel (%p415) target = $region16
      $region15: #{forward.1} parent=11 // pred_region
        _
      $region16: #{forward.1} parent=11 // pred_fallthru
        _
      // Predicated region
      $region17: #{forward.1} parent=11 // pred_check
        %p418 = pneg %p91
      $region18: #{forward.1} parent=11 // pred_check_branch
        %420 = sbr.rel (%p418) target = $region20
      $region19: #{forward.1} parent=11 // pred_region
        _
      $region20: #{forward.1} parent=11 // pred_fallthru
        _
      // Predicated region
      $region21: #{forward.1} parent=11 // pred_check
        %p421 = pneg %p112
      $region22: #{forward.1} parent=11 // pred_check_branch
        %423 = sbr.rel (%p421) target = $region24
      $region23: #{forward.1} parent=11 // pred_region
        _
      $region24: #{forward.1} parent=11 // pred_fallthru
        _
      // Predicated region
      $region25: #{forward.1} parent=11 // pred_check
        %p424 = pneg %p133
      $region26: #{forward.1} parent=11 // pred_check_branch
        %426 = sbr.rel (%p424) target = $region28
      $region27: #{forward.1} parent=11 // pred_region
        _
      $region28: #{forward.1} parent=11 // pred_fallthru
        _
      // Predicated region
      $region29: #{forward.1} parent=11 // pred_check
        %p427 = pneg %p154
      $region30: #{forward.1} parent=11 // pred_check_branch
        %429 = sbr.rel (%p427) target = $region32
      $region31: #{forward.1} parent=11 // pred_region
        _
      $region32: #{forward.1} parent=11 // pred_fallthru
        _
      // Predicated region
      $region33: #{forward.1} parent=11 // pred_check
        %p430 = pneg %p175
      $region34: #{forward.1} parent=11 // pred_check_branch
        %432 = sbr.rel (%p430) target = $region36
      $region35: #{forward.1} parent=11 // pred_region
        _
      $region36: #{forward.1} parent=11 // pred_fallthru
        _
      // Predicated region
      $region37: #{forward.1} parent=11 // pred_check
        %p433 = pneg %p196
      $region38: #{forward.1} parent=11 // pred_check_branch
        %435 = sbr.rel (%p433) target = $region40
      $region39: #{forward.1} parent=11 // pred_region
        _
      $region40: #{forward.1} parent=11 // pred_fallthru
        _
      // Predicated region
      $region41: #{forward.1} parent=11 // pred_check
        %p436 = pneg %p217
      $region42: #{forward.1} parent=11 // pred_check_branch
        %438 = sbr.rel (%p436) target = $region44
      $region43: #{forward.1} parent=11 // pred_region
        _
      $region44: #{forward.1} parent=11 // pred_fallthru
        _
      // Predicated region
      $region45: #{forward.1} parent=11 // pred_check
        %p439 = pneg %p238
      $region46: #{forward.1} parent=11 // pred_check_branch
        %441 = sbr.rel (%p439) target = $region48
      $region47: #{forward.1} parent=11 // pred_region
        _
      $region48: #{forward.1} parent=11 // pred_fallthru
        _
      // Predicated region
      $region49: #{forward.1} parent=11 // pred_check
        %p442 = pneg %p259
      $region50: #{forward.1} parent=11 // pred_check_branch
        %444 = sbr.rel (%p442) target = $region52
      $region51: #{forward.1} parent=11 // pred_region
        _
      $region52: #{forward.1} parent=11 // pred_fallthru
        _
      // Predicated region
      $region53: #{forward.1} parent=11 // pred_check
        %p445 = pneg %p280
      $region54: #{forward.1} parent=11 // pred_check_branch
        %447 = sbr.rel (%p445) target = $region56
      $region55: #{forward.1} parent=11 // pred_region
        _
      $region56: #{forward.1} parent=11 // pred_fallthru
        _
      // Predicated region
      $region57: #{forward.1} parent=11 // pred_check
        %p448 = pneg %p301
      $region58: #{forward.1} parent=11 // pred_check_branch
        %450 = sbr.rel (%p448) target = $region60
      $region59: #{forward.1} parent=11 // pred_region
        _
      $region60: #{forward.1} parent=11 // pred_fallthru
        _
      // Predicated region
      $region61: #{forward.1} parent=11 // pred_check
        %p451 = pneg %p322
      $region62: #{forward.1} parent=11 // pred_check_branch
        %453 = sbr.rel (%p451) target = $region64
      $region63: #{forward.1} parent=11 // pred_region
        _
      $region64: #{forward.1} parent=11 // pred_fallthru
        _
    $region12: #{forward.1} parent=5 // pred_fallthru
      _
    %p454 = scmp.lt.s32.totalorder %s23, 2
    // Predicated region
    $region65: #{forward.1} parent=5 // pred_check
      %p455 = pneg %p454
    $region66: #{forward.1} parent=5 // pred_check_branch
      %457 = sbr.rel (%p455) target = $region68
    $region67: #{forward.1} parent=5 // pred_region
      // Predicated region
      $region69: #{forward.1} parent=67 // pred_check
        %p458 = pneg %p43
      $region70: #{forward.1} parent=67 // pred_check_branch
        %460 = sbr.rel (%p458) target = $region72
      $region71: #{forward.1} parent=67 // pred_region
        %p461 = scmp.lt.s32.totalorder %s23, 1
        %s462 = scalar_select %p461, %s23, 1
        %s463 = smul.addr %s462, 62
        %s464 = smul.addr %s463, 4
        %s465 = scalar_lea.vmem %s0, %s464
      $region72: #{forward.1} parent=67 // pred_fallthru
        _
    $region68: #{forward.1} parent=5 // pred_fallthru
      _
    %p466 = scmp.le.s32.totalorder 1, %s23
    %p467 = scmp.lt.s32.totalorder %s23, 3
    %p468 = pnand %p466, %p467
    %p469 = pneg %p468
    // Predicated region
    $region73: #{forward.1} parent=5 // pred_check
      _
    $region74: #{forward.1} parent=5 // pred_check_branch
      %471 = sbr.rel (%p468) target = $region76
    $region75: #{forward.1} parent=5 // pred_region
      %s472 = ssub.s32 %s23, 1
      %p473 = scmp.lt.s32.totalorder %s28, 1
      %s474 = scalar_select %p473, %s28, 1
      %s475 = smul.addr %s474, 62
      %s476 = smul.addr %s475, 4
      %s477 = scalar_lea.vmem %s0, %s476
      %p478 = pneg %p49
      %p479 = pneg %p46
      %p480 = pneg %p70
      %p481 = pneg %p67
      %p482 = pneg %p91
      %p483 = pneg %p88
      %p484 = pneg %p112
      %p485 = pneg %p109
      %p486 = pneg %p133
      %p487 = pneg %p130
      %p488 = pneg %p154
      %p489 = pneg %p151
      %p490 = pneg %p175
      %p491 = pneg %p172
      %p492 = pneg %p196
      %p493 = pneg %p193
      %p494 = pneg %p217
      %p495 = pneg %p214
      %p496 = pneg %p238
      %p497 = pneg %p235
      %p498 = pneg %p259
      %p499 = pneg %p256
      %p500 = pneg %p280
      %p501 = pneg %p277
      %p502 = pneg %p301
      %p503 = pneg %p298
      %p504 = pneg %p322
      %p505 = pneg %p319
      %p506 = pneg %p348
      %p507 = pneg %p345
      %p508 = scmp.lt.s32.totalorder %s28, 1
      %s509 = scalar_select %p508, %s28, 1
      %s510 = smul.addr %s509, 2
      %s511 = smul.addr %s510, 8
      %s512 = scalar_lea.vmem %s14, %s511
      %p513 = pneg %p374
      %p514 = pneg %p371
      %p515 = scmp.lt.s32.totalorder %s28, 1
      %s516 = scalar_select %p515, %s28, 1
      %s517 = smul.addr %s516, 8
      %s518 = scalar_lea.vmem %s15, %s517
      %p519 = pneg %p400
      %p520 = pneg %p397
      %p521 = scmp.lt.s32.totalorder %s28, 1
      %s522 = scalar_select %p521, %s28, 1
      %s523 = smul.addr %s522, 4
      %s524 = smul.addr %s523, 8
      %s525 = scalar_lea.vmem %s16, %s524
      %p526 = scmp.lt.s32.totalorder %s28, 1
      %s527 = scalar_select %p526, %s28, 1
      %s528 = smul.addr %s527, 62
      %s529 = smul.addr %s528, 4
      %s530 = scalar_lea.vmem %s0, %s529
      %p531 = scmp.lt.s32.totalorder %s28, 1
      %s532 = scalar_select %p531, %s28, 1
      %s533 = smul.addr %s532, 2
      %s534 = smul.addr %s533, 8
      %s535 = scalar_lea.vmem %s14, %s534
      %p536 = scmp.lt.s32.totalorder %s28, 1
      %s537 = scalar_select %p536, %s28, 1
      %s538 = smul.addr %s537, 8
      %s539 = scalar_lea.vmem %s15, %s538
      %p540 = scmp.lt.s32.totalorder %s28, 1
      %s541 = scalar_select %p540, %s28, 1
      %s542 = smul.addr %s541, 4
      %s543 = smul.addr %s542, 8
      %s544 = scalar_lea.vmem %s16, %s543
      %v546 = vld [vmem:[%s1] sm:$0xff]
      %v547 = vld [vmem:[%s530] sm:$0xff]
      %v548 = vld [vmem:[%s530 + $0x8] sm:$0xff]
      %v549 = vld [vmem:[%s530 + $0x10] sm:$0xff]
      %v550 = vld [vmem:[%s530 + $0x18] sm:$0xff]
      %v551 = vld [vmem:[%s530 + $0x20] sm:$0xff]
      %v552 = vld [vmem:[%s530 + $0x28] sm:$0xff]
      %v553 = vld [vmem:[%s530 + $0x30] sm:$0xff]
      %v554 = vld [vmem:[%s530 + $0x38] sm:$0xff]
      %v555 = vld [vmem:[%s530 + $0x40] sm:$0xff]
      %v556 = vld [vmem:[%s530 + $0x48] sm:$0xff]
      %v557 = vld [vmem:[%s530 + $0x50] sm:$0xff]
      %v558 = vld [vmem:[%s530 + $0x58] sm:$0xff]
      %v559 = vld [vmem:[%s530 + $0x60] sm:$0xff]
      %v560 = vld [vmem:[%s530 + $0x68] sm:$0xff]
      %v561 = vld [vmem:[%s530 + $0x70] sm:$0xff]
      %v562 = vld [vmem:[%s530 + $0x78] sm:$0xff]
      %v563 = vld [vmem:[%s530 + $0x80] sm:$0xff]
      %v564 = vld [vmem:[%s530 + $0x88] sm:$0xff]
      %v565 = vld [vmem:[%s530 + $0x90] sm:$0xff]
      %v566 = vld [vmem:[%s530 + $0x98] sm:$0xff]
      %v567 = vld [vmem:[%s530 + $0xa0] sm:$0xff]
      %v568 = vld [vmem:[%s530 + $0xa8] sm:$0xff]
      %v569 = vld [vmem:[%s530 + $0xb0] sm:$0xff]
      %v570 = vld [vmem:[%s530 + $0xb8] sm:$0xff]
      %v571 = vld [vmem:[%s530 + $0xc0] sm:$0xff]
      %v572 = vld [vmem:[%s530 + $0xc8] sm:$0xff]
      %v573 = vld [vmem:[%s530 + $0xd0] sm:$0xff]
      %v574 = vld [vmem:[%s530 + $0xd8] sm:$0xff]
      %v575 = vld [vmem:[%s530 + $0xe0] sm:$0xff]
      %v576 = vld [vmem:[%s530 + $0xe8] sm:$0xff]
      %v577 = vld [vmem:[%s530 + $0xf0] sm:$0x33]
      %v578 = vld [vmem:[%s2] sm:$0xff]
      %580 = vset.pattern.permute.xlu0 0
      %581 = vperm.xlu0 %580, %v578
      %v582 = vpop.permute.xlu0 %581
      %v585 = vunpack.c.l.b16 %v546
      %v586 = vunpack.c.h.b16 %v546
      %v587 = vpack.c.b16 %v585, %v585
      %v588 = vpack.c.b16 %v586, %v586
      %v621 = vunpack.c.l.b16 %v547
      %v622 = vunpack.c.h.b16 %v547
      %v623 = vunpack.c.l.b16 %v548
      %v624 = vunpack.c.h.b16 %v548
      %v625 = vunpack.c.l.b16 %v549
      %v626 = vunpack.c.h.b16 %v549
      %v627 = vunpack.c.l.b16 %v550
      %v628 = vunpack.c.h.b16 %v550
      %v629 = vunpack.c.l.b16 %v551
      %v630 = vunpack.c.h.b16 %v551
      %v631 = vunpack.c.l.b16 %v552
      %v632 = vunpack.c.h.b16 %v552
      %v633 = vunpack.c.l.b16 %v553
      %v634 = vunpack.c.h.b16 %v553
      %v635 = vunpack.c.l.b16 %v554
      %v636 = vunpack.c.h.b16 %v554
      %v637 = vunpack.c.l.b16 %v555
      %v638 = vunpack.c.h.b16 %v555
      %v639 = vunpack.c.l.b16 %v556
      %v640 = vunpack.c.h.b16 %v556
      %v641 = vunpack.c.l.b16 %v557
      %v642 = vunpack.c.h.b16 %v557
      %v643 = vunpack.c.l.b16 %v558
      %v644 = vunpack.c.h.b16 %v558
      %v645 = vunpack.c.l.b16 %v559
      %v646 = vunpack.c.h.b16 %v559
      %v647 = vunpack.c.l.b16 %v560
      %v648 = vunpack.c.h.b16 %v560
      %v649 = vunpack.c.l.b16 %v561
      %v650 = vunpack.c.h.b16 %v561
      %v651 = vunpack.c.l.b16 %v562
      %v652 = vunpack.c.h.b16 %v562
      %v653 = vunpack.c.l.b16 %v563
      %v654 = vunpack.c.h.b16 %v563
      %v655 = vunpack.c.l.b16 %v564
      %v656 = vunpack.c.h.b16 %v564
      %v657 = vunpack.c.l.b16 %v565
      %v658 = vunpack.c.h.b16 %v565
      %v659 = vunpack.c.l.b16 %v566
      %v660 = vunpack.c.h.b16 %v566
      %v661 = vunpack.c.l.b16 %v567
      %v662 = vunpack.c.h.b16 %v567
      %v663 = vunpack.c.l.b16 %v568
      %v664 = vunpack.c.h.b16 %v568
      %v665 = vunpack.c.l.b16 %v569
      %v666 = vunpack.c.h.b16 %v569
      %v667 = vunpack.c.l.b16 %v570
      %v668 = vunpack.c.h.b16 %v570
      %v669 = vunpack.c.l.b16 %v571
      %v670 = vunpack.c.h.b16 %v571
      %v671 = vunpack.c.l.b16 %v572
      %v672 = vunpack.c.h.b16 %v572
      %v673 = vunpack.c.l.b16 %v573
      %v674 = vunpack.c.h.b16 %v573
      %v675 = vunpack.c.l.b16 %v574
      %v676 = vunpack.c.h.b16 %v574
      %v677 = vunpack.c.l.b16 %v575
      %v678 = vunpack.c.h.b16 %v575
      %v679 = vunpack.c.l.b16 %v576
      %v680 = vunpack.c.h.b16 %v576
      %v681 = vunpack.c.l.b16 %v577
      %v682 = vunpack.c.h.b16 %v577
      %v683 = vpack.c.b16 %v623, %v621
      %v684 = vpack.c.b16 %v624, %v622
      %v685 = vpack.c.b16 %v627, %v625
      %v686 = vpack.c.b16 %v628, %v626
      %v687 = vpack.c.b16 %v631, %v629
      %v688 = vpack.c.b16 %v632, %v630
      %v689 = vpack.c.b16 %v635, %v633
      %v690 = vpack.c.b16 %v636, %v634
      %v691 = vpack.c.b16 %v639, %v637
      %v692 = vpack.c.b16 %v640, %v638
      %v693 = vpack.c.b16 %v643, %v641
      %v694 = vpack.c.b16 %v644, %v642
      %v695 = vpack.c.b16 %v647, %v645
      %v696 = vpack.c.b16 %v648, %v646
      %v697 = vpack.c.b16 %v651, %v649
      %v698 = vpack.c.b16 %v652, %v650
      %v699 = vpack.c.b16 %v655, %v653
      %v700 = vpack.c.b16 %v656, %v654
      %v701 = vpack.c.b16 %v659, %v657
      %v702 = vpack.c.b16 %v660, %v658
      %v703 = vpack.c.b16 %v663, %v661
      %v704 = vpack.c.b16 %v664, %v662
      %v705 = vpack.c.b16 %v667, %v665
      %v706 = vpack.c.b16 %v668, %v666
      %v707 = vpack.c.b16 %v671, %v669
      %v708 = vpack.c.b16 %v672, %v670
      %v709 = vpack.c.b16 %v675, %v673
      %v710 = vpack.c.b16 %v676, %v674
      %v711 = vpack.c.b16 %v679, %v677
      %v712 = vpack.c.b16 %v680, %v678
      %v713 = vpack.c.b16 %v681, %v681
      %v714 = vpack.c.b16 %v682, %v682
      %vm745 = vcmask 941056
      %v747 = vsel %vm745, %v588, 0
      %vm749 = vcmask 1040384
      %vm750 = vcmask 1041408
      %v751 = vsel %vm749, 4294967295, 65535
      %v752 = vsel %vm750, %v751, 0
      %v754 = vand.u32 %v713, %v752
      %v757 = vand.u32 %v714, %v752
      %759 = vmatprep.subr.bf16.mxu0 %v698
      %760 = vmatpush1.bf16.msra.mxu0 %v697
      %761 = vmatprep.subr.bf16.mxu0 %v696
      %762 = vmatpush1.bf16.msra.mxu0 %v695
      %763 = vmatprep.subr.bf16.mxu0 %v694
      %764 = vmatpush1.bf16.msra.mxu0 %v693
      %765 = vmatprep.subr.bf16.mxu0 %v692
      %766 = vmatpush1.bf16.msra.mxu0 %v691
      %767 = vmatprep.subr.bf16.mxu0 %v690
      %768 = vmatpush1.bf16.msra.mxu0 %v689
      %769 = vmatprep.subr.bf16.mxu0 %v688
      %770 = vmatpush1.bf16.msra.mxu0 %v687
      %771 = vmatprep.subr.bf16.mxu0 %v686
      %772 = vmatpush1.bf16.msra.mxu0 %v685
      %773 = vmatprep.subr.bf16.mxu0 %v684
      %774 = vmatpush1.bf16.msra.mxu0 %v683
      %775 = vmatprep.subr.bf16.mxu0 %v757
      %776 = vmatpush2.bf16.msra.mxu0 %v754
      %777 = vmatprep.subr.bf16.mxu0 %v712
      %778 = vmatpush2.bf16.msra.mxu0 %v711
      %779 = vmatprep.subr.bf16.mxu0 %v710
      %780 = vmatpush2.bf16.msra.mxu0 %v709
      %781 = vmatprep.subr.bf16.mxu0 %v708
      %782 = vmatpush2.bf16.msra.mxu0 %v707
      %783 = vmatprep.subr.bf16.mxu0 %v706
      %784 = vmatpush2.bf16.msra.mxu0 %v705
      %785 = vmatprep.subr.bf16.mxu0 %v704
      %786 = vmatpush2.bf16.msra.mxu0 %v703
      %787 = vmatprep.subr.bf16.mxu0 %v702
      %788 = vmatpush2.bf16.msra.mxu0 %v701
      %789 = vmatprep.subr.bf16.mxu0 %v700
      %790 = vmatpush2.bf16.msra.mxu0 %v699
      %791 = vmatprep.mubr.bf16.mxu0 %v747
      %792 = vmatmul.mubr.bf16.gmra.mxu0 %v587
      %v793 = vpop.f32.mrf.mxu0
      %v794 = vadd.f32 %v582, %v793
      %v795 = vpop.f32.mrf.mxu0
      %v796 = vadd.f32 %v582, %v795
      %v797 = vpop.f32.mrf.mxu0
      %v798 = vpop.f32.mrf.mxu0
      %799 = vdwg.mxu0
      %v800 = vadd.f32 %v794, %v796
      %801 = vadd.xlane.f32.xlu0 %v800
      %v802 = vpop.xlane.xlu0 %801
      %v803 = vrcp.pop 256.0
      %v804 = vmul.f32 %v802, %v803
      %v805 = vsub.f32 %v794, %v804
      %v806 = vsub.f32 %v796, %v804
      %v807 = vmul.f32 %v805, %v805
      %v808 = vmul.f32 %v806, %v806
      %v809 = vadd.f32 %v807, %v808
      %810 = vadd.xlane.f32.xlu0 %v809
      %v811 = vpop.xlane.xlu0 %810
      %v812 = vmul.f32 %v811, %v803
      %v813 = vadd.f32 %v812, 1e-05
      %v814 = vrsqrt.pop %v813
      %v815 = vmul.f32 %v805, %v814
      %v816 = vmul.f32 %v806, %v814
      %v817 = vmax.f32 %v815, 0.0
      %v818 = vmax.f32 %v816, 0.0
      %819 = vst [vmem:[%s535] sm:$0x1f] %v817
      %820 = vst [vmem:[%s535 + $0x8] sm:$0x1f] %v818
      %v821 = vpack.c.bf16 %v817, %v817
      %v822 = vpack.c.bf16 %v818, %v818
      %v823 = vld [vmem:[%s3] sm:$0xff]
      %v824 = vld [vmem:[%s3 + $0x8] sm:$0xff]
      %v825 = vld [vmem:[%s3 + $0x10] sm:$0xff]
      %v826 = vld [vmem:[%s3 + $0x18] sm:$0xff]
      %v827 = vld [vmem:[%s3 + $0x20] sm:$0xff]
      %v828 = vld [vmem:[%s3 + $0x28] sm:$0xff]
      %v829 = vld [vmem:[%s3 + $0x30] sm:$0xff]
      %v830 = vld [vmem:[%s3 + $0x38] sm:$0xff]
      %v831 = vld [vmem:[%s3 + $0x40] sm:$0xff]
      %v832 = vld [vmem:[%s3 + $0x48] sm:$0xff]
      %v833 = vld [vmem:[%s3 + $0x50] sm:$0xff]
      %v834 = vld [vmem:[%s3 + $0x58] sm:$0xff]
      %v835 = vld [vmem:[%s3 + $0x60] sm:$0xff]
      %v836 = vld [vmem:[%s3 + $0x68] sm:$0xff]
      %v837 = vld [vmem:[%s3 + $0x70] sm:$0xff]
      %v838 = vld [vmem:[%s3 + $0x78] sm:$0xff]
      %v839 = vld [vmem:[%s3 + $0x80] sm:$0xff]
      %v840 = vld [vmem:[%s3 + $0x88] sm:$0xff]
      %v841 = vld [vmem:[%s3 + $0x90] sm:$0xff]
      %v842 = vld [vmem:[%s3 + $0x98] sm:$0xff]
      %v843 = vld [vmem:[%s3 + $0xa0] sm:$0xff]
      %v844 = vld [vmem:[%s3 + $0xa8] sm:$0xff]
      %v845 = vld [vmem:[%s3 + $0xb0] sm:$0xff]
      %v846 = vld [vmem:[%s3 + $0xb8] sm:$0xff]
      %v847 = vld [vmem:[%s3 + $0xc0] sm:$0xff]
      %v848 = vld [vmem:[%s3 + $0xc8] sm:$0xff]
      %v849 = vld [vmem:[%s3 + $0xd0] sm:$0xff]
      %v850 = vld [vmem:[%s3 + $0xd8] sm:$0xff]
      %v851 = vld [vmem:[%s3 + $0xe0] sm:$0xff]
      %v852 = vld [vmem:[%s3 + $0xe8] sm:$0xff]
      %v853 = vld [vmem:[%s3 + $0xf0] sm:$0xff]
      %v854 = vld [vmem:[%s3 + $0xf8] sm:$0xff]
      %v855 = vld [vmem:[%s3 + $0x100] sm:$0xff]
      %v856 = vld [vmem:[%s3 + $0x108] sm:$0xff]
      %v857 = vld [vmem:[%s3 + $0x110] sm:$0xff]
      %v858 = vld [vmem:[%s3 + $0x118] sm:$0xff]
      %v859 = vld [vmem:[%s3 + $0x120] sm:$0xff]
      %v860 = vld [vmem:[%s3 + $0x128] sm:$0xff]
      %v861 = vld [vmem:[%s3 + $0x130] sm:$0xff]
      %v862 = vld [vmem:[%s3 + $0x138] sm:$0xff]
      %v863 = vld [vmem:[%s3 + $0x140] sm:$0xff]
      %v864 = vld [vmem:[%s3 + $0x148] sm:$0xff]
      %v865 = vld [vmem:[%s3 + $0x150] sm:$0xff]
      %v866 = vld [vmem:[%s3 + $0x158] sm:$0xff]
      %v867 = vld [vmem:[%s3 + $0x160] sm:$0xff]
      %v868 = vld [vmem:[%s3 + $0x168] sm:$0xff]
      %v869 = vld [vmem:[%s3 + $0x170] sm:$0xff]
      %v870 = vld [vmem:[%s3 + $0x178] sm:$0xff]
      %v871 = vld [vmem:[%s3 + $0x180] sm:$0xff]
      %v872 = vld [vmem:[%s3 + $0x188] sm:$0xff]
      %v873 = vld [vmem:[%s3 + $0x190] sm:$0xff]
      %v874 = vld [vmem:[%s3 + $0x198] sm:$0xff]
      %v875 = vld [vmem:[%s3 + $0x1a0] sm:$0xff]
      %v876 = vld [vmem:[%s3 + $0x1a8] sm:$0xff]
      %v877 = vld [vmem:[%s3 + $0x1b0] sm:$0xff]
      %v878 = vld [vmem:[%s3 + $0x1b8] sm:$0xff]
      %v879 = vld [vmem:[%s3 + $0x1c0] sm:$0xff]
      %v880 = vld [vmem:[%s3 + $0x1c8] sm:$0xff]
      %v881 = vld [vmem:[%s3 + $0x1d0] sm:$0xff]
      %v882 = vld [vmem:[%s3 + $0x1d8] sm:$0xff]
      %v883 = vld [vmem:[%s3 + $0x1e0] sm:$0xff]
      %v884 = vld [vmem:[%s3 + $0x1e8] sm:$0xff]
      %v885 = vld [vmem:[%s3 + $0x1f0] sm:$0xff]
      %v886 = vld [vmem:[%s3 + $0x1f8] sm:$0xff]
      %v887 = vld [vmem:[%s3 + $0x200] sm:$0xff]
      %v888 = vld [vmem:[%s3 + $0x208] sm:$0xff]
      %v889 = vld [vmem:[%s3 + $0x210] sm:$0xff]
      %v890 = vld [vmem:[%s3 + $0x218] sm:$0xff]
      %v891 = vld [vmem:[%s3 + $0x220] sm:$0xff]
      %v892 = vld [vmem:[%s3 + $0x228] sm:$0xff]
      %v893 = vld [vmem:[%s3 + $0x230] sm:$0xff]
      %v894 = vld [vmem:[%s3 + $0x238] sm:$0xff]
      %v895 = vld [vmem:[%s3 + $0x240] sm:$0xff]
      %v896 = vld [vmem:[%s3 + $0x248] sm:$0xff]
      %v897 = vld [vmem:[%s3 + $0x250] sm:$0xff]
      %v898 = vld [vmem:[%s3 + $0x258] sm:$0xff]
      %v899 = vld [vmem:[%s3 + $0x260] sm:$0xff]
      %v900 = vld [vmem:[%s3 + $0x268] sm:$0xff]
      %v901 = vld [vmem:[%s3 + $0x270] sm:$0xff]
      %v902 = vld [vmem:[%s3 + $0x278] sm:$0xff]
      %v903 = vld [vmem:[%s3 + $0x280] sm:$0xff]
      %v904 = vld [vmem:[%s3 + $0x288] sm:$0xff]
      %v905 = vld [vmem:[%s3 + $0x290] sm:$0xff]
      %v906 = vld [vmem:[%s3 + $0x298] sm:$0xff]
      %v907 = vld [vmem:[%s3 + $0x2a0] sm:$0xff]
      %v908 = vld [vmem:[%s3 + $0x2a8] sm:$0xff]
      %v909 = vld [vmem:[%s3 + $0x2b0] sm:$0xff]
      %v910 = vld [vmem:[%s3 + $0x2b8] sm:$0xff]
      %v911 = vld [vmem:[%s3 + $0x2c0] sm:$0xff]
      %v912 = vld [vmem:[%s3 + $0x2c8] sm:$0xff]
      %v913 = vld [vmem:[%s3 + $0x2d0] sm:$0xff]
      %v914 = vld [vmem:[%s3 + $0x2d8] sm:$0xff]
      %v915 = vld [vmem:[%s3 + $0x2e0] sm:$0xff]
      %v916 = vld [vmem:[%s3 + $0x2e8] sm:$0xff]
      %v917 = vld [vmem:[%s3 + $0x2f0] sm:$0xff]
      %v918 = vld [vmem:[%s3 + $0x2f8] sm:$0xff]
      %v919 = vld [vmem:[%s3 + $0x300] sm:$0xff]
      %v920 = vld [vmem:[%s3 + $0x308] sm:$0xff]
      %v921 = vld [vmem:[%s3 + $0x310] sm:$0xff]
      %v922 = vld [vmem:[%s3 + $0x318] sm:$0xff]
      %v923 = vld [vmem:[%s3 + $0x320] sm:$0xff]
      %v924 = vld [vmem:[%s3 + $0x328] sm:$0xff]
      %v925 = vld [vmem:[%s3 + $0x330] sm:$0xff]
      %v926 = vld [vmem:[%s3 + $0x338] sm:$0xff]
      %v927 = vld [vmem:[%s3 + $0x340] sm:$0xff]
      %v928 = vld [vmem:[%s3 + $0x348] sm:$0xff]
      %v929 = vld [vmem:[%s3 + $0x350] sm:$0xff]
      %v930 = vld [vmem:[%s3 + $0x358] sm:$0xff]
      %v931 = vld [vmem:[%s3 + $0x360] sm:$0xff]
      %v932 = vld [vmem:[%s3 + $0x368] sm:$0xff]
      %v933 = vld [vmem:[%s3 + $0x370] sm:$0xff]
      %v934 = vld [vmem:[%s3 + $0x378] sm:$0xff]
      %v935 = vld [vmem:[%s3 + $0x380] sm:$0xff]
      %v936 = vld [vmem:[%s3 + $0x388] sm:$0xff]
      %v937 = vld [vmem:[%s3 + $0x390] sm:$0xff]
      %v938 = vld [vmem:[%s3 + $0x398] sm:$0xff]
      %v939 = vld [vmem:[%s3 + $0x3a0] sm:$0xff]
      %v940 = vld [vmem:[%s3 + $0x3a8] sm:$0xff]
      %v941 = vld [vmem:[%s3 + $0x3b0] sm:$0xff]
      %v942 = vld [vmem:[%s3 + $0x3b8] sm:$0xff]
      %v943 = vld [vmem:[%s3 + $0x3c0] sm:$0xff]
      %v944 = vld [vmem:[%s3 + $0x3c8] sm:$0xff]
      %v945 = vld [vmem:[%s3 + $0x3d0] sm:$0xff]
      %v946 = vld [vmem:[%s3 + $0x3d8] sm:$0xff]
      %v947 = vld [vmem:[%s3 + $0x3e0] sm:$0xff]
      %v948 = vld [vmem:[%s3 + $0x3e8] sm:$0xff]
      %v949 = vld [vmem:[%s3 + $0x3f0] sm:$0xff]
      %v950 = vld [vmem:[%s3 + $0x3f8] sm:$0xff]
      %v951 = vld [vmem:[%s3 + $0x400] sm:$0xff]
      %v952 = vld [vmem:[%s3 + $0x408] sm:$0xff]
      %v953 = vld [vmem:[%s3 + $0x410] sm:$0xff]
      %v954 = vld [vmem:[%s3 + $0x418] sm:$0xff]
      %v955 = vld [vmem:[%s3 + $0x420] sm:$0xff]
      %v956 = vld [vmem:[%s3 + $0x428] sm:$0xff]
      %v957 = vld [vmem:[%s3 + $0x430] sm:$0xff]
      %v958 = vld [vmem:[%s3 + $0x438] sm:$0xff]
      %v959 = vld [vmem:[%s3 + $0x440] sm:$0xff]
      %v960 = vld [vmem:[%s3 + $0x448] sm:$0xff]
      %v961 = vld [vmem:[%s3 + $0x450] sm:$0xff]
      %v962 = vld [vmem:[%s3 + $0x458] sm:$0xff]
      %v963 = vld [vmem:[%s3 + $0x460] sm:$0xff]
      %v964 = vld [vmem:[%s3 + $0x468] sm:$0xff]
      %v965 = vld [vmem:[%s3 + $0x470] sm:$0xff]
      %v966 = vld [vmem:[%s3 + $0x478] sm:$0xff]
      %v967 = vld [vmem:[%s3 + $0x480] sm:$0xff]
      %v968 = vld [vmem:[%s3 + $0x488] sm:$0xff]
      %v969 = vld [vmem:[%s3 + $0x490] sm:$0xff]
      %v970 = vld [vmem:[%s3 + $0x498] sm:$0xff]
      %v971 = vld [vmem:[%s3 + $0x4a0] sm:$0xff]
      %v972 = vld [vmem:[%s3 + $0x4a8] sm:$0xff]
      %v973 = vld [vmem:[%s3 + $0x4b0] sm:$0xff]
      %v974 = vld [vmem:[%s3 + $0x4b8] sm:$0xff]
      %v975 = vld [vmem:[%s3 + $0x4c0] sm:$0xff]
      %v976 = vld [vmem:[%s3 + $0x4c8] sm:$0xff]
      %v977 = vld [vmem:[%s3 + $0x4d0] sm:$0xff]
      %v978 = vld [vmem:[%s3 + $0x4d8] sm:$0xff]
      %v979 = vld [vmem:[%s3 + $0x4e0] sm:$0xff]
      %v980 = vld [vmem:[%s3 + $0x4e8] sm:$0xff]
      %v981 = vld [vmem:[%s3 + $0x4f0] sm:$0xff]
      %v982 = vld [vmem:[%s3 + $0x4f8] sm:$0xff]
      %v983 = vld [vmem:[%s3 + $0x500] sm:$0xff]
      %v984 = vld [vmem:[%s3 + $0x508] sm:$0xff]
      %v985 = vld [vmem:[%s3 + $0x510] sm:$0xff]
      %v986 = vld [vmem:[%s3 + $0x518] sm:$0xff]
      %v987 = vld [vmem:[%s3 + $0x520] sm:$0xff]
      %v988 = vld [vmem:[%s3 + $0x528] sm:$0xff]
      %v989 = vld [vmem:[%s3 + $0x530] sm:$0xff]
      %v990 = vld [vmem:[%s3 + $0x538] sm:$0xff]
      %v991 = vld [vmem:[%s3 + $0x540] sm:$0xff]
      %v992 = vld [vmem:[%s3 + $0x548] sm:$0xff]
      %v993 = vld [vmem:[%s3 + $0x550] sm:$0xff]
      %v994 = vld [vmem:[%s3 + $0x558] sm:$0xff]
      %v995 = vld [vmem:[%s3 + $0x560] sm:$0xff]
      %v996 = vld [vmem:[%s3 + $0x568] sm:$0xff]
      %v997 = vld [vmem:[%s3 + $0x570] sm:$0xff]
      %v998 = vld [vmem:[%s3 + $0x578] sm:$0xff]
      %v999 = vld [vmem:[%s3 + $0x580] sm:$0xff]
      %v1000 = vld [vmem:[%s3 + $0x588] sm:$0xff]
      %v1001 = vld [vmem:[%s3 + $0x590] sm:$0xff]
      %v1002 = vld [vmem:[%s3 + $0x598] sm:$0xff]
      %v1003 = vld [vmem:[%s3 + $0x5a0] sm:$0xff]
      %v1004 = vld [vmem:[%s3 + $0x5a8] sm:$0xff]
      %v1005 = vld [vmem:[%s3 + $0x5b0] sm:$0xff]
      %v1006 = vld [vmem:[%s3 + $0x5b8] sm:$0xff]
      %v1007 = vld [vmem:[%s3 + $0x5c0] sm:$0xff]
      %v1008 = vld [vmem:[%s3 + $0x5c8] sm:$0xff]
      %v1009 = vld [vmem:[%s3 + $0x5d0] sm:$0xff]
      %v1010 = vld [vmem:[%s3 + $0x5d8] sm:$0xff]
      %v1011 = vld [vmem:[%s3 + $0x5e0] sm:$0xff]
      %v1012 = vld [vmem:[%s3 + $0x5e8] sm:$0xff]
      %v1013 = vld [vmem:[%s3 + $0x5f0] sm:$0xff]
      %v1014 = vld [vmem:[%s3 + $0x5f8] sm:$0xff]
      %v1015 = vld [vmem:[%s3 + $0x600] sm:$0xff]
      %v1016 = vld [vmem:[%s3 + $0x608] sm:$0xff]
      %v1017 = vld [vmem:[%s3 + $0x610] sm:$0xff]
      %v1018 = vld [vmem:[%s3 + $0x618] sm:$0xff]
      %v1019 = vld [vmem:[%s3 + $0x620] sm:$0xff]
      %v1020 = vld [vmem:[%s3 + $0x628] sm:$0xff]
      %v1021 = vld [vmem:[%s3 + $0x630] sm:$0xff]
      %v1022 = vld [vmem:[%s3 + $0x638] sm:$0xff]
      %v1023 = vld [vmem:[%s3 + $0x640] sm:$0xff]
      %v1024 = vld [vmem:[%s3 + $0x648] sm:$0xff]
      %v1025 = vld [vmem:[%s3 + $0x650] sm:$0xff]
      %v1026 = vld [vmem:[%s3 + $0x658] sm:$0xff]
      %v1027 = vld [vmem:[%s3 + $0x660] sm:$0xff]
      %v1028 = vld [vmem:[%s3 + $0x668] sm:$0xff]
      %v1029 = vld [vmem:[%s3 + $0x670] sm:$0xff]
      %v1030 = vld [vmem:[%s3 + $0x678] sm:$0xff]
      %v1031 = vld [vmem:[%s3 + $0x680] sm:$0xff]
      %v1032 = vld [vmem:[%s3 + $0x688] sm:$0xff]
      %v1033 = vld [vmem:[%s3 + $0x690] sm:$0xff]
      %v1034 = vld [vmem:[%s3 + $0x698] sm:$0xff]
      %v1035 = vld [vmem:[%s3 + $0x6a0] sm:$0xff]
      %v1036 = vld [vmem:[%s3 + $0x6a8] sm:$0xff]
      %v1037 = vld [vmem:[%s3 + $0x6b0] sm:$0xff]
      %v1038 = vld [vmem:[%s3 + $0x6b8] sm:$0xff]
      %v1039 = vld [vmem:[%s3 + $0x6c0] sm:$0xff]
      %v1040 = vld [vmem:[%s3 + $0x6c8] sm:$0xff]
      %v1041 = vld [vmem:[%s3 + $0x6d0] sm:$0xff]
      %v1042 = vld [vmem:[%s3 + $0x6d8] sm:$0xff]
      %v1043 = vld [vmem:[%s3 + $0x6e0] sm:$0xff]
      %v1044 = vld [vmem:[%s3 + $0x6e8] sm:$0xff]
      %v1045 = vld [vmem:[%s3 + $0x6f0] sm:$0xff]
      %v1046 = vld [vmem:[%s3 + $0x6f8] sm:$0xff]
      %v1047 = vld [vmem:[%s3 + $0x700] sm:$0xff]
      %v1048 = vld [vmem:[%s3 + $0x708] sm:$0xff]
      %v1049 = vld [vmem:[%s3 + $0x710] sm:$0xff]
      %v1050 = vld [vmem:[%s3 + $0x718] sm:$0xff]
      %v1051 = vld [vmem:[%s3 + $0x720] sm:$0xff]
      %v1052 = vld [vmem:[%s3 + $0x728] sm:$0xff]
      %v1053 = vld [vmem:[%s3 + $0x730] sm:$0xff]
      %v1054 = vld [vmem:[%s3 + $0x738] sm:$0xff]
      %v1055 = vld [vmem:[%s3 + $0x740] sm:$0xff]
      %v1056 = vld [vmem:[%s3 + $0x748] sm:$0xff]
      %v1057 = vld [vmem:[%s3 + $0x750] sm:$0xff]
      %v1058 = vld [vmem:[%s3 + $0x758] sm:$0xff]
      %v1059 = vld [vmem:[%s3 + $0x760] sm:$0xff]
      %v1060 = vld [vmem:[%s3 + $0x768] sm:$0xff]
      %v1061 = vld [vmem:[%s3 + $0x770] sm:$0xff]
      %v1062 = vld [vmem:[%s3 + $0x778] sm:$0xff]
      %v1063 = vld [vmem:[%s3 + $0x780] sm:$0xff]
      %v1064 = vld [vmem:[%s3 + $0x788] sm:$0xff]
      %v1065 = vld [vmem:[%s3 + $0x790] sm:$0xff]
      %v1066 = vld [vmem:[%s3 + $0x798] sm:$0xff]
      %v1067 = vld [vmem:[%s3 + $0x7a0] sm:$0xff]
      %v1068 = vld [vmem:[%s3 + $0x7a8] sm:$0xff]
      %v1069 = vld [vmem:[%s3 + $0x7b0] sm:$0xff]
      %v1070 = vld [vmem:[%s3 + $0x7b8] sm:$0xff]
      %v1071 = vld [vmem:[%s3 + $0x7c0] sm:$0xff]
      %v1072 = vld [vmem:[%s3 + $0x7c8] sm:$0xff]
      %v1073 = vld [vmem:[%s3 + $0x7d0] sm:$0xff]
      %v1074 = vld [vmem:[%s3 + $0x7d8] sm:$0xff]
      %v1075 = vld [vmem:[%s3 + $0x7e0] sm:$0xff]
      %v1076 = vld [vmem:[%s3 + $0x7e8] sm:$0xff]
      %v1077 = vld [vmem:[%s3 + $0x7f0] sm:$0xff]
      %v1078 = vld [vmem:[%s3 + $0x7f8] sm:$0xff]
      %v1079 = vld [vmem:[%s3 + $0x800] sm:$0xff]
      %v1080 = vld [vmem:[%s3 + $0x808] sm:$0xff]
      %v1081 = vld [vmem:[%s3 + $0x810] sm:$0xff]
      %v1082 = vld [vmem:[%s3 + $0x818] sm:$0xff]
      %v1083 = vld [vmem:[%s3 + $0x820] sm:$0xff]
      %v1084 = vld [vmem:[%s3 + $0x828] sm:$0xff]
      %v1085 = vld [vmem:[%s3 + $0x830] sm:$0xff]
      %v1086 = vld [vmem:[%s3 + $0x838] sm:$0xff]
      %v1087 = vld [vmem:[%s3 + $0x840] sm:$0xff]
      %v1088 = vld [vmem:[%s3 + $0x848] sm:$0xff]
      %v1089 = vld [vmem:[%s3 + $0x850] sm:$0xff]
      %v1090 = vld [vmem:[%s3 + $0x858] sm:$0xff]
      %v1091 = vld [vmem:[%s3 + $0x860] sm:$0xff]
      %v1092 = vld [vmem:[%s3 + $0x868] sm:$0xff]
      %v1093 = vld [vmem:[%s3 + $0x870] sm:$0xff]
      %v1094 = vld [vmem:[%s3 + $0x878] sm:$0xff]
      %v1095 = vld [vmem:[%s3 + $0x880] sm:$0xff]
      %v1096 = vld [vmem:[%s3 + $0x888] sm:$0xff]
      %v1097 = vld [vmem:[%s3 + $0x890] sm:$0xff]
      %v1098 = vld [vmem:[%s3 + $0x898] sm:$0xff]
      %v1099 = vld [vmem:[%s3 + $0x8a0] sm:$0xff]
      %v1100 = vld [vmem:[%s3 + $0x8a8] sm:$0xff]
      %v1101 = vld [vmem:[%s3 + $0x8b0] sm:$0xff]
      %v1102 = vld [vmem:[%s3 + $0x8b8] sm:$0xff]
      %v1103 = vld [vmem:[%s3 + $0x8c0] sm:$0xff]
      %v1104 = vld [vmem:[%s3 + $0x8c8] sm:$0xff]
      %v1105 = vld [vmem:[%s3 + $0x8d0] sm:$0xff]
      %v1106 = vld [vmem:[%s3 + $0x8d8] sm:$0xff]
      %v1107 = vld [vmem:[%s3 + $0x8e0] sm:$0xff]
      %v1108 = vld [vmem:[%s3 + $0x8e8] sm:$0xff]
      %v1109 = vld [vmem:[%s3 + $0x8f0] sm:$0xff]
      %v1110 = vld [vmem:[%s3 + $0x8f8] sm:$0xff]
      %v1399 = vunpack.c.l.b16 %v823
      %v1400 = vunpack.c.h.b16 %v823
      %v1401 = vunpack.c.l.b16 %v824
      %v1402 = vunpack.c.h.b16 %v824
      %v1403 = vunpack.c.l.b16 %v825
      %v1404 = vunpack.c.h.b16 %v825
      %v1405 = vunpack.c.l.b16 %v826
      %v1406 = vunpack.c.h.b16 %v826
      %v1407 = vunpack.c.l.b16 %v827
      %v1408 = vunpack.c.h.b16 %v827
      %v1409 = vunpack.c.l.b16 %v828
      %v1410 = vunpack.c.h.b16 %v828
      %v1411 = vunpack.c.l.b16 %v829
      %v1412 = vunpack.c.h.b16 %v829
      %v1413 = vunpack.c.l.b16 %v830
      %v1414 = vunpack.c.h.b16 %v830
      %v1415 = vunpack.c.l.b16 %v831
      %v1416 = vunpack.c.h.b16 %v831
      %v1417 = vunpack.c.l.b16 %v832
      %v1418 = vunpack.c.h.b16 %v832
      %v1419 = vunpack.c.l.b16 %v833
      %v1420 = vunpack.c.h.b16 %v833
      %v1421 = vunpack.c.l.b16 %v834
      %v1422 = vunpack.c.h.b16 %v834
      %v1423 = vunpack.c.l.b16 %v835
      %v1424 = vunpack.c.h.b16 %v835
      %v1425 = vunpack.c.l.b16 %v836
      %v1426 = vunpack.c.h.b16 %v836
      %v1427 = vunpack.c.l.b16 %v837
      %v1428 = vunpack.c.h.b16 %v837
      %v1429 = vunpack.c.l.b16 %v838
      %v1430 = vunpack.c.h.b16 %v838
      %v1431 = vunpack.c.l.b16 %v839
      %v1432 = vunpack.c.h.b16 %v839
      %v1433 = vunpack.c.l.b16 %v840
      %v1434 = vunpack.c.h.b16 %v840
      %v1435 = vunpack.c.l.b16 %v841
      %v1436 = vunpack.c.h.b16 %v841
      %v1437 = vunpack.c.l.b16 %v842
      %v1438 = vunpack.c.h.b16 %v842
      %v1439 = vunpack.c.l.b16 %v843
      %v1440 = vunpack.c.h.b16 %v843
      %v1441 = vunpack.c.l.b16 %v844
      %v1442 = vunpack.c.h.b16 %v844
      %v1443 = vunpack.c.l.b16 %v845
      %v1444 = vunpack.c.h.b16 %v845
      %v1445 = vunpack.c.l.b16 %v846
      %v1446 = vunpack.c.h.b16 %v846
      %v1447 = vunpack.c.l.b16 %v847
      %v1448 = vunpack.c.h.b16 %v847
      %v1449 = vunpack.c.l.b16 %v848
      %v1450 = vunpack.c.h.b16 %v848
      %v1451 = vunpack.c.l.b16 %v849
      %v1452 = vunpack.c.h.b16 %v849
      %v1453 = vunpack.c.l.b16 %v850
      %v1454 = vunpack.c.h.b16 %v850
      %v1455 = vunpack.c.l.b16 %v851
      %v1456 = vunpack.c.h.b16 %v851
      %v1457 = vunpack.c.l.b16 %v852
      %v1458 = vunpack.c.h.b16 %v852
      %v1459 = vunpack.c.l.b16 %v853
      %v1460 = vunpack.c.h.b16 %v853
      %v1461 = vunpack.c.l.b16 %v854
      %v1462 = vunpack.c.h.b16 %v854
      %v1463 = vunpack.c.l.b16 %v855
      %v1464 = vunpack.c.h.b16 %v855
      %v1465 = vunpack.c.l.b16 %v856
      %v1466 = vunpack.c.h.b16 %v856
      %v1467 = vunpack.c.l.b16 %v857
      %v1468 = vunpack.c.h.b16 %v857
      %v1469 = vunpack.c.l.b16 %v858
      %v1470 = vunpack.c.h.b16 %v858
      %v1471 = vunpack.c.l.b16 %v859
      %v1472 = vunpack.c.h.b16 %v859
      %v1473 = vunpack.c.l.b16 %v860
      %v1474 = vunpack.c.h.b16 %v860
      %v1475 = vunpack.c.l.b16 %v861
      %v1476 = vunpack.c.h.b16 %v861
      %v1477 = vunpack.c.l.b16 %v862
      %v1478 = vunpack.c.h.b16 %v862
      %v1479 = vunpack.c.l.b16 %v863
      %v1480 = vunpack.c.h.b16 %v863
      %v1481 = vunpack.c.l.b16 %v864
      %v1482 = vunpack.c.h.b16 %v864
      %v1483 = vunpack.c.l.b16 %v865
      %v1484 = vunpack.c.h.b16 %v865
      %v1485 = vunpack.c.l.b16 %v866
      %v1486 = vunpack.c.h.b16 %v866
      %v1487 = vunpack.c.l.b16 %v867
      %v1488 = vunpack.c.h.b16 %v867
      %v1489 = vunpack.c.l.b16 %v868
      %v1490 = vunpack.c.h.b16 %v868
      %v1491 = vunpack.c.l.b16 %v869
      %v1492 = vunpack.c.h.b16 %v869
      %v1493 = vunpack.c.l.b16 %v870
      %v1494 = vunpack.c.h.b16 %v870
      %v1495 = vunpack.c.l.b16 %v871
      %v1496 = vunpack.c.h.b16 %v871
      %v1497 = vunpack.c.l.b16 %v872
      %v1498 = vunpack.c.h.b16 %v872
      %v1499 = vunpack.c.l.b16 %v873
      %v1500 = vunpack.c.h.b16 %v873
      %v1501 = vunpack.c.l.b16 %v874
      %v1502 = vunpack.c.h.b16 %v874
      %v1503 = vunpack.c.l.b16 %v875
      %v1504 = vunpack.c.h.b16 %v875
      %v1505 = vunpack.c.l.b16 %v876
      %v1506 = vunpack.c.h.b16 %v876
      %v1507 = vunpack.c.l.b16 %v877
      %v1508 = vunpack.c.h.b16 %v877
      %v1509 = vunpack.c.l.b16 %v878
      %v1510 = vunpack.c.h.b16 %v878
      %v1511 = vunpack.c.l.b16 %v879
      %v1512 = vunpack.c.h.b16 %v879
      %v1513 = vunpack.c.l.b16 %v880
      %v1514 = vunpack.c.h.b16 %v880
      %v1515 = vunpack.c.l.b16 %v881
      %v1516 = vunpack.c.h.b16 %v881
      %v1517 = vunpack.c.l.b16 %v882
      %v1518 = vunpack.c.h.b16 %v882
      %v1519 = vunpack.c.l.b16 %v883
      %v1520 = vunpack.c.h.b16 %v883
      %v1521 = vunpack.c.l.b16 %v884
      %v1522 = vunpack.c.h.b16 %v884
      %v1523 = vunpack.c.l.b16 %v885
      %v1524 = vunpack.c.h.b16 %v885
      %v1525 = vunpack.c.l.b16 %v886
      %v1526 = vunpack.c.h.b16 %v886
      %v1527 = vunpack.c.l.b16 %v887
      %v1528 = vunpack.c.h.b16 %v887
      %v1529 = vunpack.c.l.b16 %v888
      %v1530 = vunpack.c.h.b16 %v888
      %v1531 = vunpack.c.l.b16 %v889
      %v1532 = vunpack.c.h.b16 %v889
      %v1533 = vunpack.c.l.b16 %v890
      %v1534 = vunpack.c.h.b16 %v890
      %v1535 = vunpack.c.l.b16 %v891
      %v1536 = vunpack.c.h.b16 %v891
      %v1537 = vunpack.c.l.b16 %v892
      %v1538 = vunpack.c.h.b16 %v892
      %v1539 = vunpack.c.l.b16 %v893
      %v1540 = vunpack.c.h.b16 %v893
      %v1541 = vunpack.c.l.b16 %v894
      %v1542 = vunpack.c.h.b16 %v894
      %v1543 = vunpack.c.l.b16 %v895
      %v1544 = vunpack.c.h.b16 %v895
      %v1545 = vunpack.c.l.b16 %v896
      %v1546 = vunpack.c.h.b16 %v896
      %v1547 = vunpack.c.l.b16 %v897
      %v1548 = vunpack.c.h.b16 %v897
      %v1549 = vunpack.c.l.b16 %v898
      %v1550 = vunpack.c.h.b16 %v898
      %v1551 = vunpack.c.l.b16 %v899
      %v1552 = vunpack.c.h.b16 %v899
      %v1553 = vunpack.c.l.b16 %v900
      %v1554 = vunpack.c.h.b16 %v900
      %v1555 = vunpack.c.l.b16 %v901
      %v1556 = vunpack.c.h.b16 %v901
      %v1557 = vunpack.c.l.b16 %v902
      %v1558 = vunpack.c.h.b16 %v902
      %v1559 = vunpack.c.l.b16 %v903
      %v1560 = vunpack.c.h.b16 %v903
      %v1561 = vunpack.c.l.b16 %v904
      %v1562 = vunpack.c.h.b16 %v904
      %v1563 = vunpack.c.l.b16 %v905
      %v1564 = vunpack.c.h.b16 %v905
      %v1565 = vunpack.c.l.b16 %v906
      %v1566 = vunpack.c.h.b16 %v906
      %v1567 = vunpack.c.l.b16 %v907
      %v1568 = vunpack.c.h.b16 %v907
      %v1569 = vunpack.c.l.b16 %v908
      %v1570 = vunpack.c.h.b16 %v908
      %v1571 = vunpack.c.l.b16 %v909
      %v1572 = vunpack.c.h.b16 %v909
      %v1573 = vunpack.c.l.b16 %v910
      %v1574 = vunpack.c.h.b16 %v910
      %v1575 = vunpack.c.l.b16 %v911
      %v1576 = vunpack.c.h.b16 %v911
      %v1577 = vunpack.c.l.b16 %v912
      %v1578 = vunpack.c.h.b16 %v912
      %v1579 = vunpack.c.l.b16 %v913
      %v1580 = vunpack.c.h.b16 %v913
      %v1581 = vunpack.c.l.b16 %v914
      %v1582 = vunpack.c.h.b16 %v914
      %v1583 = vunpack.c.l.b16 %v915
      %v1584 = vunpack.c.h.b16 %v915
      %v1585 = vunpack.c.l.b16 %v916
      %v1586 = vunpack.c.h.b16 %v916
      %v1587 = vunpack.c.l.b16 %v917
      %v1588 = vunpack.c.h.b16 %v917
      %v1589 = vunpack.c.l.b16 %v918
      %v1590 = vunpack.c.h.b16 %v918
      %v1591 = vunpack.c.l.b16 %v919
      %v1592 = vunpack.c.h.b16 %v919
      %v1593 = vunpack.c.l.b16 %v920
      %v1594 = vunpack.c.h.b16 %v920
      %v1595 = vunpack.c.l.b16 %v921
      %v1596 = vunpack.c.h.b16 %v921
      %v1597 = vunpack.c.l.b16 %v922
      %v1598 = vunpack.c.h.b16 %v922
      %v1599 = vunpack.c.l.b16 %v923
      %v1600 = vunpack.c.h.b16 %v923
      %v1601 = vunpack.c.l.b16 %v924
      %v1602 = vunpack.c.h.b16 %v924
      %v1603 = vunpack.c.l.b16 %v925
      %v1604 = vunpack.c.h.b16 %v925
      %v1605 = vunpack.c.l.b16 %v926
      %v1606 = vunpack.c.h.b16 %v926
      %v1607 = vunpack.c.l.b16 %v927
      %v1608 = vunpack.c.h.b16 %v927
      %v1609 = vunpack.c.l.b16 %v928
      %v1610 = vunpack.c.h.b16 %v928
      %v1611 = vunpack.c.l.b16 %v929
      %v1612 = vunpack.c.h.b16 %v929
      %v1613 = vunpack.c.l.b16 %v930
      %v1614 = vunpack.c.h.b16 %v930
      %v1615 = vunpack.c.l.b16 %v931
      %v1616 = vunpack.c.h.b16 %v931
      %v1617 = vunpack.c.l.b16 %v932
      %v1618 = vunpack.c.h.b16 %v932
      %v1619 = vunpack.c.l.b16 %v933
      %v1620 = vunpack.c.h.b16 %v933
      %v1621 = vunpack.c.l.b16 %v934
      %v1622 = vunpack.c.h.b16 %v934
      %v1623 = vunpack.c.l.b16 %v935
      %v1624 = vunpack.c.h.b16 %v935
      %v1625 = vunpack.c.l.b16 %v936
      %v1626 = vunpack.c.h.b16 %v936
      %v1627 = vunpack.c.l.b16 %v937
      %v1628 = vunpack.c.h.b16 %v937
      %v1629 = vunpack.c.l.b16 %v938
      %v1630 = vunpack.c.h.b16 %v938
      %v1631 = vunpack.c.l.b16 %v939
      %v1632 = vunpack.c.h.b16 %v939
      %v1633 = vunpack.c.l.b16 %v940
      %v1634 = vunpack.c.h.b16 %v940
      %v1635 = vunpack.c.l.b16 %v941
      %v1636 = vunpack.c.h.b16 %v941
      %v1637 = vunpack.c.l.b16 %v942
      %v1638 = vunpack.c.h.b16 %v942
      %v1639 = vunpack.c.l.b16 %v943
      %v1640 = vunpack.c.h.b16 %v943
      %v1641 = vunpack.c.l.b16 %v944
      %v1642 = vunpack.c.h.b16 %v944
      %v1643 = vunpack.c.l.b16 %v945
      %v1644 = vunpack.c.h.b16 %v945
      %v1645 = vunpack.c.l.b16 %v946
      %v1646 = vunpack.c.h.b16 %v946
      %v1647 = vunpack.c.l.b16 %v947
      %v1648 = vunpack.c.h.b16 %v947
      %v1649 = vunpack.c.l.b16 %v948
      %v1650 = vunpack.c.h.b16 %v948
      %v1651 = vunpack.c.l.b16 %v949
      %v1652 = vunpack.c.h.b16 %v949
      %v1653 = vunpack.c.l.b16 %v950
      %v1654 = vunpack.c.h.b16 %v950
      %v1655 = vunpack.c.l.b16 %v951
      %v1656 = vunpack.c.h.b16 %v951
      %v1657 = vunpack.c.l.b16 %v952
      %v1658 = vunpack.c.h.b16 %v952
      %v1659 = vunpack.c.l.b16 %v953
      %v1660 = vunpack.c.h.b16 %v953
      %v1661 = vunpack.c.l.b16 %v954
      %v1662 = vunpack.c.h.b16 %v954
      %v1663 = vunpack.c.l.b16 %v955
      %v1664 = vunpack.c.h.b16 %v955
      %v1665 = vunpack.c.l.b16 %v956
      %v1666 = vunpack.c.h.b16 %v956
      %v1667 = vunpack.c.l.b16 %v957
      %v1668 = vunpack.c.h.b16 %v957
      %v1669 = vunpack.c.l.b16 %v958
      %v1670 = vunpack.c.h.b16 %v958
      %v1671 = vunpack.c.l.b16 %v959
      %v1672 = vunpack.c.h.b16 %v959
      %v1673 = vunpack.c.l.b16 %v960
      %v1674 = vunpack.c.h.b16 %v960
      %v1675 = vunpack.c.l.b16 %v961
      %v1676 = vunpack.c.h.b16 %v961
      %v1677 = vunpack.c.l.b16 %v962
      %v1678 = vunpack.c.h.b16 %v962
      %v1679 = vunpack.c.l.b16 %v963
      %v1680 = vunpack.c.h.b16 %v963
      %v1681 = vunpack.c.l.b16 %v964
      %v1682 = vunpack.c.h.b16 %v964
      %v1683 = vunpack.c.l.b16 %v965
      %v1684 = vunpack.c.h.b16 %v965
      %v1685 = vunpack.c.l.b16 %v966
      %v1686 = vunpack.c.h.b16 %v966
      %v1687 = vunpack.c.l.b16 %v967
      %v1688 = vunpack.c.h.b16 %v967
      %v1689 = vunpack.c.l.b16 %v968
      %v1690 = vunpack.c.h.b16 %v968
      %v1691 = vunpack.c.l.b16 %v969
      %v1692 = vunpack.c.h.b16 %v969
      %v1693 = vunpack.c.l.b16 %v970
      %v1694 = vunpack.c.h.b16 %v970
      %v1695 = vunpack.c.l.b16 %v971
      %v1696 = vunpack.c.h.b16 %v971
      %v1697 = vunpack.c.l.b16 %v972
      %v1698 = vunpack.c.h.b16 %v972
      %v1699 = vunpack.c.l.b16 %v973
      %v1700 = vunpack.c.h.b16 %v973
      %v1701 = vunpack.c.l.b16 %v974
      %v1702 = vunpack.c.h.b16 %v974
      %v1703 = vunpack.c.l.b16 %v975
      %v1704 = vunpack.c.h.b16 %v975
      %v1705 = vunpack.c.l.b16 %v976
      %v1706 = vunpack.c.h.b16 %v976
      %v1707 = vunpack.c.l.b16 %v977
      %v1708 = vunpack.c.h.b16 %v977
      %v1709 = vunpack.c.l.b16 %v978
      %v1710 = vunpack.c.h.b16 %v978
      %v1711 = vunpack.c.l.b16 %v979
      %v1712 = vunpack.c.h.b16 %v979
      %v1713 = vunpack.c.l.b16 %v980
      %v1714 = vunpack.c.h.b16 %v980
      %v1715 = vunpack.c.l.b16 %v981
      %v1716 = vunpack.c.h.b16 %v981
      %v1717 = vunpack.c.l.b16 %v982
      %v1718 = vunpack.c.h.b16 %v982
      %v1719 = vunpack.c.l.b16 %v983
      %v1720 = vunpack.c.h.b16 %v983
      %v1721 = vunpack.c.l.b16 %v984
      %v1722 = vunpack.c.h.b16 %v984
      %v1723 = vunpack.c.l.b16 %v985
      %v1724 = vunpack.c.h.b16 %v985
      %v1725 = vunpack.c.l.b16 %v986
      %v1726 = vunpack.c.h.b16 %v986
      %v1727 = vunpack.c.l.b16 %v987
      %v1728 = vunpack.c.h.b16 %v987
      %v1729 = vunpack.c.l.b16 %v988
      %v1730 = vunpack.c.h.b16 %v988
      %v1731 = vunpack.c.l.b16 %v989
      %v1732 = vunpack.c.h.b16 %v989
      %v1733 = vunpack.c.l.b16 %v990
      %v1734 = vunpack.c.h.b16 %v990
      %v1735 = vunpack.c.l.b16 %v991
      %v1736 = vunpack.c.h.b16 %v991
      %v1737 = vunpack.c.l.b16 %v992
      %v1738 = vunpack.c.h.b16 %v992
      %v1739 = vunpack.c.l.b16 %v993
      %v1740 = vunpack.c.h.b16 %v993
      %v1741 = vunpack.c.l.b16 %v994
      %v1742 = vunpack.c.h.b16 %v994
      %v1743 = vunpack.c.l.b16 %v995
      %v1744 = vunpack.c.h.b16 %v995
      %v1745 = vunpack.c.l.b16 %v996
      %v1746 = vunpack.c.h.b16 %v996
      %v1747 = vunpack.c.l.b16 %v997
      %v1748 = vunpack.c.h.b16 %v997
      %v1749 = vunpack.c.l.b16 %v998
      %v1750 = vunpack.c.h.b16 %v998
      %v1751 = vunpack.c.l.b16 %v999
      %v1752 = vunpack.c.h.b16 %v999
      %v1753 = vunpack.c.l.b16 %v1000
      %v1754 = vunpack.c.h.b16 %v1000
      %v1755 = vunpack.c.l.b16 %v1001
      %v1756 = vunpack.c.h.b16 %v1001
      %v1757 = vunpack.c.l.b16 %v1002
      %v1758 = vunpack.c.h.b16 %v1002
      %v1759 = vunpack.c.l.b16 %v1003
      %v1760 = vunpack.c.h.b16 %v1003
      %v1761 = vunpack.c.l.b16 %v1004
      %v1762 = vunpack.c.h.b16 %v1004
      %v1763 = vunpack.c.l.b16 %v1005
      %v1764 = vunpack.c.h.b16 %v1005
      %v1765 = vunpack.c.l.b16 %v1006
      %v1766 = vunpack.c.h.b16 %v1006
      %v1767 = vunpack.c.l.b16 %v1007
      %v1768 = vunpack.c.h.b16 %v1007
      %v1769 = vunpack.c.l.b16 %v1008
      %v1770 = vunpack.c.h.b16 %v1008
      %v1771 = vunpack.c.l.b16 %v1009
      %v1772 = vunpack.c.h.b16 %v1009
      %v1773 = vunpack.c.l.b16 %v1010
      %v1774 = vunpack.c.h.b16 %v1010
      %v1775 = vunpack.c.l.b16 %v1011
      %v1776 = vunpack.c.h.b16 %v1011
      %v1777 = vunpack.c.l.b16 %v1012
      %v1778 = vunpack.c.h.b16 %v1012
      %v1779 = vunpack.c.l.b16 %v1013
      %v1780 = vunpack.c.h.b16 %v1013
      %v1781 = vunpack.c.l.b16 %v1014
      %v1782 = vunpack.c.h.b16 %v1014
      %v1783 = vunpack.c.l.b16 %v1015
      %v1784 = vunpack.c.h.b16 %v1015
      %v1785 = vunpack.c.l.b16 %v1016
      %v1786 = vunpack.c.h.b16 %v1016
      %v1787 = vunpack.c.l.b16 %v1017
      %v1788 = vunpack.c.h.b16 %v1017
      %v1789 = vunpack.c.l.b16 %v1018
      %v1790 = vunpack.c.h.b16 %v1018
      %v1791 = vunpack.c.l.b16 %v1019
      %v1792 = vunpack.c.h.b16 %v1019
      %v1793 = vunpack.c.l.b16 %v1020
      %v1794 = vunpack.c.h.b16 %v1020
      %v1795 = vunpack.c.l.b16 %v1021
      %v1796 = vunpack.c.h.b16 %v1021
      %v1797 = vunpack.c.l.b16 %v1022
      %v1798 = vunpack.c.h.b16 %v1022
      %v1799 = vunpack.c.l.b16 %v1023
      %v1800 = vunpack.c.h.b16 %v1023
      %v1801 = vunpack.c.l.b16 %v1024
      %v1802 = vunpack.c.h.b16 %v1024
      %v1803 = vunpack.c.l.b16 %v1025
      %v1804 = vunpack.c.h.b16 %v1025
      %v1805 = vunpack.c.l.b16 %v1026
      %v1806 = vunpack.c.h.b16 %v1026
      %v1807 = vunpack.c.l.b16 %v1027
      %v1808 = vunpack.c.h.b16 %v1027
      %v1809 = vunpack.c.l.b16 %v1028
      %v1810 = vunpack.c.h.b16 %v1028
      %v1811 = vunpack.c.l.b16 %v1029
      %v1812 = vunpack.c.h.b16 %v1029
      %v1813 = vunpack.c.l.b16 %v1030
      %v1814 = vunpack.c.h.b16 %v1030
      %v1815 = vunpack.c.l.b16 %v1031
      %v1816 = vunpack.c.h.b16 %v1031
      %v1817 = vunpack.c.l.b16 %v1032
      %v1818 = vunpack.c.h.b16 %v1032
      %v1819 = vunpack.c.l.b16 %v1033
      %v1820 = vunpack.c.h.b16 %v1033
      %v1821 = vunpack.c.l.b16 %v1034
      %v1822 = vunpack.c.h.b16 %v1034
      %v1823 = vunpack.c.l.b16 %v1035
      %v1824 = vunpack.c.h.b16 %v1035
      %v1825 = vunpack.c.l.b16 %v1036
      %v1826 = vunpack.c.h.b16 %v1036
      %v1827 = vunpack.c.l.b16 %v1037
      %v1828 = vunpack.c.h.b16 %v1037
      %v1829 = vunpack.c.l.b16 %v1038
      %v1830 = vunpack.c.h.b16 %v1038
      %v1831 = vunpack.c.l.b16 %v1039
      %v1832 = vunpack.c.h.b16 %v1039
      %v1833 = vunpack.c.l.b16 %v1040
      %v1834 = vunpack.c.h.b16 %v1040
      %v1835 = vunpack.c.l.b16 %v1041
      %v1836 = vunpack.c.h.b16 %v1041
      %v1837 = vunpack.c.l.b16 %v1042
      %v1838 = vunpack.c.h.b16 %v1042
      %v1839 = vunpack.c.l.b16 %v1043
      %v1840 = vunpack.c.h.b16 %v1043
      %v1841 = vunpack.c.l.b16 %v1044
      %v1842 = vunpack.c.h.b16 %v1044
      %v1843 = vunpack.c.l.b16 %v1045
      %v1844 = vunpack.c.h.b16 %v1045
      %v1845 = vunpack.c.l.b16 %v1046
      %v1846 = vunpack.c.h.b16 %v1046
      %v1847 = vunpack.c.l.b16 %v1047
      %v1848 = vunpack.c.h.b16 %v1047
      %v1849 = vunpack.c.l.b16 %v1048
      %v1850 = vunpack.c.h.b16 %v1048
      %v1851 = vunpack.c.l.b16 %v1049
      %v1852 = vunpack.c.h.b16 %v1049
      %v1853 = vunpack.c.l.b16 %v1050
      %v1854 = vunpack.c.h.b16 %v1050
      %v1855 = vunpack.c.l.b16 %v1051
      %v1856 = vunpack.c.h.b16 %v1051
      %v1857 = vunpack.c.l.b16 %v1052
      %v1858 = vunpack.c.h.b16 %v1052
      %v1859 = vunpack.c.l.b16 %v1053
      %v1860 = vunpack.c.h.b16 %v1053
      %v1861 = vunpack.c.l.b16 %v1054
      %v1862 = vunpack.c.h.b16 %v1054
      %v1863 = vunpack.c.l.b16 %v1055
      %v1864 = vunpack.c.h.b16 %v1055
      %v1865 = vunpack.c.l.b16 %v1056
      %v1866 = vunpack.c.h.b16 %v1056
      %v1867 = vunpack.c.l.b16 %v1057
      %v1868 = vunpack.c.h.b16 %v1057
      %v1869 = vunpack.c.l.b16 %v1058
      %v1870 = vunpack.c.h.b16 %v1058
      %v1871 = vunpack.c.l.b16 %v1059
      %v1872 = vunpack.c.h.b16 %v1059
      %v1873 = vunpack.c.l.b16 %v1060
      %v1874 = vunpack.c.h.b16 %v1060
      %v1875 = vunpack.c.l.b16 %v1061
      %v1876 = vunpack.c.h.b16 %v1061
      %v1877 = vunpack.c.l.b16 %v1062
      %v1878 = vunpack.c.h.b16 %v1062
      %v1879 = vunpack.c.l.b16 %v1063
      %v1880 = vunpack.c.h.b16 %v1063
      %v1881 = vunpack.c.l.b16 %v1064
      %v1882 = vunpack.c.h.b16 %v1064
      %v1883 = vunpack.c.l.b16 %v1065
      %v1884 = vunpack.c.h.b16 %v1065
      %v1885 = vunpack.c.l.b16 %v1066
      %v1886 = vunpack.c.h.b16 %v1066
      %v1887 = vunpack.c.l.b16 %v1067
      %v1888 = vunpack.c.h.b16 %v1067
      %v1889 = vunpack.c.l.b16 %v1068
      %v1890 = vunpack.c.h.b16 %v1068
      %v1891 = vunpack.c.l.b16 %v1069
      %v1892 = vunpack.c.h.b16 %v1069
      %v1893 = vunpack.c.l.b16 %v1070
      %v1894 = vunpack.c.h.b16 %v1070
      %v1895 = vunpack.c.l.b16 %v1071
      %v1896 = vunpack.c.h.b16 %v1071
      %v1897 = vunpack.c.l.b16 %v1072
      %v1898 = vunpack.c.h.b16 %v1072
      %v1899 = vunpack.c.l.b16 %v1073
      %v1900 = vunpack.c.h.b16 %v1073
      %v1901 = vunpack.c.l.b16 %v1074
      %v1902 = vunpack.c.h.b16 %v1074
      %v1903 = vunpack.c.l.b16 %v1075
      %v1904 = vunpack.c.h.b16 %v1075
      %v1905 = vunpack.c.l.b16 %v1076
      %v1906 = vunpack.c.h.b16 %v1076
      %v1907 = vunpack.c.l.b16 %v1077
      %v1908 = vunpack.c.h.b16 %v1077
      %v1909 = vunpack.c.l.b16 %v1078
      %v1910 = vunpack.c.h.b16 %v1078
      %v1911 = vunpack.c.l.b16 %v1079
      %v1912 = vunpack.c.h.b16 %v1079
      %v1913 = vunpack.c.l.b16 %v1080
      %v1914 = vunpack.c.h.b16 %v1080
      %v1915 = vunpack.c.l.b16 %v1081
      %v1916 = vunpack.c.h.b16 %v1081
      %v1917 = vunpack.c.l.b16 %v1082
      %v1918 = vunpack.c.h.b16 %v1082
      %v1919 = vunpack.c.l.b16 %v1083
      %v1920 = vunpack.c.h.b16 %v1083
      %v1921 = vunpack.c.l.b16 %v1084
      %v1922 = vunpack.c.h.b16 %v1084
      %v1923 = vunpack.c.l.b16 %v1085
      %v1924 = vunpack.c.h.b16 %v1085
      %v1925 = vunpack.c.l.b16 %v1086
      %v1926 = vunpack.c.h.b16 %v1086
      %v1927 = vunpack.c.l.b16 %v1087
      %v1928 = vunpack.c.h.b16 %v1087
      %v1929 = vunpack.c.l.b16 %v1088
      %v1930 = vunpack.c.h.b16 %v1088
      %v1931 = vunpack.c.l.b16 %v1089
      %v1932 = vunpack.c.h.b16 %v1089
      %v1933 = vunpack.c.l.b16 %v1090
      %v1934 = vunpack.c.h.b16 %v1090
      %v1935 = vunpack.c.l.b16 %v1091
      %v1936 = vunpack.c.h.b16 %v1091
      %v1937 = vunpack.c.l.b16 %v1092
      %v1938 = vunpack.c.h.b16 %v1092
      %v1939 = vunpack.c.l.b16 %v1093
      %v1940 = vunpack.c.h.b16 %v1093
      %v1941 = vunpack.c.l.b16 %v1094
      %v1942 = vunpack.c.h.b16 %v1094
      %v1943 = vunpack.c.l.b16 %v1095
      %v1944 = vunpack.c.h.b16 %v1095
      %v1945 = vunpack.c.l.b16 %v1096
      %v1946 = vunpack.c.h.b16 %v1096
      %v1947 = vunpack.c.l.b16 %v1097
      %v1948 = vunpack.c.h.b16 %v1097
      %v1949 = vunpack.c.l.b16 %v1098
      %v1950 = vunpack.c.h.b16 %v1098
      %v1951 = vunpack.c.l.b16 %v1099
      %v1952 = vunpack.c.h.b16 %v1099
      %v1953 = vunpack.c.l.b16 %v1100
      %v1954 = vunpack.c.h.b16 %v1100
      %v1955 = vunpack.c.l.b16 %v1101
      %v1956 = vunpack.c.h.b16 %v1101
      %v1957 = vunpack.c.l.b16 %v1102
      %v1958 = vunpack.c.h.b16 %v1102
      %v1959 = vunpack.c.l.b16 %v1103
      %v1960 = vunpack.c.h.b16 %v1103
      %v1961 = vunpack.c.l.b16 %v1104
      %v1962 = vunpack.c.h.b16 %v1104
      %v1963 = vunpack.c.l.b16 %v1105
      %v1964 = vunpack.c.h.b16 %v1105
      %v1965 = vunpack.c.l.b16 %v1106
      %v1966 = vunpack.c.h.b16 %v1106
      %v1967 = vunpack.c.l.b16 %v1107
      %v1968 = vunpack.c.h.b16 %v1107
      %v1969 = vunpack.c.l.b16 %v1108
      %v1970 = vunpack.c.h.b16 %v1108
      %v1971 = vunpack.c.l.b16 %v1109
      %v1972 = vunpack.c.h.b16 %v1109
      %v1973 = vunpack.c.l.b16 %v1110
      %v1974 = vunpack.c.h.b16 %v1110
      %v1975 = vpack.c.b16 %v1417, %v1399
      %v1976 = vpack.c.b16 %v1418, %v1400
      %v1977 = vpack.c.b16 %v1419, %v1401
      %v1978 = vpack.c.b16 %v1420, %v1402
      %v1979 = vpack.c.b16 %v1421, %v1403
      %v1980 = vpack.c.b16 %v1422, %v1404
      %v1981 = vpack.c.b16 %v1423, %v1405
      %v1982 = vpack.c.b16 %v1424, %v1406
      %v1983 = vpack.c.b16 %v1425, %v1407
      %v1984 = vpack.c.b16 %v1426, %v1408
      %v1985 = vpack.c.b16 %v1427, %v1409
      %v1986 = vpack.c.b16 %v1428, %v1410
      %v1987 = vpack.c.b16 %v1429, %v1411
      %v1988 = vpack.c.b16 %v1430, %v1412
      %v1989 = vpack.c.b16 %v1431, %v1413
      %v1990 = vpack.c.b16 %v1432, %v1414
      %v1991 = vpack.c.b16 %v1433, %v1415
      %v1992 = vpack.c.b16 %v1434, %v1416
      %v1993 = vpack.c.b16 %v1453, %v1435
      %v1994 = vpack.c.b16 %v1454, %v1436
      %v1995 = vpack.c.b16 %v1455, %v1437
      %v1996 = vpack.c.b16 %v1456, %v1438
      %v1997 = vpack.c.b16 %v1457, %v1439
      %v1998 = vpack.c.b16 %v1458, %v1440
      %v1999 = vpack.c.b16 %v1459, %v1441
      %v2000 = vpack.c.b16 %v1460, %v1442
      %v2001 = vpack.c.b16 %v1461, %v1443
      %v2002 = vpack.c.b16 %v1462, %v1444
      %v2003 = vpack.c.b16 %v1463, %v1445
      %v2004 = vpack.c.b16 %v1464, %v1446
      %v2005 = vpack.c.b16 %v1465, %v1447
      %v2006 = vpack.c.b16 %v1466, %v1448
      %v2007 = vpack.c.b16 %v1467, %v1449
      %v2008 = vpack.c.b16 %v1468, %v1450
      %v2009 = vpack.c.b16 %v1469, %v1451
      %v2010 = vpack.c.b16 %v1470, %v1452
      %v2011 = vpack.c.b16 %v1489, %v1471
      %v2012 = vpack.c.b16 %v1490, %v1472
      %v2013 = vpack.c.b16 %v1491, %v1473
      %v2014 = vpack.c.b16 %v1492, %v1474
      %v2015 = vpack.c.b16 %v1493, %v1475
      %v2016 = vpack.c.b16 %v1494, %v1476
      %v2017 = vpack.c.b16 %v1495, %v1477
      %v2018 = vpack.c.b16 %v1496, %v1478
      %v2019 = vpack.c.b16 %v1497, %v1479
      %v2020 = vpack.c.b16 %v1498, %v1480
      %v2021 = vpack.c.b16 %v1499, %v1481
      %v2022 = vpack.c.b16 %v1500, %v1482
      %v2023 = vpack.c.b16 %v1501, %v1483
      %v2024 = vpack.c.b16 %v1502, %v1484
      %v2025 = vpack.c.b16 %v1503, %v1485
      %v2026 = vpack.c.b16 %v1504, %v1486
      %v2027 = vpack.c.b16 %v1505, %v1487
      %v2028 = vpack.c.b16 %v1506, %v1488
      %v2029 = vpack.c.b16 %v1525, %v1507
      %v2030 = vpack.c.b16 %v1526, %v1508
      %v2031 = vpack.c.b16 %v1527, %v1509
      %v2032 = vpack.c.b16 %v1528, %v1510
      %v2033 = vpack.c.b16 %v1529, %v1511
      %v2034 = vpack.c.b16 %v1530, %v1512
      %v2035 = vpack.c.b16 %v1531, %v1513
      %v2036 = vpack.c.b16 %v1532, %v1514
      %v2037 = vpack.c.b16 %v1533, %v1515
      %v2038 = vpack.c.b16 %v1534, %v1516
      %v2039 = vpack.c.b16 %v1535, %v1517
      %v2040 = vpack.c.b16 %v1536, %v1518
      %v2041 = vpack.c.b16 %v1537, %v1519
      %v2042 = vpack.c.b16 %v1538, %v1520
      %v2043 = vpack.c.b16 %v1539, %v1521
      %v2044 = vpack.c.b16 %v1540, %v1522
      %v2045 = vpack.c.b16 %v1541, %v1523
      %v2046 = vpack.c.b16 %v1542, %v1524
      %v2047 = vpack.c.b16 %v1561, %v1543
      %v2048 = vpack.c.b16 %v1562, %v1544
      %v2049 = vpack.c.b16 %v1563, %v1545
      %v2050 = vpack.c.b16 %v1564, %v1546
      %v2051 = vpack.c.b16 %v1565, %v1547
      %v2052 = vpack.c.b16 %v1566, %v1548
      %v2053 = vpack.c.b16 %v1567, %v1549
      %v2054 = vpack.c.b16 %v1568, %v1550
      %v2055 = vpack.c.b16 %v1569, %v1551
      %v2056 = vpack.c.b16 %v1570, %v1552
      %v2057 = vpack.c.b16 %v1571, %v1553
      %v2058 = vpack.c.b16 %v1572, %v1554
      %v2059 = vpack.c.b16 %v1573, %v1555
      %v2060 = vpack.c.b16 %v1574, %v1556
      %v2061 = vpack.c.b16 %v1575, %v1557
      %v2062 = vpack.c.b16 %v1576, %v1558
      %v2063 = vpack.c.b16 %v1577, %v1559
      %v2064 = vpack.c.b16 %v1578, %v1560
      %v2065 = vpack.c.b16 %v1597, %v1579
      %v2066 = vpack.c.b16 %v1598, %v1580
      %v2067 = vpack.c.b16 %v1599, %v1581
      %v2068 = vpack.c.b16 %v1600, %v1582
      %v2069 = vpack.c.b16 %v1601, %v1583
      %v2070 = vpack.c.b16 %v1602, %v1584
      %v2071 = vpack.c.b16 %v1603, %v1585
      %v2072 = vpack.c.b16 %v1604, %v1586
      %v2073 = vpack.c.b16 %v1605, %v1587
      %v2074 = vpack.c.b16 %v1606, %v1588
      %v2075 = vpack.c.b16 %v1607, %v1589
      %v2076 = vpack.c.b16 %v1608, %v1590
      %v2077 = vpack.c.b16 %v1609, %v1591
      %v2078 = vpack.c.b16 %v1610, %v1592
      %v2079 = vpack.c.b16 %v1611, %v1593
      %v2080 = vpack.c.b16 %v1612, %v1594
      %v2081 = vpack.c.b16 %v1613, %v1595
      %v2082 = vpack.c.b16 %v1614, %v1596
      %v2083 = vpack.c.b16 %v1633, %v1615
      %v2084 = vpack.c.b16 %v1634, %v1616
      %v2085 = vpack.c.b16 %v1635, %v1617
      %v2086 = vpack.c.b16 %v1636, %v1618
      %v2087 = vpack.c.b16 %v1637, %v1619
      %v2088 = vpack.c.b16 %v1638, %v1620
      %v2089 = vpack.c.b16 %v1639, %v1621
      %v2090 = vpack.c.b16 %v1640, %v1622
      %v2091 = vpack.c.b16 %v1641, %v1623
      %v2092 = vpack.c.b16 %v1642, %v1624
      %v2093 = vpack.c.b16 %v1643, %v1625
      %v2094 = vpack.c.b16 %v1644, %v1626
      %v2095 = vpack.c.b16 %v1645, %v1627
      %v2096 = vpack.c.b16 %v1646, %v1628
      %v2097 = vpack.c.b16 %v1647, %v1629
      %v2098 = vpack.c.b16 %v1648, %v1630
      %v2099 = vpack.c.b16 %v1649, %v1631
      %v2100 = vpack.c.b16 %v1650, %v1632
      %v2101 = vpack.c.b16 %v1669, %v1651
      %v2102 = vpack.c.b16 %v1670, %v1652
      %v2103 = vpack.c.b16 %v1671, %v1653
      %v2104 = vpack.c.b16 %v1672, %v1654
      %v2105 = vpack.c.b16 %v1673, %v1655
      %v2106 = vpack.c.b16 %v1674, %v1656
      %v2107 = vpack.c.b16 %v1675, %v1657
      %v2108 = vpack.c.b16 %v1676, %v1658
      %v2109 = vpack.c.b16 %v1677, %v1659
      %v2110 = vpack.c.b16 %v1678, %v1660
      %v2111 = vpack.c.b16 %v1679, %v1661
      %v2112 = vpack.c.b16 %v1680, %v1662
      %v2113 = vpack.c.b16 %v1681, %v1663
      %v2114 = vpack.c.b16 %v1682, %v1664
      %v2115 = vpack.c.b16 %v1683, %v1665
      %v2116 = vpack.c.b16 %v1684, %v1666
      %v2117 = vpack.c.b16 %v1685, %v1667
      %v2118 = vpack.c.b16 %v1686, %v1668
      %v2119 = vpack.c.b16 %v1705, %v1687
      %v2120 = vpack.c.b16 %v1706, %v1688
      %v2121 = vpack.c.b16 %v1707, %v1689
      %v2122 = vpack.c.b16 %v1708, %v1690
      %v2123 = vpack.c.b16 %v1709, %v1691
      %v2124 = vpack.c.b16 %v1710, %v1692
      %v2125 = vpack.c.b16 %v1711, %v1693
      %v2126 = vpack.c.b16 %v1712, %v1694
      %v2127 = vpack.c.b16 %v1713, %v1695
      %v2128 = vpack.c.b16 %v1714, %v1696
      %v2129 = vpack.c.b16 %v1715, %v1697
      %v2130 = vpack.c.b16 %v1716, %v1698
      %v2131 = vpack.c.b16 %v1717, %v1699
      %v2132 = vpack.c.b16 %v1718, %v1700
      %v2133 = vpack.c.b16 %v1719, %v1701
      %v2134 = vpack.c.b16 %v1720, %v1702
      %v2135 = vpack.c.b16 %v1721, %v1703
      %v2136 = vpack.c.b16 %v1722, %v1704
      %v2137 = vpack.c.b16 %v1741, %v1723
      %v2138 = vpack.c.b16 %v1742, %v1724
      %v2139 = vpack.c.b16 %v1743, %v1725
      %v2140 = vpack.c.b16 %v1744, %v1726
      %v2141 = vpack.c.b16 %v1745, %v1727
      %v2142 = vpack.c.b16 %v1746, %v1728
      %v2143 = vpack.c.b16 %v1747, %v1729
      %v2144 = vpack.c.b16 %v1748, %v1730
      %v2145 = vpack.c.b16 %v1749, %v1731
      %v2146 = vpack.c.b16 %v1750, %v1732
      %v2147 = vpack.c.b16 %v1751, %v1733
      %v2148 = vpack.c.b16 %v1752, %v1734
      %v2149 = vpack.c.b16 %v1753, %v1735
      %v2150 = vpack.c.b16 %v1754, %v1736
      %v2151 = vpack.c.b16 %v1755, %v1737
      %v2152 = vpack.c.b16 %v1756, %v1738
      %v2153 = vpack.c.b16 %v1757, %v1739
      %v2154 = vpack.c.b16 %v1758, %v1740
      %v2155 = vpack.c.b16 %v1777, %v1759
      %v2156 = vpack.c.b16 %v1778, %v1760
      %v2157 = vpack.c.b16 %v1779, %v1761
      %v2158 = vpack.c.b16 %v1780, %v1762
      %v2159 = vpack.c.b16 %v1781, %v1763
      %v2160 = vpack.c.b16 %v1782, %v1764
      %v2161 = vpack.c.b16 %v1783, %v1765
      %v2162 = vpack.c.b16 %v1784, %v1766
      %v2163 = vpack.c.b16 %v1785, %v1767
      %v2164 = vpack.c.b16 %v1786, %v1768
      %v2165 = vpack.c.b16 %v1787, %v1769
      %v2166 = vpack.c.b16 %v1788, %v1770
      %v2167 = vpack.c.b16 %v1789, %v1771
      %v2168 = vpack.c.b16 %v1790, %v1772
      %v2169 = vpack.c.b16 %v1791, %v1773
      %v2170 = vpack.c.b16 %v1792, %v1774
      %v2171 = vpack.c.b16 %v1793, %v1775
      %v2172 = vpack.c.b16 %v1794, %v1776
      %v2173 = vpack.c.b16 %v1813, %v1795
      %v2174 = vpack.c.b16 %v1814, %v1796
      %v2175 = vpack.c.b16 %v1815, %v1797
      %v2176 = vpack.c.b16 %v1816, %v1798
      %v2177 = vpack.c.b16 %v1817, %v1799
      %v2178 = vpack.c.b16 %v1818, %v1800
      %v2179 = vpack.c.b16 %v1819, %v1801
      %v2180 = vpack.c.b16 %v1820, %v1802
      %v2181 = vpack.c.b16 %v1821, %v1803
      %v2182 = vpack.c.b16 %v1822, %v1804
      %v2183 = vpack.c.b16 %v1823, %v1805
      %v2184 = vpack.c.b16 %v1824, %v1806
      %v2185 = vpack.c.b16 %v1825, %v1807
      %v2186 = vpack.c.b16 %v1826, %v1808
      %v2187 = vpack.c.b16 %v1827, %v1809
      %v2188 = vpack.c.b16 %v1828, %v1810
      %v2189 = vpack.c.b16 %v1829, %v1811
      %v2190 = vpack.c.b16 %v1830, %v1812
      %v2191 = vpack.c.b16 %v1849, %v1831
      %v2192 = vpack.c.b16 %v1850, %v1832
      %v2193 = vpack.c.b16 %v1851, %v1833
      %v2194 = vpack.c.b16 %v1852, %v1834
      %v2195 = vpack.c.b16 %v1853, %v1835
      %v2196 = vpack.c.b16 %v1854, %v1836
      %v2197 = vpack.c.b16 %v1855, %v1837
      %v2198 = vpack.c.b16 %v1856, %v1838
      %v2199 = vpack.c.b16 %v1857, %v1839
      %v2200 = vpack.c.b16 %v1858, %v1840
      %v2201 = vpack.c.b16 %v1859, %v1841
      %v2202 = vpack.c.b16 %v1860, %v1842
      %v2203 = vpack.c.b16 %v1861, %v1843
      %v2204 = vpack.c.b16 %v1862, %v1844
      %v2205 = vpack.c.b16 %v1863, %v1845
      %v2206 = vpack.c.b16 %v1864, %v1846
      %v2207 = vpack.c.b16 %v1865, %v1847
      %v2208 = vpack.c.b16 %v1866, %v1848
      %v2209 = vpack.c.b16 %v1885, %v1867
      %v2210 = vpack.c.b16 %v1886, %v1868
      %v2211 = vpack.c.b16 %v1887, %v1869
      %v2212 = vpack.c.b16 %v1888, %v1870
      %v2213 = vpack.c.b16 %v1889, %v1871
      %v2214 = vpack.c.b16 %v1890, %v1872
      %v2215 = vpack.c.b16 %v1891, %v1873
      %v2216 = vpack.c.b16 %v1892, %v1874
      %v2217 = vpack.c.b16 %v1893, %v1875
      %v2218 = vpack.c.b16 %v1894, %v1876
      %v2219 = vpack.c.b16 %v1895, %v1877
      %v2220 = vpack.c.b16 %v1896, %v1878
      %v2221 = vpack.c.b16 %v1897, %v1879
      %v2222 = vpack.c.b16 %v1898, %v1880
      %v2223 = vpack.c.b16 %v1899, %v1881
      %v2224 = vpack.c.b16 %v1900, %v1882
      %v2225 = vpack.c.b16 %v1901, %v1883
      %v2226 = vpack.c.b16 %v1902, %v1884
      %v2227 = vpack.c.b16 %v1921, %v1903
      %v2228 = vpack.c.b16 %v1922, %v1904
      %v2229 = vpack.c.b16 %v1923, %v1905
      %v2230 = vpack.c.b16 %v1924, %v1906
      %v2231 = vpack.c.b16 %v1925, %v1907
      %v2232 = vpack.c.b16 %v1926, %v1908
      %v2233 = vpack.c.b16 %v1927, %v1909
      %v2234 = vpack.c.b16 %v1928, %v1910
      %v2235 = vpack.c.b16 %v1929, %v1911
      %v2236 = vpack.c.b16 %v1930, %v1912
      %v2237 = vpack.c.b16 %v1931, %v1913
      %v2238 = vpack.c.b16 %v1932, %v1914
      %v2239 = vpack.c.b16 %v1933, %v1915
      %v2240 = vpack.c.b16 %v1934, %v1916
      %v2241 = vpack.c.b16 %v1935, %v1917
      %v2242 = vpack.c.b16 %v1936, %v1918
      %v2243 = vpack.c.b16 %v1937, %v1919
      %v2244 = vpack.c.b16 %v1938, %v1920
      %v2245 = vpack.c.b16 %v1957, %v1939
      %v2246 = vpack.c.b16 %v1958, %v1940
      %v2247 = vpack.c.b16 %v1959, %v1941
      %v2248 = vpack.c.b16 %v1960, %v1942
      %v2249 = vpack.c.b16 %v1961, %v1943
      %v2250 = vpack.c.b16 %v1962, %v1944
      %v2251 = vpack.c.b16 %v1963, %v1945
      %v2252 = vpack.c.b16 %v1964, %v1946
      %v2253 = vpack.c.b16 %v1965, %v1947
      %v2254 = vpack.c.b16 %v1966, %v1948
      %v2255 = vpack.c.b16 %v1967, %v1949
      %v2256 = vpack.c.b16 %v1968, %v1950
      %v2257 = vpack.c.b16 %v1969, %v1951
      %v2258 = vpack.c.b16 %v1970, %v1952
      %v2259 = vpack.c.b16 %v1971, %v1953
      %v2260 = vpack.c.b16 %v1972, %v1954
      %v2261 = vpack.c.b16 %v1973, %v1955
      %v2262 = vpack.c.b16 %v1974, %v1956
      %2551 = vmatprep.subr.bf16.mxu0 %v2102
      %2552 = vmatpush1.bf16.msra.mxu0 %v2101
      %2553 = vmatprep.subr.bf16.mxu0 %v2084
      %2554 = vmatpush1.bf16.msra.mxu0 %v2083
      %2555 = vmatprep.subr.bf16.mxu0 %v2066
      %2556 = vmatpush1.bf16.msra.mxu0 %v2065
      %2557 = vmatprep.subr.bf16.mxu0 %v2048
      %2558 = vmatpush1.bf16.msra.mxu0 %v2047
      %2559 = vmatprep.subr.bf16.mxu0 %v2030
      %2560 = vmatpush1.bf16.msra.mxu0 %v2029
      %2561 = vmatprep.subr.bf16.mxu0 %v2012
      %2562 = vmatpush1.bf16.msra.mxu0 %v2011
      %2563 = vmatprep.subr.bf16.mxu0 %v1994
      %2564 = vmatpush1.bf16.msra.mxu0 %v1993
      %2565 = vmatprep.subr.bf16.mxu0 %v1976
      %2566 = vmatpush1.bf16.msra.mxu0 %v1975
      %2567 = vmatprep.subr.bf16.mxu0 %v2246
      %2568 = vmatpush2.bf16.msra.mxu0 %v2245
      %2569 = vmatprep.subr.bf16.mxu0 %v2228
      %2570 = vmatpush2.bf16.msra.mxu0 %v2227
      %2571 = vmatprep.subr.bf16.mxu0 %v2210
      %2572 = vmatpush2.bf16.msra.mxu0 %v2209
      %2573 = vmatprep.subr.bf16.mxu0 %v2192
      %2574 = vmatpush2.bf16.msra.mxu0 %v2191
      %2575 = vmatprep.subr.bf16.mxu0 %v2174
      %2576 = vmatpush2.bf16.msra.mxu0 %v2173
      %2577 = vmatprep.subr.bf16.mxu0 %v2156
      %2578 = vmatpush2.bf16.msra.mxu0 %v2155
      %2579 = vmatprep.subr.bf16.mxu0 %v2138
      %2580 = vmatpush2.bf16.msra.mxu0 %v2137
      %2581 = vmatprep.subr.bf16.mxu0 %v2120
      %2582 = vmatpush2.bf16.msra.mxu0 %v2119
      %2583 = vmatprep.mubr.bf16.mxu0 %v822
      %2584 = vmatmul.mubr.bf16.gmra.mxu0 %v821
      %v2585 = vpop.f32.mrf.mxu0
      %v2586 = vadd.f32 0.0, %v2585
      %v2587 = vpop.f32.mrf.mxu0
      %v2588 = vadd.f32 0.0, %v2587
      %v2589 = vpop.f32.mrf.mxu0
      %v2590 = vpop.f32.mrf.mxu0
      %2591 = vdwg.mxu0
      %2592 = vmatprep.subr.bf16.mxu0 %v2104
      %2593 = vmatpush1.bf16.msra.mxu0 %v2103
      %2594 = vmatprep.subr.bf16.mxu0 %v2086
      %2595 = vmatpush1.bf16.msra.mxu0 %v2085
      %2596 = vmatprep.subr.bf16.mxu0 %v2068
      %2597 = vmatpush1.bf16.msra.mxu0 %v2067
      %2598 = vmatprep.subr.bf16.mxu0 %v2050
      %2599 = vmatpush1.bf16.msra.mxu0 %v2049
      %2600 = vmatprep.subr.bf16.mxu0 %v2032
      %2601 = vmatpush1.bf16.msra.mxu0 %v2031
      %2602 = vmatprep.subr.bf16.mxu0 %v2014
      %2603 = vmatpush1.bf16.msra.mxu0 %v2013
      %2604 = vmatprep.subr.bf16.mxu0 %v1996
      %2605 = vmatpush1.bf16.msra.mxu0 %v1995
      %2606 = vmatprep.subr.bf16.mxu0 %v1978
      %2607 = vmatpush1.bf16.msra.mxu0 %v1977
      %2608 = vmatprep.subr.bf16.mxu0 %v2248
      %2609 = vmatpush2.bf16.msra.mxu0 %v2247
      %2610 = vmatprep.subr.bf16.mxu0 %v2230
      %2611 = vmatpush2.bf16.msra.mxu0 %v2229
      %2612 = vmatprep.subr.bf16.mxu0 %v2212
      %2613 = vmatpush2.bf16.msra.mxu0 %v2211
      %2614 = vmatprep.subr.bf16.mxu0 %v2194
      %2615 = vmatpush2.bf16.msra.mxu0 %v2193
      %2616 = vmatprep.subr.bf16.mxu0 %v2176
      %2617 = vmatpush2.bf16.msra.mxu0 %v2175
      %2618 = vmatprep.subr.bf16.mxu0 %v2158
      %2619 = vmatpush2.bf16.msra.mxu0 %v2157
      %2620 = vmatprep.subr.bf16.mxu0 %v2140
      %2621 = vmatpush2.bf16.msra.mxu0 %v2139
      %2622 = vmatprep.subr.bf16.mxu0 %v2122
      %2623 = vmatpush2.bf16.msra.mxu0 %v2121
      %2624 = vmatprep.mubr.bf16.mxu0 %v822
      %2625 = vmatmul.mubr.bf16.gmra.mxu0 %v821
      %v2626 = vpop.f32.mrf.mxu0
      %v2627 = vadd.f32 0.0, %v2626
      %v2628 = vpop.f32.mrf.mxu0
      %v2629 = vadd.f32 0.0, %v2628
      %v2630 = vpop.f32.mrf.mxu0
      %v2631 = vpop.f32.mrf.mxu0
      %2632 = vdwg.mxu0
      %2633 = vmatprep.subr.bf16.mxu0 %v2106
      %2634 = vmatpush1.bf16.msra.mxu0 %v2105
      %2635 = vmatprep.subr.bf16.mxu0 %v2088
      %2636 = vmatpush1.bf16.msra.mxu0 %v2087
      %2637 = vmatprep.subr.bf16.mxu0 %v2070
      %2638 = vmatpush1.bf16.msra.mxu0 %v2069
      %2639 = vmatprep.subr.bf16.mxu0 %v2052
      %2640 = vmatpush1.bf16.msra.mxu0 %v2051
      %2641 = vmatprep.subr.bf16.mxu0 %v2034
      %2642 = vmatpush1.bf16.msra.mxu0 %v2033
      %2643 = vmatprep.subr.bf16.mxu0 %v2016
      %2644 = vmatpush1.bf16.msra.mxu0 %v2015
      %2645 = vmatprep.subr.bf16.mxu0 %v1998
      %2646 = vmatpush1.bf16.msra.mxu0 %v1997
      %2647 = vmatprep.subr.bf16.mxu0 %v1980
      %2648 = vmatpush1.bf16.msra.mxu0 %v1979
      %2649 = vmatprep.subr.bf16.mxu0 %v2250
      %2650 = vmatpush2.bf16.msra.mxu0 %v2249
      %2651 = vmatprep.subr.bf16.mxu0 %v2232
      %2652 = vmatpush2.bf16.msra.mxu0 %v2231
      %2653 = vmatprep.subr.bf16.mxu0 %v2214
      %2654 = vmatpush2.bf16.msra.mxu0 %v2213
      %2655 = vmatprep.subr.bf16.mxu0 %v2196
      %2656 = vmatpush2.bf16.msra.mxu0 %v2195
      %2657 = vmatprep.subr.bf16.mxu0 %v2178
      %2658 = vmatpush2.bf16.msra.mxu0 %v2177
      %2659 = vmatprep.subr.bf16.mxu0 %v2160
      %2660 = vmatpush2.bf16.msra.mxu0 %v2159
      %2661 = vmatprep.subr.bf16.mxu0 %v2142
      %2662 = vmatpush2.bf16.msra.mxu0 %v2141
      %2663 = vmatprep.subr.bf16.mxu0 %v2124
      %2664 = vmatpush2.bf16.msra.mxu0 %v2123
      %2665 = vmatprep.mubr.bf16.mxu0 %v822
      %2666 = vmatmul.mubr.bf16.gmra.mxu0 %v821
      %v2667 = vpop.f32.mrf.mxu0
      %v2668 = vadd.f32 0.0, %v2667
      %v2669 = vpop.f32.mrf.mxu0
      %v2670 = vadd.f32 0.0, %v2669
      %v2671 = vpop.f32.mrf.mxu0
      %v2672 = vpop.f32.mrf.mxu0
      %2673 = vdwg.mxu0
      %2674 = vmatprep.subr.bf16.mxu0 %v2108
      %2675 = vmatpush1.bf16.msra.mxu0 %v2107
      %2676 = vmatprep.subr.bf16.mxu0 %v2090
      %2677 = vmatpush1.bf16.msra.mxu0 %v2089
      %2678 = vmatprep.subr.bf16.mxu0 %v2072
      %2679 = vmatpush1.bf16.msra.mxu0 %v2071
      %2680 = vmatprep.subr.bf16.mxu0 %v2054
      %2681 = vmatpush1.bf16.msra.mxu0 %v2053
      %2682 = vmatprep.subr.bf16.mxu0 %v2036
      %2683 = vmatpush1.bf16.msra.mxu0 %v2035
      %2684 = vmatprep.subr.bf16.mxu0 %v2018
      %2685 = vmatpush1.bf16.msra.mxu0 %v2017
      %2686 = vmatprep.subr.bf16.mxu0 %v2000
      %2687 = vmatpush1.bf16.msra.mxu0 %v1999
      %2688 = vmatprep.subr.bf16.mxu0 %v1982
      %2689 = vmatpush1.bf16.msra.mxu0 %v1981
      %2690 = vmatprep.subr.bf16.mxu0 %v2252
      %2691 = vmatpush2.bf16.msra.mxu0 %v2251
      %2692 = vmatprep.subr.bf16.mxu0 %v2234
      %2693 = vmatpush2.bf16.msra.mxu0 %v2233
      %2694 = vmatprep.subr.bf16.mxu0 %v2216
      %2695 = vmatpush2.bf16.msra.mxu0 %v2215
      %2696 = vmatprep.subr.bf16.mxu0 %v2198
      %2697 = vmatpush2.bf16.msra.mxu0 %v2197
      %2698 = vmatprep.subr.bf16.mxu0 %v2180
      %2699 = vmatpush2.bf16.msra.mxu0 %v2179
      %2700 = vmatprep.subr.bf16.mxu0 %v2162
      %2701 = vmatpush2.bf16.msra.mxu0 %v2161
      %2702 = vmatprep.subr.bf16.mxu0 %v2144
      %2703 = vmatpush2.bf16.msra.mxu0 %v2143
      %2704 = vmatprep.subr.bf16.mxu0 %v2126
      %2705 = vmatpush2.bf16.msra.mxu0 %v2125
      %2706 = vmatprep.mubr.bf16.mxu0 %v822
      %2707 = vmatmul.mubr.bf16.gmra.mxu0 %v821
      %v2708 = vpop.f32.mrf.mxu0
      %v2709 = vadd.f32 0.0, %v2708
      %v2710 = vpop.f32.mrf.mxu0
      %v2711 = vadd.f32 0.0, %v2710
      %v2712 = vpop.f32.mrf.mxu0
      %v2713 = vpop.f32.mrf.mxu0
      %2714 = vdwg.mxu0
      %2715 = vmatprep.subr.bf16.mxu0 %v2110
      %2716 = vmatpush1.bf16.msra.mxu0 %v2109
      %2717 = vmatprep.subr.bf16.mxu0 %v2092
      %2718 = vmatpush1.bf16.msra.mxu0 %v2091
      %2719 = vmatprep.subr.bf16.mxu0 %v2074
      %2720 = vmatpush1.bf16.msra.mxu0 %v2073
      %2721 = vmatprep.subr.bf16.mxu0 %v2056
      %2722 = vmatpush1.bf16.msra.mxu0 %v2055
      %2723 = vmatprep.subr.bf16.mxu0 %v2038
      %2724 = vmatpush1.bf16.msra.mxu0 %v2037
      %2725 = vmatprep.subr.bf16.mxu0 %v2020
      %2726 = vmatpush1.bf16.msra.mxu0 %v2019
      %2727 = vmatprep.subr.bf16.mxu0 %v2002
      %2728 = vmatpush1.bf16.msra.mxu0 %v2001
      %2729 = vmatprep.subr.bf16.mxu0 %v1984
      %2730 = vmatpush1.bf16.msra.mxu0 %v1983
      %2731 = vmatprep.subr.bf16.mxu0 %v2254
      %2732 = vmatpush2.bf16.msra.mxu0 %v2253
      %2733 = vmatprep.subr.bf16.mxu0 %v2236
      %2734 = vmatpush2.bf16.msra.mxu0 %v2235
      %2735 = vmatprep.subr.bf16.mxu0 %v2218
      %2736 = vmatpush2.bf16.msra.mxu0 %v2217
      %2737 = vmatprep.subr.bf16.mxu0 %v2200
      %2738 = vmatpush2.bf16.msra.mxu0 %v2199
      %2739 = vmatprep.subr.bf16.mxu0 %v2182
      %2740 = vmatpush2.bf16.msra.mxu0 %v2181
      %2741 = vmatprep.subr.bf16.mxu0 %v2164
      %2742 = vmatpush2.bf16.msra.mxu0 %v2163
      %2743 = vmatprep.subr.bf16.mxu0 %v2146
      %2744 = vmatpush2.bf16.msra.mxu0 %v2145
      %2745 = vmatprep.subr.bf16.mxu0 %v2128
      %2746 = vmatpush2.bf16.msra.mxu0 %v2127
      %2747 = vmatprep.mubr.bf16.mxu0 %v822
      %2748 = vmatmul.mubr.bf16.gmra.mxu0 %v821
      %v2749 = vpop.f32.mrf.mxu0
      %v2750 = vadd.f32 0.0, %v2749
      %v2751 = vpop.f32.mrf.mxu0
      %v2752 = vadd.f32 0.0, %v2751
      %v2753 = vpop.f32.mrf.mxu0
      %v2754 = vpop.f32.mrf.mxu0
      %2755 = vdwg.mxu0
      %2756 = vmatprep.subr.bf16.mxu0 %v2112
      %2757 = vmatpush1.bf16.msra.mxu0 %v2111
      %2758 = vmatprep.subr.bf16.mxu0 %v2094
      %2759 = vmatpush1.bf16.msra.mxu0 %v2093
      %2760 = vmatprep.subr.bf16.mxu0 %v2076
      %2761 = vmatpush1.bf16.msra.mxu0 %v2075
      %2762 = vmatprep.subr.bf16.mxu0 %v2058
      %2763 = vmatpush1.bf16.msra.mxu0 %v2057
      %2764 = vmatprep.subr.bf16.mxu0 %v2040
      %2765 = vmatpush1.bf16.msra.mxu0 %v2039
      %2766 = vmatprep.subr.bf16.mxu0 %v2022
      %2767 = vmatpush1.bf16.msra.mxu0 %v2021
      %2768 = vmatprep.subr.bf16.mxu0 %v2004
      %2769 = vmatpush1.bf16.msra.mxu0 %v2003
      %2770 = vmatprep.subr.bf16.mxu0 %v1986
      %2771 = vmatpush1.bf16.msra.mxu0 %v1985
      %2772 = vmatprep.subr.bf16.mxu0 %v2256
      %2773 = vmatpush2.bf16.msra.mxu0 %v2255
      %2774 = vmatprep.subr.bf16.mxu0 %v2238
      %2775 = vmatpush2.bf16.msra.mxu0 %v2237
      %2776 = vmatprep.subr.bf16.mxu0 %v2220
      %2777 = vmatpush2.bf16.msra.mxu0 %v2219
      %2778 = vmatprep.subr.bf16.mxu0 %v2202
      %2779 = vmatpush2.bf16.msra.mxu0 %v2201
      %2780 = vmatprep.subr.bf16.mxu0 %v2184
      %2781 = vmatpush2.bf16.msra.mxu0 %v2183
      %2782 = vmatprep.subr.bf16.mxu0 %v2166
      %2783 = vmatpush2.bf16.msra.mxu0 %v2165
      %2784 = vmatprep.subr.bf16.mxu0 %v2148
      %2785 = vmatpush2.bf16.msra.mxu0 %v2147
      %2786 = vmatprep.subr.bf16.mxu0 %v2130
      %2787 = vmatpush2.bf16.msra.mxu0 %v2129
      %2788 = vmatprep.mubr.bf16.mxu0 %v822
      %2789 = vmatmul.mubr.bf16.gmra.mxu0 %v821
      %v2790 = vpop.f32.mrf.mxu0
      %v2791 = vadd.f32 0.0, %v2790
      %v2792 = vpop.f32.mrf.mxu0
      %v2793 = vadd.f32 0.0, %v2792
      %v2794 = vpop.f32.mrf.mxu0
      %v2795 = vpop.f32.mrf.mxu0
      %2796 = vdwg.mxu0
      %2797 = vmatprep.subr.bf16.mxu0 %v2114
      %2798 = vmatpush1.bf16.msra.mxu0 %v2113
      %2799 = vmatprep.subr.bf16.mxu0 %v2096
      %2800 = vmatpush1.bf16.msra.mxu0 %v2095
      %2801 = vmatprep.subr.bf16.mxu0 %v2078
      %2802 = vmatpush1.bf16.msra.mxu0 %v2077
      %2803 = vmatprep.subr.bf16.mxu0 %v2060
      %2804 = vmatpush1.bf16.msra.mxu0 %v2059
      %2805 = vmatprep.subr.bf16.mxu0 %v2042
      %2806 = vmatpush1.bf16.msra.mxu0 %v2041
      %2807 = vmatprep.subr.bf16.mxu0 %v2024
      %2808 = vmatpush1.bf16.msra.mxu0 %v2023
      %2809 = vmatprep.subr.bf16.mxu0 %v2006
      %2810 = vmatpush1.bf16.msra.mxu0 %v2005
      %2811 = vmatprep.subr.bf16.mxu0 %v1988
      %2812 = vmatpush1.bf16.msra.mxu0 %v1987
      %2813 = vmatprep.subr.bf16.mxu0 %v2258
      %2814 = vmatpush2.bf16.msra.mxu0 %v2257
      %2815 = vmatprep.subr.bf16.mxu0 %v2240
      %2816 = vmatpush2.bf16.msra.mxu0 %v2239
      %2817 = vmatprep.subr.bf16.mxu0 %v2222
      %2818 = vmatpush2.bf16.msra.mxu0 %v2221
      %2819 = vmatprep.subr.bf16.mxu0 %v2204
      %2820 = vmatpush2.bf16.msra.mxu0 %v2203
      %2821 = vmatprep.subr.bf16.mxu0 %v2186
      %2822 = vmatpush2.bf16.msra.mxu0 %v2185
      %2823 = vmatprep.subr.bf16.mxu0 %v2168
      %2824 = vmatpush2.bf16.msra.mxu0 %v2167
      %2825 = vmatprep.subr.bf16.mxu0 %v2150
      %2826 = vmatpush2.bf16.msra.mxu0 %v2149
      %2827 = vmatprep.subr.bf16.mxu0 %v2132
      %2828 = vmatpush2.bf16.msra.mxu0 %v2131
      %2829 = vmatprep.mubr.bf16.mxu0 %v822
      %2830 = vmatmul.mubr.bf16.gmra.mxu0 %v821
      %v2831 = vpop.f32.mrf.mxu0
      %v2832 = vadd.f32 0.0, %v2831
      %v2833 = vpop.f32.mrf.mxu0
      %v2834 = vadd.f32 0.0, %v2833
      %v2835 = vpop.f32.mrf.mxu0
      %v2836 = vpop.f32.mrf.mxu0
      %2837 = vdwg.mxu0
      %2838 = vmatprep.subr.bf16.mxu0 %v2116
      %2839 = vmatpush1.bf16.msra.mxu0 %v2115
      %2840 = vmatprep.subr.bf16.mxu0 %v2098
      %2841 = vmatpush1.bf16.msra.mxu0 %v2097
      %2842 = vmatprep.subr.bf16.mxu0 %v2080
      %2843 = vmatpush1.bf16.msra.mxu0 %v2079
      %2844 = vmatprep.subr.bf16.mxu0 %v2062
      %2845 = vmatpush1.bf16.msra.mxu0 %v2061
      %2846 = vmatprep.subr.bf16.mxu0 %v2044
      %2847 = vmatpush1.bf16.msra.mxu0 %v2043
      %2848 = vmatprep.subr.bf16.mxu0 %v2026
      %2849 = vmatpush1.bf16.msra.mxu0 %v2025
      %2850 = vmatprep.subr.bf16.mxu0 %v2008
      %2851 = vmatpush1.bf16.msra.mxu0 %v2007
      %2852 = vmatprep.subr.bf16.mxu0 %v1990
      %2853 = vmatpush1.bf16.msra.mxu0 %v1989
      %2854 = vmatprep.subr.bf16.mxu0 %v2260
      %2855 = vmatpush2.bf16.msra.mxu0 %v2259
      %2856 = vmatprep.subr.bf16.mxu0 %v2242
      %2857 = vmatpush2.bf16.msra.mxu0 %v2241
      %2858 = vmatprep.subr.bf16.mxu0 %v2224
      %2859 = vmatpush2.bf16.msra.mxu0 %v2223
      %2860 = vmatprep.subr.bf16.mxu0 %v2206
      %2861 = vmatpush2.bf16.msra.mxu0 %v2205
      %2862 = vmatprep.subr.bf16.mxu0 %v2188
      %2863 = vmatpush2.bf16.msra.mxu0 %v2187
      %2864 = vmatprep.subr.bf16.mxu0 %v2170
      %2865 = vmatpush2.bf16.msra.mxu0 %v2169
      %2866 = vmatprep.subr.bf16.mxu0 %v2152
      %2867 = vmatpush2.bf16.msra.mxu0 %v2151
      %2868 = vmatprep.subr.bf16.mxu0 %v2134
      %2869 = vmatpush2.bf16.msra.mxu0 %v2133
      %2870 = vmatprep.mubr.bf16.mxu0 %v822
      %2871 = vmatmul.mubr.bf16.gmra.mxu0 %v821
      %v2872 = vpop.f32.mrf.mxu0
      %v2873 = vadd.f32 0.0, %v2872
      %v2874 = vpop.f32.mrf.mxu0
      %v2875 = vadd.f32 0.0, %v2874
      %v2876 = vpop.f32.mrf.mxu0
      %v2877 = vpop.f32.mrf.mxu0
      %2878 = vdwg.mxu0
      %2879 = vmatprep.subr.bf16.mxu0 %v2118
      %2880 = vmatpush1.bf16.msra.mxu0 %v2117
      %2881 = vmatprep.subr.bf16.mxu0 %v2100
      %2882 = vmatpush1.bf16.msra.mxu0 %v2099
      %2883 = vmatprep.subr.bf16.mxu0 %v2082
      %2884 = vmatpush1.bf16.msra.mxu0 %v2081
      %2885 = vmatprep.subr.bf16.mxu0 %v2064
      %2886 = vmatpush1.bf16.msra.mxu0 %v2063
      %2887 = vmatprep.subr.bf16.mxu0 %v2046
      %2888 = vmatpush1.bf16.msra.mxu0 %v2045
      %2889 = vmatprep.subr.bf16.mxu0 %v2028
      %2890 = vmatpush1.bf16.msra.mxu0 %v2027
      %2891 = vmatprep.subr.bf16.mxu0 %v2010
      %2892 = vmatpush1.bf16.msra.mxu0 %v2009
      %2893 = vmatprep.subr.bf16.mxu0 %v1992
      %2894 = vmatpush1.bf16.msra.mxu0 %v1991
      %2895 = vmatprep.subr.bf16.mxu0 %v2262
      %2896 = vmatpush2.bf16.msra.mxu0 %v2261
      %2897 = vmatprep.subr.bf16.mxu0 %v2244
      %2898 = vmatpush2.bf16.msra.mxu0 %v2243
      %2899 = vmatprep.subr.bf16.mxu0 %v2226
      %2900 = vmatpush2.bf16.msra.mxu0 %v2225
      %2901 = vmatprep.subr.bf16.mxu0 %v2208
      %2902 = vmatpush2.bf16.msra.mxu0 %v2207
      %2903 = vmatprep.subr.bf16.mxu0 %v2190
      %2904 = vmatpush2.bf16.msra.mxu0 %v2189
      %2905 = vmatprep.subr.bf16.mxu0 %v2172
      %2906 = vmatpush2.bf16.msra.mxu0 %v2171
      %2907 = vmatprep.subr.bf16.mxu0 %v2154
      %2908 = vmatpush2.bf16.msra.mxu0 %v2153
      %2909 = vmatprep.subr.bf16.mxu0 %v2136
      %2910 = vmatpush2.bf16.msra.mxu0 %v2135
      %2911 = vmatprep.mubr.bf16.mxu0 %v822
      %2912 = vmatmul.mubr.bf16.gmra.mxu0 %v821
      %v2913 = vpop.f32.mrf.mxu0
      %v2914 = vadd.f32 0.0, %v2913
      %v2915 = vpop.f32.mrf.mxu0
      %v2916 = vadd.f32 0.0, %v2915
      %v2917 = vpop.f32.mrf.mxu0
      %v2918 = vpop.f32.mrf.mxu0
      %2919 = vdwg.mxu0
      %vm2920 = vcmask 523264
      %2921 = vst.msk [vmem:[#allocation2] sm:$0xff] %vm2920, %v2586
      %2923 = vrot.lane.b32.xlu0 %v2586, 64
      %v2924 = vpop.permute.xlu0 %2923
      %2926 = vst.msk [vmem:[#allocation2 + $0x8] sm:$0xff] %vm2920, %v2924
      %2927 = vst.msk [vmem:[#allocation2 + $0x10] sm:$0xff] %vm2920, %v2588
      %2929 = vrot.lane.b32.xlu0 %v2588, 64
      %v2930 = vpop.permute.xlu0 %2929
      %2932 = vst.msk [vmem:[#allocation2 + $0x18] sm:$0xff] %vm2920, %v2930
      %2933 = vst.msk [vmem:[#allocation2 + $0x20] sm:$0xff] %vm2920, %v2627
      %2935 = vrot.lane.b32.xlu0 %v2627, 64
      %v2936 = vpop.permute.xlu0 %2935
      %2938 = vst.msk [vmem:[#allocation2 + $0x28] sm:$0xff] %vm2920, %v2936
      %2939 = vst.msk [vmem:[#allocation2 + $0x30] sm:$0xff] %vm2920, %v2629
      %2941 = vrot.lane.b32.xlu0 %v2629, 64
      %v2942 = vpop.permute.xlu0 %2941
      %2944 = vst.msk [vmem:[#allocation2 + $0x38] sm:$0xff] %vm2920, %v2942
      %2945 = vst.msk [vmem:[#allocation2 + $0x40] sm:$0xff] %vm2920, %v2668
      %2947 = vrot.lane.b32.xlu0 %v2668, 64
      %v2948 = vpop.permute.xlu0 %2947
      %2950 = vst.msk [vmem:[#allocation2 + $0x48] sm:$0xff] %vm2920, %v2948
      %2951 = vst.msk [vmem:[#allocation2 + $0x50] sm:$0xff] %vm2920, %v2670
      %2953 = vrot.lane.b32.xlu0 %v2670, 64
      %v2954 = vpop.permute.xlu0 %2953
      %2956 = vst.msk [vmem:[#allocation2 + $0x58] sm:$0xff] %vm2920, %v2954
      %2957 = vst.msk [vmem:[#allocation2 + $0x60] sm:$0xff] %vm2920, %v2709
      %2959 = vrot.lane.b32.xlu0 %v2709, 64
      %v2960 = vpop.permute.xlu0 %2959
      %2962 = vst.msk [vmem:[#allocation2 + $0x68] sm:$0xff] %vm2920, %v2960
      %2963 = vst.msk [vmem:[#allocation2 + $0x70] sm:$0xff] %vm2920, %v2711
      %2965 = vrot.lane.b32.xlu0 %v2711, 64
      %v2966 = vpop.permute.xlu0 %2965
      %2968 = vst.msk [vmem:[#allocation2 + $0x78] sm:$0xff] %vm2920, %v2966
      %2969 = vst.msk [vmem:[#allocation2 + $0x80] sm:$0xff] %vm2920, %v2750
      %2971 = vrot.lane.b32.xlu0 %v2750, 64
      %v2972 = vpop.permute.xlu0 %2971
      %2974 = vst.msk [vmem:[#allocation2 + $0x88] sm:$0xff] %vm2920, %v2972
      %2975 = vst.msk [vmem:[#allocation2 + $0x90] sm:$0xff] %vm2920, %v2752
      %2977 = vrot.lane.b32.xlu0 %v2752, 64
      %v2978 = vpop.permute.xlu0 %2977
      %2980 = vst.msk [vmem:[#allocation2 + $0x98] sm:$0xff] %vm2920, %v2978
      %2981 = vst.msk [vmem:[#allocation2 + $0xa0] sm:$0xff] %vm2920, %v2791
      %2983 = vrot.lane.b32.xlu0 %v2791, 64
      %v2984 = vpop.permute.xlu0 %2983
      %2986 = vst.msk [vmem:[#allocation2 + $0xa8] sm:$0xff] %vm2920, %v2984
      %2987 = vst.msk [vmem:[#allocation2 + $0xb0] sm:$0xff] %vm2920, %v2793
      %2989 = vrot.lane.b32.xlu0 %v2793, 64
      %v2990 = vpop.permute.xlu0 %2989
      %2992 = vst.msk [vmem:[#allocation2 + $0xb8] sm:$0xff] %vm2920, %v2990
      %2993 = vst.msk [vmem:[#allocation2 + $0xc0] sm:$0xff] %vm2920, %v2832
      %2995 = vrot.lane.b32.xlu0 %v2832, 64
      %v2996 = vpop.permute.xlu0 %2995
      %2998 = vst.msk [vmem:[#allocation2 + $0xc8] sm:$0xff] %vm2920, %v2996
      %2999 = vst.msk [vmem:[#allocation2 + $0xd0] sm:$0xff] %vm2920, %v2834
      %3001 = vrot.lane.b32.xlu0 %v2834, 64
      %v3002 = vpop.permute.xlu0 %3001
      %3004 = vst.msk [vmem:[#allocation2 + $0xd8] sm:$0xff] %vm2920, %v3002
      %3005 = vst.msk [vmem:[#allocation2 + $0xe0] sm:$0xff] %vm2920, %v2873
      %3007 = vrot.lane.b32.xlu0 %v2873, 64
      %v3008 = vpop.permute.xlu0 %3007
      %3010 = vst.msk [vmem:[#allocation2 + $0xe8] sm:$0xff] %vm2920, %v3008
      %3011 = vst.msk [vmem:[#allocation2 + $0xf0] sm:$0xff] %vm2920, %v2875
      %3013 = vrot.lane.b32.xlu0 %v2875, 64
      %v3014 = vpop.permute.xlu0 %3013
      %3016 = vst.msk [vmem:[#allocation2 + $0xf8] sm:$0xff] %vm2920, %v3014
      %3017 = vst.msk [vmem:[#allocation2 + $0x100] sm:$0xff] %vm2920, %v2914
      %3019 = vrot.lane.b32.xlu0 %v2914, 64
      %v3020 = vpop.permute.xlu0 %3019
      %3022 = vst.msk [vmem:[#allocation2 + $0x108] sm:$0xff] %vm2920, %v3020
      %3023 = vst.msk [vmem:[#allocation2 + $0x110] sm:$0xff] %vm2920, %v2916
      %3025 = vrot.lane.b32.xlu0 %v2916, 64
      %v3026 = vpop.permute.xlu0 %3025
      %3028 = vst.msk [vmem:[#allocation2 + $0x118] sm:$0xff] %vm2920, %v3026
      %v3029 = vld [vmem:[%s4] sm:$0xff]
      %v3030 = vld [vmem:[%s4 + $0x8] sm:$0xf]
      %v3031 = vld [vmem:[%s4 + $0xc] sm:$0xff]
      %v3032 = vld [vmem:[%s4 + $0x14] sm:$0xf]
      %v3033 = vld [vmem:[#allocation2] sm:$0xff]
      %v3034 = vld [vmem:[#allocation2 + $0x8] sm:$0xff]
      %v3035 = vld [vmem:[#allocation2 + $0x10] sm:$0xff]
      %v3036 = vld [vmem:[#allocation2 + $0x18] sm:$0xff]
      %v3037 = vld [vmem:[#allocation2 + $0x20] sm:$0xff]
      %v3038 = vld [vmem:[#allocation2 + $0x28] sm:$0xff]
      %v3039 = vld [vmem:[#allocation2 + $0x30] sm:$0xff]
      %v3040 = vld [vmem:[#allocation2 + $0x38] sm:$0xff]
      %v3041 = vld [vmem:[#allocation2 + $0x40] sm:$0xff]
      %v3042 = vld [vmem:[#allocation2 + $0x48] sm:$0xff]
      %v3043 = vld [vmem:[#allocation2 + $0x50] sm:$0xff]
      %v3044 = vld [vmem:[#allocation2 + $0x58] sm:$0xff]
      %v3045 = vld [vmem:[#allocation2 + $0x60] sm:$0xff]
      %v3046 = vld [vmem:[#allocation2 + $0x68] sm:$0xff]
      %v3047 = vld [vmem:[#allocation2 + $0x70] sm:$0xff]
      %v3048 = vld [vmem:[#allocation2 + $0x78] sm:$0xff]
      %v3049 = vld [vmem:[#allocation2 + $0x80] sm:$0xff]
      %v3050 = vld [vmem:[#allocation2 + $0x88] sm:$0xff]
      %v3051 = vld [vmem:[#allocation2 + $0x90] sm:$0xff]
      %v3052 = vld [vmem:[#allocation2 + $0x98] sm:$0xff]
      %v3053 = vld [vmem:[#allocation2 + $0xa0] sm:$0xff]
      %v3054 = vld [vmem:[#allocation2 + $0xa8] sm:$0xff]
      %v3055 = vld [vmem:[#allocation2 + $0xb0] sm:$0xff]
      %v3056 = vld [vmem:[#allocation2 + $0xb8] sm:$0xff]
      %v3057 = vld [vmem:[#allocation2 + $0xc0] sm:$0xff]
      %v3058 = vld [vmem:[#allocation2 + $0xc8] sm:$0xff]
      %v3059 = vld [vmem:[#allocation2 + $0xd0] sm:$0xff]
      %v3060 = vld [vmem:[#allocation2 + $0xd8] sm:$0xff]
      %v3061 = vld [vmem:[#allocation2 + $0xe0] sm:$0xff]
      %v3062 = vld [vmem:[#allocation2 + $0xe8] sm:$0xff]
      %v3063 = vld [vmem:[#allocation2 + $0xf0] sm:$0xff]
      %v3064 = vld [vmem:[#allocation2 + $0xf8] sm:$0xff]
      %v3065 = vld [vmem:[#allocation2 + $0x100] sm:$0xff]
      %v3066 = vld [vmem:[#allocation2 + $0x108] sm:$0xff]
      %v3067 = vld [vmem:[#allocation2 + $0x110] sm:$0xff]
      %v3068 = vld [vmem:[#allocation2 + $0x118] sm:$0xff]
      %v3069 = vpack.c.bf16 %v3034, %v3033
      %v3070 = vpack.c.bf16 %v3036, %v3035
      %v3071 = vpack.c.bf16 %v3038, %v3037
      %v3072 = vpack.c.bf16 %v3040, %v3039
      %v3073 = vpack.c.bf16 %v3042, %v3041
      %v3074 = vpack.c.bf16 %v3044, %v3043
      %v3075 = vpack.c.bf16 %v3046, %v3045
      %v3076 = vpack.c.bf16 %v3048, %v3047
      %v3077 = vpack.c.bf16 %v3050, %v3049
      %v3078 = vpack.c.bf16 %v3052, %v3051
      %v3079 = vpack.c.bf16 %v3054, %v3053
      %v3080 = vpack.c.bf16 %v3056, %v3055
      %v3081 = vpack.c.bf16 %v3058, %v3057
      %v3082 = vpack.c.bf16 %v3060, %v3059
      %v3083 = vpack.c.bf16 %v3062, %v3061
      %v3084 = vpack.c.bf16 %v3064, %v3063
      %v3085 = vpack.c.bf16 %v3066, %v3065
      %v3086 = vpack.c.bf16 %v3068, %v3067
      %v3087 = vld [vmem:[%s5] sm:$0xff]
      %v3088 = vld [vmem:[%s5 + $0x8] sm:$0xff]
      %3090 = vset.pattern.permute.xlu0 0
      %3091 = vperm.xlu0 %3090, %v3087
      %v3092 = vpop.permute.xlu0 %3091
      %3095 = vset.pattern.permute.xlu0 0
      %3096 = vperm.xlu0 %3095, %v3088
      %v3097 = vpop.permute.xlu0 %3096
      %v3103 = vunpack.c.l.b16 %v3029
      %v3104 = vunpack.c.h.b16 %v3029
      %v3105 = vunpack.c.l.b16 %v3030
      %v3106 = vunpack.c.l.b16 %v3031
      %v3107 = vunpack.c.h.b16 %v3031
      %v3108 = vunpack.c.l.b16 %v3032
      %v3109 = vpack.c.b16 %v3106, %v3103
      %v3110 = vpack.c.b16 %v3107, %v3104
      %v3111 = vpack.c.b16 %v3108, %v3105
      %vm3114 = vcmask 261120
      %v3116 = vsel %vm3114, %v3111, 0
      %3118 = vmatprep.subr.bf16.mxu0 0
      %3119 = vmatpush1.bf16.msra.mxu0 %v3076
      %3120 = vmatprep.subr.bf16.mxu0 0
      %3121 = vmatpush1.bf16.msra.mxu0 %v3075
      %3122 = vmatprep.subr.bf16.mxu0 0
      %3123 = vmatpush1.bf16.msra.mxu0 %v3074
      %3124 = vmatprep.subr.bf16.mxu0 0
      %3125 = vmatpush1.bf16.msra.mxu0 %v3073
      %3126 = vmatprep.subr.bf16.mxu0 0
      %3127 = vmatpush1.bf16.msra.mxu0 %v3072
      %3128 = vmatprep.subr.bf16.mxu0 0
      %3129 = vmatpush1.bf16.msra.mxu0 %v3071
      %3130 = vmatprep.subr.bf16.mxu0 0
      %3131 = vmatpush1.bf16.msra.mxu0 %v3070
      %3132 = vmatprep.subr.bf16.mxu0 0
      %3133 = vmatpush1.bf16.msra.mxu0 %v3069
      %3134 = vmatprep.subr.bf16.mxu0 0
      %3135 = vmatpush2.bf16.msra.mxu0 %v3084
      %3136 = vmatprep.subr.bf16.mxu0 0
      %3137 = vmatpush2.bf16.msra.mxu0 %v3083
      %3138 = vmatprep.subr.bf16.mxu0 0
      %3139 = vmatpush2.bf16.msra.mxu0 %v3082
      %3140 = vmatprep.subr.bf16.mxu0 0
      %3141 = vmatpush2.bf16.msra.mxu0 %v3081
      %3142 = vmatprep.subr.bf16.mxu0 0
      %3143 = vmatpush2.bf16.msra.mxu0 %v3080
      %3144 = vmatprep.subr.bf16.mxu0 0
      %3145 = vmatpush2.bf16.msra.mxu0 %v3079
      %3146 = vmatprep.subr.bf16.mxu0 0
      %3147 = vmatpush2.bf16.msra.mxu0 %v3078
      %3148 = vmatprep.subr.bf16.mxu0 0
      %3149 = vmatpush2.bf16.msra.mxu0 %v3077
      %3150 = vmatprep.mubr.bf16.mxu0 %v3110
      %3151 = vmatmul.mubr.bf16.gmra.mxu0 %v3109
      %v3152 = vpop.f32.mrf.mxu0
      %v3153 = vadd.f32 %v3092, %v3152
      %v3154 = vpop.f32.mrf.mxu0
      %v3155 = vpop.f32.mrf.mxu0
      %v3156 = vadd.f32 %v3097, %v3155
      %v3157 = vpop.f32.mrf.mxu0
      %3158 = vdwg.mxu0
      %3159 = vmatprep.subr.bf16.mxu0 0
      %3160 = vmatpush1.bf16.msra.mxu0 0
      %3161 = vmatprep.subr.bf16.mxu0 0
      %3162 = vmatpush1.bf16.msra.mxu0 0
      %3163 = vmatprep.subr.bf16.mxu0 0
      %3164 = vmatpush1.bf16.msra.mxu0 0
      %3165 = vmatprep.subr.bf16.mxu0 0
      %3166 = vmatpush1.bf16.msra.mxu0 0
      %3167 = vmatprep.subr.bf16.mxu0 0
      %3168 = vmatpush1.bf16.msra.mxu0 0
      %3169 = vmatprep.subr.bf16.mxu0 0
      %3170 = vmatpush1.bf16.msra.mxu0 0
      %3171 = vmatprep.subr.bf16.mxu0 0
      %3172 = vmatpush1.bf16.msra.mxu0 %v3086
      %3173 = vmatprep.subr.bf16.mxu0 0
      %3174 = vmatpush1.bf16.msra.mxu0 %v3085
      %3175 = vmatprep.subr.bf16.mxu0 0
      %3176 = vmatpush2.bf16.msra.mxu0 0
      %3177 = vmatprep.subr.bf16.mxu0 0
      %3178 = vmatpush2.bf16.msra.mxu0 0
      %3179 = vmatprep.subr.bf16.mxu0 0
      %3180 = vmatpush2.bf16.msra.mxu0 0
      %3181 = vmatprep.subr.bf16.mxu0 0
      %3182 = vmatpush2.bf16.msra.mxu0 0
      %3183 = vmatprep.subr.bf16.mxu0 0
      %3184 = vmatpush2.bf16.msra.mxu0 0
      %3185 = vmatprep.subr.bf16.mxu0 0
      %3186 = vmatpush2.bf16.msra.mxu0 0
      %3187 = vmatprep.subr.bf16.mxu0 0
      %3188 = vmatpush2.bf16.msra.mxu0 0
      %3189 = vmatprep.subr.bf16.mxu0 0
      %3190 = vmatpush2.bf16.msra.mxu0 0
      %3191 = vmatprep.mubr.bf16.mxu0 0
      %3192 = vmatmul.mubr.bf16.gmra.mxu0 %v3116
      %v3193 = vpop.f32.mrf.mxu0
      %v3194 = vadd.f32 %v3153, %v3193
      %v3195 = vpop.f32.mrf.mxu0
      %v3196 = vpop.f32.mrf.mxu0
      %v3197 = vadd.f32 %v3156, %v3196
      %v3198 = vpop.f32.mrf.mxu0
      %3199 = vdwg.mxu0
      %v3200 = vsel %vm2920, %v3194, 0.0
      %3201 = vadd.xlane.f32.xlu0 %v3200
      %v3202 = vpop.xlane.xlu0 %3201
      %v3203 = vsel %vm2920, %v3197, 0.0
      %3204 = vadd.xlane.f32.xlu0 %v3203
      %v3205 = vpop.xlane.xlu0 %3204
      %v3206 = vrcp.pop 64.0
      %v3207 = vmul.f32 %v3202, %v3206
      %v3208 = vmul.f32 %v3205, %v3206
      %v3209 = vsub.f32 %v3194, %v3207
      %v3210 = vsub.f32 %v3197, %v3208
      %v3211 = vmul.f32 %v3209, %v3209
      %v3212 = vmul.f32 %v3210, %v3210
      %v3213 = vsel %vm2920, %v3211, 0.0
      %3214 = vadd.xlane.f32.xlu0 %v3213
      %v3215 = vpop.xlane.xlu0 %3214
      %v3216 = vsel %vm2920, %v3212, 0.0
      %3217 = vadd.xlane.f32.xlu0 %v3216
      %v3218 = vpop.xlane.xlu0 %3217
      %v3219 = vmul.f32 %v3215, %v3206
      %v3220 = vmul.f32 %v3218, %v3206
      %v3221 = vadd.f32 %v3219, 1e-05
      %v3222 = vadd.f32 %v3220, 1e-05
      %v3223 = vrsqrt.pop %v3221
      %v3224 = vrsqrt.pop %v3222
      %v3225 = vmul.f32 %v3209, %v3223
      %v3226 = vmul.f32 %v3210, %v3224
      %v3227 = vmax.f32 %v3225, 0.0
      %v3228 = vmax.f32 %v3226, 0.0
      %vm3229 = vcmask 520192
      %3230 = vst.msk [vmem:[%s539] sm:$0x1f] %vm3229, %v3227
      %v3231 = vpack.c.bf16 %v3228, %v3227
      %v3232 = vld [vmem:[%s6] sm:$0xff]
      %v3233 = vld [vmem:[%s6 + $0x8] sm:$0xff]
      %v3234 = vld [vmem:[%s6 + $0x10] sm:$0xf]
      %v3235 = vld [vmem:[%s6 + $0x14] sm:$0xff]
      %v3236 = vld [vmem:[%s6 + $0x1c] sm:$0xff]
      %v3237 = vld [vmem:[%s6 + $0x24] sm:$0xf]
      %v3238 = vld [vmem:[%s6 + $0x28] sm:$0xff]
      %v3239 = vld [vmem:[%s6 + $0x30] sm:$0xff]
      %v3240 = vld [vmem:[%s6 + $0x38] sm:$0xf]
      %v3241 = vld [vmem:[%s6 + $0x3c] sm:$0xff]
      %v3242 = vld [vmem:[%s6 + $0x44] sm:$0xff]
      %v3243 = vld [vmem:[%s6 + $0x4c] sm:$0xf]
      %v3244 = vld [vmem:[%s6 + $0x50] sm:$0xff]
      %v3245 = vld [vmem:[%s6 + $0x58] sm:$0xff]
      %v3246 = vld [vmem:[%s6 + $0x60] sm:$0xf]
      %v3247 = vld [vmem:[%s6 + $0x64] sm:$0xff]
      %v3248 = vld [vmem:[%s6 + $0x6c] sm:$0xff]
      %v3249 = vld [vmem:[%s6 + $0x74] sm:$0xf]
      %v3250 = vld [vmem:[%s6 + $0x78] sm:$0xff]
      %v3251 = vld [vmem:[%s6 + $0x80] sm:$0xff]
      %v3252 = vld [vmem:[%s6 + $0x88] sm:$0xf]
      %v3253 = vld [vmem:[%s6 + $0x8c] sm:$0xff]
      %v3254 = vld [vmem:[%s6 + $0x94] sm:$0xff]
      %v3255 = vld [vmem:[%s6 + $0x9c] sm:$0xf]
      %v3280 = vunpack.c.l.b16 %v3232
      %v3281 = vunpack.c.h.b16 %v3232
      %v3282 = vunpack.c.l.b16 %v3233
      %v3283 = vunpack.c.h.b16 %v3233
      %v3284 = vunpack.c.l.b16 %v3234
      %v3285 = vunpack.c.l.b16 %v3235
      %v3286 = vunpack.c.h.b16 %v3235
      %v3287 = vunpack.c.l.b16 %v3236
      %v3288 = vunpack.c.h.b16 %v3236
      %v3289 = vunpack.c.l.b16 %v3237
      %v3290 = vunpack.c.l.b16 %v3238
      %v3291 = vunpack.c.h.b16 %v3238
      %v3292 = vunpack.c.l.b16 %v3239
      %v3293 = vunpack.c.h.b16 %v3239
      %v3294 = vunpack.c.l.b16 %v3240
      %v3295 = vunpack.c.l.b16 %v3241
      %v3296 = vunpack.c.h.b16 %v3241
      %v3297 = vunpack.c.l.b16 %v3242
      %v3298 = vunpack.c.h.b16 %v3242
      %v3299 = vunpack.c.l.b16 %v3243
      %v3300 = vunpack.c.l.b16 %v3244
      %v3301 = vunpack.c.h.b16 %v3244
      %v3302 = vunpack.c.l.b16 %v3245
      %v3303 = vunpack.c.h.b16 %v3245
      %v3304 = vunpack.c.l.b16 %v3246
      %v3305 = vunpack.c.l.b16 %v3247
      %v3306 = vunpack.c.h.b16 %v3247
      %v3307 = vunpack.c.l.b16 %v3248
      %v3308 = vunpack.c.h.b16 %v3248
      %v3309 = vunpack.c.l.b16 %v3249
      %v3310 = vunpack.c.l.b16 %v3250
      %v3311 = vunpack.c.h.b16 %v3250
      %v3312 = vunpack.c.l.b16 %v3251
      %v3313 = vunpack.c.h.b16 %v3251
      %v3314 = vunpack.c.l.b16 %v3252
      %v3315 = vunpack.c.l.b16 %v3253
      %v3316 = vunpack.c.h.b16 %v3253
      %v3317 = vunpack.c.l.b16 %v3254
      %v3318 = vunpack.c.h.b16 %v3254
      %v3319 = vunpack.c.l.b16 %v3255
      %v3320 = vpack.c.b16 %v3285, %v3280
      %v3321 = vpack.c.b16 %v3286, %v3281
      %v3322 = vpack.c.b16 %v3287, %v3282
      %v3323 = vpack.c.b16 %v3288, %v3283
      %v3324 = vpack.c.b16 %v3289, %v3284
      %v3325 = vpack.c.b16 %v3295, %v3290
      %v3326 = vpack.c.b16 %v3296, %v3291
      %v3327 = vpack.c.b16 %v3297, %v3292
      %v3328 = vpack.c.b16 %v3298, %v3293
      %v3329 = vpack.c.b16 %v3299, %v3294
      %v3330 = vpack.c.b16 %v3305, %v3300
      %v3331 = vpack.c.b16 %v3306, %v3301
      %v3332 = vpack.c.b16 %v3307, %v3302
      %v3333 = vpack.c.b16 %v3308, %v3303
      %v3334 = vpack.c.b16 %v3309, %v3304
      %v3335 = vpack.c.b16 %v3315, %v3310
      %v3336 = vpack.c.b16 %v3316, %v3311
      %v3337 = vpack.c.b16 %v3317, %v3312
      %v3338 = vpack.c.b16 %v3318, %v3313
      %v3339 = vpack.c.b16 %v3319, %v3314
      %v3361 = vsel %vm2920, %v3231, 0
      %3363 = vmatprep.subr.bf16.mxu0 0
      %3364 = vmatpush1.bf16.msra.mxu0 0
      %3365 = vmatprep.subr.bf16.mxu0 0
      %3366 = vmatpush1.bf16.msra.mxu0 0
      %3367 = vmatprep.subr.bf16.mxu0 0
      %3368 = vmatpush1.bf16.msra.mxu0 0
      %3369 = vmatprep.subr.bf16.mxu0 0
      %3370 = vmatpush1.bf16.msra.mxu0 0
      %3371 = vmatprep.subr.bf16.mxu0 %v3336
      %3372 = vmatpush1.bf16.msra.mxu0 %v3335
      %3373 = vmatprep.subr.bf16.mxu0 %v3331
      %3374 = vmatpush1.bf16.msra.mxu0 %v3330
      %3375 = vmatprep.subr.bf16.mxu0 %v3326
      %3376 = vmatpush1.bf16.msra.mxu0 %v3325
      %3377 = vmatprep.subr.bf16.mxu0 %v3321
      %3378 = vmatpush1.bf16.msra.mxu0 %v3320
      %3379 = vmatprep.subr.bf16.mxu0 0
      %3380 = vmatpush2.bf16.msra.mxu0 0
      %3381 = vmatprep.subr.bf16.mxu0 0
      %3382 = vmatpush2.bf16.msra.mxu0 0
      %3383 = vmatprep.subr.bf16.mxu0 0
      %3384 = vmatpush2.bf16.msra.mxu0 0
      %3385 = vmatprep.subr.bf16.mxu0 0
      %3386 = vmatpush2.bf16.msra.mxu0 0
      %3387 = vmatprep.subr.bf16.mxu0 0
      %3388 = vmatpush2.bf16.msra.mxu0 0
      %3389 = vmatprep.subr.bf16.mxu0 0
      %3390 = vmatpush2.bf16.msra.mxu0 0
      %3391 = vmatprep.subr.bf16.mxu0 0
      %3392 = vmatpush2.bf16.msra.mxu0 0
      %3393 = vmatprep.subr.bf16.mxu0 0
      %3394 = vmatpush2.bf16.msra.mxu0 0
      %3395 = vmatprep.mubr.bf16.mxu0 0
      %3396 = vmatmul.mubr.bf16.gmra.mxu0 %v3361
      %v3397 = vpop.f32.mrf.mxu0
      %v3398 = vadd.f32 0.0, %v3397
      %v3399 = vpop.f32.mrf.mxu0
      %v3400 = vadd.f32 0.0, %v3399
      %v3401 = vpop.f32.mrf.mxu0
      %v3402 = vadd.f32 0.0, %v3401
      %v3403 = vpop.f32.mrf.mxu0
      %v3404 = vadd.f32 0.0, %v3403
      %3405 = vdwg.mxu0
      %3406 = vmatprep.subr.bf16.mxu0 0
      %3407 = vmatpush1.bf16.msra.mxu0 0
      %3408 = vmatprep.subr.bf16.mxu0 0
      %3409 = vmatpush1.bf16.msra.mxu0 0
      %3410 = vmatprep.subr.bf16.mxu0 0
      %3411 = vmatpush1.bf16.msra.mxu0 0
      %3412 = vmatprep.subr.bf16.mxu0 0
      %3413 = vmatpush1.bf16.msra.mxu0 0
      %3414 = vmatprep.subr.bf16.mxu0 %v3338
      %3415 = vmatpush1.bf16.msra.mxu0 %v3337
      %3416 = vmatprep.subr.bf16.mxu0 %v3333
      %3417 = vmatpush1.bf16.msra.mxu0 %v3332
      %3418 = vmatprep.subr.bf16.mxu0 %v3328
      %3419 = vmatpush1.bf16.msra.mxu0 %v3327
      %3420 = vmatprep.subr.bf16.mxu0 %v3323
      %3421 = vmatpush1.bf16.msra.mxu0 %v3322
      %3422 = vmatprep.subr.bf16.mxu0 0
      %3423 = vmatpush2.bf16.msra.mxu0 0
      %3424 = vmatprep.subr.bf16.mxu0 0
      %3425 = vmatpush2.bf16.msra.mxu0 0
      %3426 = vmatprep.subr.bf16.mxu0 0
      %3427 = vmatpush2.bf16.msra.mxu0 0
      %3428 = vmatprep.subr.bf16.mxu0 0
      %3429 = vmatpush2.bf16.msra.mxu0 0
      %3430 = vmatprep.subr.bf16.mxu0 0
      %3431 = vmatpush2.bf16.msra.mxu0 0
      %3432 = vmatprep.subr.bf16.mxu0 0
      %3433 = vmatpush2.bf16.msra.mxu0 0
      %3434 = vmatprep.subr.bf16.mxu0 0
      %3435 = vmatpush2.bf16.msra.mxu0 0
      %3436 = vmatprep.subr.bf16.mxu0 0
      %3437 = vmatpush2.bf16.msra.mxu0 0
      %3438 = vmatprep.mubr.bf16.mxu0 0
      %3439 = vmatmul.mubr.bf16.gmra.mxu0 %v3361
      %v3440 = vpop.f32.mrf.mxu0
      %v3441 = vadd.f32 0.0, %v3440
      %v3442 = vpop.f32.mrf.mxu0
      %v3443 = vadd.f32 0.0, %v3442
      %v3444 = vpop.f32.mrf.mxu0
      %v3445 = vadd.f32 0.0, %v3444
      %v3446 = vpop.f32.mrf.mxu0
      %v3447 = vadd.f32 0.0, %v3446
      %3448 = vdwg.mxu0
      %3449 = vmatprep.subr.bf16.mxu0 0
      %3450 = vmatpush1.bf16.msra.mxu0 0
      %3451 = vmatprep.subr.bf16.mxu0 0
      %3452 = vmatpush1.bf16.msra.mxu0 0
      %3453 = vmatprep.subr.bf16.mxu0 0
      %3454 = vmatpush1.bf16.msra.mxu0 0
      %3455 = vmatprep.subr.bf16.mxu0 0
      %3456 = vmatpush1.bf16.msra.mxu0 0
      %3457 = vmatprep.subr.bf16.mxu0 0
      %3458 = vmatpush1.bf16.msra.mxu0 %v3339
      %3459 = vmatprep.subr.bf16.mxu0 0
      %3460 = vmatpush1.bf16.msra.mxu0 %v3334
      %3461 = vmatprep.subr.bf16.mxu0 0
      %3462 = vmatpush1.bf16.msra.mxu0 %v3329
      %3463 = vmatprep.subr.bf16.mxu0 0
      %3464 = vmatpush1.bf16.msra.mxu0 %v3324
      %3465 = vmatprep.subr.bf16.mxu0 0
      %3466 = vmatpush2.bf16.msra.mxu0 0
      %3467 = vmatprep.subr.bf16.mxu0 0
      %3468 = vmatpush2.bf16.msra.mxu0 0
      %3469 = vmatprep.subr.bf16.mxu0 0
      %3470 = vmatpush2.bf16.msra.mxu0 0
      %3471 = vmatprep.subr.bf16.mxu0 0
      %3472 = vmatpush2.bf16.msra.mxu0 0
      %3473 = vmatprep.subr.bf16.mxu0 0
      %3474 = vmatpush2.bf16.msra.mxu0 0
      %3475 = vmatprep.subr.bf16.mxu0 0
      %3476 = vmatpush2.bf16.msra.mxu0 0
      %3477 = vmatprep.subr.bf16.mxu0 0
      %3478 = vmatpush2.bf16.msra.mxu0 0
      %3479 = vmatprep.subr.bf16.mxu0 0
      %3480 = vmatpush2.bf16.msra.mxu0 0
      %3481 = vmatprep.mubr.bf16.mxu0 0
      %3482 = vmatmul.mubr.bf16.gmra.mxu0 %v3361
      %v3483 = vpop.f32.mrf.mxu0
      %v3484 = vadd.f32 0.0, %v3483
      %v3485 = vpop.f32.mrf.mxu0
      %v3486 = vpop.f32.mrf.mxu0
      %v3487 = vadd.f32 0.0, %v3486
      %v3488 = vpop.f32.mrf.mxu0
      %3489 = vdwg.mxu0
      %vm3490 = vcmask 130048
      %3491 = vst.msk [vmem:[#allocation3] sm:$0xff] %vm3490, %v3398
      %3492 = vst.msk [vmem:[#allocation3 + $0x8] sm:$0xff] %vm3490, %v3402
      %3495 = vrot.lane.b32.xlu0 %v3398, 112
      %v3496 = vpop.permute.xlu0 %3495
      %3497 = vrot.lane.b32.xlu0 %v3402, 112
      %v3498 = vpop.permute.xlu0 %3497
      %3501 = vst.msk [vmem:[#allocation3 + $0x10] sm:$0xff] %vm3490, %v3496
      %3502 = vst.msk [vmem:[#allocation3 + $0x18] sm:$0xff] %vm3490, %v3498
      %3503 = vrot.lane.b32.xlu0 %v3398, 96
      %v3504 = vpop.permute.xlu0 %3503
      %3505 = vrot.lane.b32.xlu0 %v3402, 96
      %v3506 = vpop.permute.xlu0 %3505
      %3509 = vst.msk [vmem:[#allocation3 + $0x20] sm:$0xff] %vm3490, %v3504
      %3510 = vst.msk [vmem:[#allocation3 + $0x28] sm:$0xff] %vm3490, %v3506
      %3511 = vrot.lane.b32.xlu0 %v3398, 80
      %v3512 = vpop.permute.xlu0 %3511
      %3513 = vrot.lane.b32.xlu0 %v3402, 80
      %v3514 = vpop.permute.xlu0 %3513
      %3517 = vst.msk [vmem:[#allocation3 + $0x30] sm:$0xff] %vm3490, %v3512
      %3518 = vst.msk [vmem:[#allocation3 + $0x38] sm:$0xff] %vm3490, %v3514
      %3519 = vrot.lane.b32.xlu0 %v3398, 64
      %v3520 = vpop.permute.xlu0 %3519
      %3521 = vrot.lane.b32.xlu0 %v3402, 64
      %v3522 = vpop.permute.xlu0 %3521
      %3525 = vst.msk [vmem:[#allocation3 + $0x40] sm:$0xff] %vm3490, %v3520
      %3526 = vst.msk [vmem:[#allocation3 + $0x48] sm:$0xff] %vm3490, %v3522
      %3527 = vrot.lane.b32.xlu0 %v3398, 48
      %v3528 = vpop.permute.xlu0 %3527
      %3529 = vrot.lane.b32.xlu0 %v3402, 48
      %v3530 = vpop.permute.xlu0 %3529
      %3533 = vst.msk [vmem:[#allocation3 + $0x50] sm:$0xff] %vm3490, %v3528
      %3534 = vst.msk [vmem:[#allocation3 + $0x58] sm:$0xff] %vm3490, %v3530
      %3535 = vrot.lane.b32.xlu0 %v3398, 32
      %v3536 = vpop.permute.xlu0 %3535
      %3537 = vrot.lane.b32.xlu0 %v3402, 32
      %v3538 = vpop.permute.xlu0 %3537
      %3541 = vst.msk [vmem:[#allocation3 + $0x60] sm:$0xff] %vm3490, %v3536
      %3542 = vst.msk [vmem:[#allocation3 + $0x68] sm:$0xff] %vm3490, %v3538
      %3543 = vrot.lane.b32.xlu0 %v3398, 16
      %v3544 = vpop.permute.xlu0 %3543
      %3545 = vrot.lane.b32.xlu0 %v3402, 16
      %v3546 = vpop.permute.xlu0 %3545
      %3549 = vst.msk [vmem:[#allocation3 + $0x70] sm:$0xff] %vm3490, %v3544
      %3550 = vst.msk [vmem:[#allocation3 + $0x78] sm:$0xff] %vm3490, %v3546
      %3551 = vst.msk [vmem:[#allocation3 + $0x80] sm:$0xff] %vm3490, %v3400
      %3552 = vst.msk [vmem:[#allocation3 + $0x88] sm:$0xff] %vm3490, %v3404
      %3555 = vrot.lane.b32.xlu0 %v3400, 112
      %v3556 = vpop.permute.xlu0 %3555
      %3557 = vrot.lane.b32.xlu0 %v3404, 112
      %v3558 = vpop.permute.xlu0 %3557
      %3561 = vst.msk [vmem:[#allocation3 + $0x90] sm:$0xff] %vm3490, %v3556
      %3562 = vst.msk [vmem:[#allocation3 + $0x98] sm:$0xff] %vm3490, %v3558
      %3563 = vrot.lane.b32.xlu0 %v3400, 96
      %v3564 = vpop.permute.xlu0 %3563
      %3565 = vrot.lane.b32.xlu0 %v3404, 96
      %v3566 = vpop.permute.xlu0 %3565
      %3569 = vst.msk [vmem:[#allocation3 + $0xa0] sm:$0xff] %vm3490, %v3564
      %3570 = vst.msk [vmem:[#allocation3 + $0xa8] sm:$0xff] %vm3490, %v3566
      %3571 = vrot.lane.b32.xlu0 %v3400, 80
      %v3572 = vpop.permute.xlu0 %3571
      %3573 = vrot.lane.b32.xlu0 %v3404, 80
      %v3574 = vpop.permute.xlu0 %3573
      %3577 = vst.msk [vmem:[#allocation3 + $0xb0] sm:$0xff] %vm3490, %v3572
      %3578 = vst.msk [vmem:[#allocation3 + $0xb8] sm:$0xff] %vm3490, %v3574
      %3579 = vrot.lane.b32.xlu0 %v3400, 64
      %v3580 = vpop.permute.xlu0 %3579
      %3581 = vrot.lane.b32.xlu0 %v3404, 64
      %v3582 = vpop.permute.xlu0 %3581
      %3585 = vst.msk [vmem:[#allocation3 + $0xc0] sm:$0xff] %vm3490, %v3580
      %3586 = vst.msk [vmem:[#allocation3 + $0xc8] sm:$0xff] %vm3490, %v3582
      %3587 = vrot.lane.b32.xlu0 %v3400, 48
      %v3588 = vpop.permute.xlu0 %3587
      %3589 = vrot.lane.b32.xlu0 %v3404, 48
      %v3590 = vpop.permute.xlu0 %3589
      %3593 = vst.msk [vmem:[#allocation3 + $0xd0] sm:$0xff] %vm3490, %v3588
      %3594 = vst.msk [vmem:[#allocation3 + $0xd8] sm:$0xff] %vm3490, %v3590
      %3595 = vrot.lane.b32.xlu0 %v3400, 32
      %v3596 = vpop.permute.xlu0 %3595
      %3597 = vrot.lane.b32.xlu0 %v3404, 32
      %v3598 = vpop.permute.xlu0 %3597
      %3601 = vst.msk [vmem:[#allocation3 + $0xe0] sm:$0xff] %vm3490, %v3596
      %3602 = vst.msk [vmem:[#allocation3 + $0xe8] sm:$0xff] %vm3490, %v3598
      %3603 = vrot.lane.b32.xlu0 %v3400, 16
      %v3604 = vpop.permute.xlu0 %3603
      %3605 = vrot.lane.b32.xlu0 %v3404, 16
      %v3606 = vpop.permute.xlu0 %3605
      %3609 = vst.msk [vmem:[#allocation3 + $0xf0] sm:$0xff] %vm3490, %v3604
      %3610 = vst.msk [vmem:[#allocation3 + $0xf8] sm:$0xff] %vm3490, %v3606
      %3611 = vst.msk [vmem:[#allocation3 + $0x100] sm:$0xff] %vm3490, %v3441
      %3612 = vst.msk [vmem:[#allocation3 + $0x108] sm:$0xff] %vm3490, %v3445
      %3615 = vrot.lane.b32.xlu0 %v3441, 112
      %v3616 = vpop.permute.xlu0 %3615
      %3617 = vrot.lane.b32.xlu0 %v3445, 112
      %v3618 = vpop.permute.xlu0 %3617
      %3621 = vst.msk [vmem:[#allocation3 + $0x110] sm:$0xff] %vm3490, %v3616
      %3622 = vst.msk [vmem:[#allocation3 + $0x118] sm:$0xff] %vm3490, %v3618
      %3623 = vrot.lane.b32.xlu0 %v3441, 96
      %v3624 = vpop.permute.xlu0 %3623
      %3625 = vrot.lane.b32.xlu0 %v3445, 96
      %v3626 = vpop.permute.xlu0 %3625
      %3629 = vst.msk [vmem:[#allocation3 + $0x120] sm:$0xff] %vm3490, %v3624
      %3630 = vst.msk [vmem:[#allocation3 + $0x128] sm:$0xff] %vm3490, %v3626
      %3631 = vrot.lane.b32.xlu0 %v3441, 80
      %v3632 = vpop.permute.xlu0 %3631
      %3633 = vrot.lane.b32.xlu0 %v3445, 80
      %v3634 = vpop.permute.xlu0 %3633
      %3637 = vst.msk [vmem:[#allocation3 + $0x130] sm:$0xff] %vm3490, %v3632
      %3638 = vst.msk [vmem:[#allocation3 + $0x138] sm:$0xff] %vm3490, %v3634
      %3639 = vrot.lane.b32.xlu0 %v3441, 64
      %v3640 = vpop.permute.xlu0 %3639
      %3641 = vrot.lane.b32.xlu0 %v3445, 64
      %v3642 = vpop.permute.xlu0 %3641
      %3645 = vst.msk [vmem:[#allocation3 + $0x140] sm:$0xff] %vm3490, %v3640
      %3646 = vst.msk [vmem:[#allocation3 + $0x148] sm:$0xff] %vm3490, %v3642
      %3647 = vrot.lane.b32.xlu0 %v3441, 48
      %v3648 = vpop.permute.xlu0 %3647
      %3649 = vrot.lane.b32.xlu0 %v3445, 48
      %v3650 = vpop.permute.xlu0 %3649
      %3653 = vst.msk [vmem:[#allocation3 + $0x150] sm:$0xff] %vm3490, %v3648
      %3654 = vst.msk [vmem:[#allocation3 + $0x158] sm:$0xff] %vm3490, %v3650
      %3655 = vrot.lane.b32.xlu0 %v3441, 32
      %v3656 = vpop.permute.xlu0 %3655
      %3657 = vrot.lane.b32.xlu0 %v3445, 32
      %v3658 = vpop.permute.xlu0 %3657
      %3661 = vst.msk [vmem:[#allocation3 + $0x160] sm:$0xff] %vm3490, %v3656
      %3662 = vst.msk [vmem:[#allocation3 + $0x168] sm:$0xff] %vm3490, %v3658
      %3663 = vrot.lane.b32.xlu0 %v3441, 16
      %v3664 = vpop.permute.xlu0 %3663
      %3665 = vrot.lane.b32.xlu0 %v3445, 16
      %v3666 = vpop.permute.xlu0 %3665
      %3669 = vst.msk [vmem:[#allocation3 + $0x170] sm:$0xff] %vm3490, %v3664
      %3670 = vst.msk [vmem:[#allocation3 + $0x178] sm:$0xff] %vm3490, %v3666
      %3671 = vst.msk [vmem:[#allocation3 + $0x180] sm:$0xff] %vm3490, %v3443
      %3672 = vst.msk [vmem:[#allocation3 + $0x188] sm:$0xff] %vm3490, %v3447
      %3675 = vrot.lane.b32.xlu0 %v3443, 112
      %v3676 = vpop.permute.xlu0 %3675
      %3677 = vrot.lane.b32.xlu0 %v3447, 112
      %v3678 = vpop.permute.xlu0 %3677
      %3681 = vst.msk [vmem:[#allocation3 + $0x190] sm:$0xff] %vm3490, %v3676
      %3682 = vst.msk [vmem:[#allocation3 + $0x198] sm:$0xff] %vm3490, %v3678
      %3683 = vrot.lane.b32.xlu0 %v3443, 96
      %v3684 = vpop.permute.xlu0 %3683
      %3685 = vrot.lane.b32.xlu0 %v3447, 96
      %v3686 = vpop.permute.xlu0 %3685
      %3689 = vst.msk [vmem:[#allocation3 + $0x1a0] sm:$0xff] %vm3490, %v3684
      %3690 = vst.msk [vmem:[#allocation3 + $0x1a8] sm:$0xff] %vm3490, %v3686
      %3691 = vrot.lane.b32.xlu0 %v3443, 80
      %v3692 = vpop.permute.xlu0 %3691
      %3693 = vrot.lane.b32.xlu0 %v3447, 80
      %v3694 = vpop.permute.xlu0 %3693
      %3697 = vst.msk [vmem:[#allocation3 + $0x1b0] sm:$0xff] %vm3490, %v3692
      %3698 = vst.msk [vmem:[#allocation3 + $0x1b8] sm:$0xff] %vm3490, %v3694
      %3699 = vrot.lane.b32.xlu0 %v3443, 64
      %v3700 = vpop.permute.xlu0 %3699
      %3701 = vrot.lane.b32.xlu0 %v3447, 64
      %v3702 = vpop.permute.xlu0 %3701
      %3705 = vst.msk [vmem:[#allocation3 + $0x1c0] sm:$0xff] %vm3490, %v3700
      %3706 = vst.msk [vmem:[#allocation3 + $0x1c8] sm:$0xff] %vm3490, %v3702
      %3707 = vrot.lane.b32.xlu0 %v3443, 48
      %v3708 = vpop.permute.xlu0 %3707
      %3709 = vrot.lane.b32.xlu0 %v3447, 48
      %v3710 = vpop.permute.xlu0 %3709
      %3713 = vst.msk [vmem:[#allocation3 + $0x1d0] sm:$0xff] %vm3490, %v3708
      %3714 = vst.msk [vmem:[#allocation3 + $0x1d8] sm:$0xff] %vm3490, %v3710
      %3715 = vrot.lane.b32.xlu0 %v3443, 32
      %v3716 = vpop.permute.xlu0 %3715
      %3717 = vrot.lane.b32.xlu0 %v3447, 32
      %v3718 = vpop.permute.xlu0 %3717
      %3721 = vst.msk [vmem:[#allocation3 + $0x1e0] sm:$0xff] %vm3490, %v3716
      %3722 = vst.msk [vmem:[#allocation3 + $0x1e8] sm:$0xff] %vm3490, %v3718
      %3723 = vrot.lane.b32.xlu0 %v3443, 16
      %v3724 = vpop.permute.xlu0 %3723
      %3725 = vrot.lane.b32.xlu0 %v3447, 16
      %v3726 = vpop.permute.xlu0 %3725
      %3729 = vst.msk [vmem:[#allocation3 + $0x1f0] sm:$0xff] %vm3490, %v3724
      %3730 = vst.msk [vmem:[#allocation3 + $0x1f8] sm:$0xff] %vm3490, %v3726
      %3731 = vst.msk [vmem:[#allocation3 + $0x200] sm:$0xff] %vm3490, %v3484
      %3732 = vst.msk [vmem:[#allocation3 + $0x208] sm:$0xff] %vm3490, %v3487
      %3735 = vrot.lane.b32.xlu0 %v3484, 112
      %v3736 = vpop.permute.xlu0 %3735
      %3737 = vrot.lane.b32.xlu0 %v3487, 112
      %v3738 = vpop.permute.xlu0 %3737
      %3741 = vst.msk [vmem:[#allocation3 + $0x210] sm:$0xff] %vm3490, %v3736
      %3742 = vst.msk [vmem:[#allocation3 + $0x218] sm:$0xff] %vm3490, %v3738
      %3743 = vrot.lane.b32.xlu0 %v3484, 96
      %v3744 = vpop.permute.xlu0 %3743
      %3745 = vrot.lane.b32.xlu0 %v3487, 96
      %v3746 = vpop.permute.xlu0 %3745
      %3749 = vst.msk [vmem:[#allocation3 + $0x220] sm:$0xff] %vm3490, %v3744
      %3750 = vst.msk [vmem:[#allocation3 + $0x228] sm:$0xff] %vm3490, %v3746
      %3751 = vrot.lane.b32.xlu0 %v3484, 80
      %v3752 = vpop.permute.xlu0 %3751
      %3753 = vrot.lane.b32.xlu0 %v3487, 80
      %v3754 = vpop.permute.xlu0 %3753
      %3757 = vst.msk [vmem:[#allocation3 + $0x230] sm:$0xff] %vm3490, %v3752
      %3758 = vst.msk [vmem:[#allocation3 + $0x238] sm:$0xff] %vm3490, %v3754
      %v3759 = vld [vmem:[%s7] sm:$0xff]
      %v3760 = vld [vmem:[%s7 + $0x8] sm:$0xff]
      %v3761 = vld [vmem:[%s7 + $0x10] sm:$0xf]
      %v3762 = vld [vmem:[%s7 + $0x14] sm:$0xff]
      %v3763 = vld [vmem:[%s7 + $0x1c] sm:$0xff]
      %v3764 = vld [vmem:[%s7 + $0x24] sm:$0xf]
      %v3765 = vld [vmem:[%s7 + $0x28] sm:$0xff]
      %v3766 = vld [vmem:[%s7 + $0x30] sm:$0xff]
      %v3767 = vld [vmem:[%s7 + $0x38] sm:$0xf]
      %v3768 = vld [vmem:[%s7 + $0x3c] sm:$0xff]
      %v3769 = vld [vmem:[%s7 + $0x44] sm:$0xff]
      %v3770 = vld [vmem:[%s7 + $0x4c] sm:$0xf]
      %v3771 = vld [vmem:[#allocation3] sm:$0xff]
      %v3772 = vld [vmem:[#allocation3 + $0x8] sm:$0xff]
      %v3773 = vld [vmem:[#allocation3 + $0x10] sm:$0xff]
      %v3774 = vld [vmem:[#allocation3 + $0x18] sm:$0xff]
      %v3775 = vld [vmem:[#allocation3 + $0x20] sm:$0xff]
      %v3776 = vld [vmem:[#allocation3 + $0x28] sm:$0xff]
      %v3777 = vld [vmem:[#allocation3 + $0x30] sm:$0xff]
      %v3778 = vld [vmem:[#allocation3 + $0x38] sm:$0xff]
      %v3779 = vld [vmem:[#allocation3 + $0x40] sm:$0xff]
      %v3780 = vld [vmem:[#allocation3 + $0x48] sm:$0xff]
      %v3781 = vld [vmem:[#allocation3 + $0x50] sm:$0xff]
      %v3782 = vld [vmem:[#allocation3 + $0x58] sm:$0xff]
      %v3783 = vld [vmem:[#allocation3 + $0x60] sm:$0xff]
      %v3784 = vld [vmem:[#allocation3 + $0x68] sm:$0xff]
      %v3785 = vld [vmem:[#allocation3 + $0x70] sm:$0xff]
      %v3786 = vld [vmem:[#allocation3 + $0x78] sm:$0xff]
      %v3787 = vld [vmem:[#allocation3 + $0x80] sm:$0xff]
      %v3788 = vld [vmem:[#allocation3 + $0x88] sm:$0xff]
      %v3789 = vld [vmem:[#allocation3 + $0x90] sm:$0xff]
      %v3790 = vld [vmem:[#allocation3 + $0x98] sm:$0xff]
      %v3791 = vld [vmem:[#allocation3 + $0xa0] sm:$0xff]
      %v3792 = vld [vmem:[#allocation3 + $0xa8] sm:$0xff]
      %v3793 = vld [vmem:[#allocation3 + $0xb0] sm:$0xff]
      %v3794 = vld [vmem:[#allocation3 + $0xb8] sm:$0xff]
      %v3795 = vld [vmem:[#allocation3 + $0xc0] sm:$0xff]
      %v3796 = vld [vmem:[#allocation3 + $0xc8] sm:$0xff]
      %v3797 = vld [vmem:[#allocation3 + $0xd0] sm:$0xff]
      %v3798 = vld [vmem:[#allocation3 + $0xd8] sm:$0xff]
      %v3799 = vld [vmem:[#allocation3 + $0xe0] sm:$0xff]
      %v3800 = vld [vmem:[#allocation3 + $0xe8] sm:$0xff]
      %v3801 = vld [vmem:[#allocation3 + $0xf0] sm:$0xff]
      %v3802 = vld [vmem:[#allocation3 + $0xf8] sm:$0xff]
      %v3803 = vld [vmem:[#allocation3 + $0x100] sm:$0xff]
      %v3804 = vld [vmem:[#allocation3 + $0x108] sm:$0xff]
      %v3805 = vld [vmem:[#allocation3 + $0x110] sm:$0xff]
      %v3806 = vld [vmem:[#allocation3 + $0x118] sm:$0xff]
      %v3807 = vld [vmem:[#allocation3 + $0x120] sm:$0xff]
      %v3808 = vld [vmem:[#allocation3 + $0x128] sm:$0xff]
      %v3809 = vld [vmem:[#allocation3 + $0x130] sm:$0xff]
      %v3810 = vld [vmem:[#allocation3 + $0x138] sm:$0xff]
      %v3811 = vld [vmem:[#allocation3 + $0x140] sm:$0xff]
      %v3812 = vld [vmem:[#allocation3 + $0x148] sm:$0xff]
      %v3813 = vld [vmem:[#allocation3 + $0x150] sm:$0xff]
      %v3814 = vld [vmem:[#allocation3 + $0x158] sm:$0xff]
      %v3815 = vld [vmem:[#allocation3 + $0x160] sm:$0xff]
      %v3816 = vld [vmem:[#allocation3 + $0x168] sm:$0xff]
      %v3817 = vld [vmem:[#allocation3 + $0x170] sm:$0xff]
      %v3818 = vld [vmem:[#allocation3 + $0x178] sm:$0xff]
      %v3819 = vld [vmem:[#allocation3 + $0x180] sm:$0xff]
      %v3820 = vld [vmem:[#allocation3 + $0x188] sm:$0xff]
      %v3821 = vld [vmem:[#allocation3 + $0x190] sm:$0xff]
      %v3822 = vld [vmem:[#allocation3 + $0x198] sm:$0xff]
      %v3823 = vld [vmem:[#allocation3 + $0x1a0] sm:$0xff]
      %v3824 = vld [vmem:[#allocation3 + $0x1a8] sm:$0xff]
      %v3825 = vld [vmem:[#allocation3 + $0x1b0] sm:$0xff]
      %v3826 = vld [vmem:[#allocation3 + $0x1b8] sm:$0xff]
      %v3827 = vld [vmem:[#allocation3 + $0x1c0] sm:$0xff]
      %v3828 = vld [vmem:[#allocation3 + $0x1c8] sm:$0xff]
      %v3829 = vld [vmem:[#allocation3 + $0x1d0] sm:$0xff]
      %v3830 = vld [vmem:[#allocation3 + $0x1d8] sm:$0xff]
      %v3831 = vld [vmem:[#allocation3 + $0x1e0] sm:$0xff]
      %v3832 = vld [vmem:[#allocation3 + $0x1e8] sm:$0xff]
      %v3833 = vld [vmem:[#allocation3 + $0x1f0] sm:$0xff]
      %v3834 = vld [vmem:[#allocation3 + $0x1f8] sm:$0xff]
      %v3835 = vld [vmem:[#allocation3 + $0x200] sm:$0xff]
      %v3836 = vld [vmem:[#allocation3 + $0x208] sm:$0xff]
      %v3837 = vld [vmem:[#allocation3 + $0x210] sm:$0xff]
      %v3838 = vld [vmem:[#allocation3 + $0x218] sm:$0xff]
      %v3839 = vld [vmem:[#allocation3 + $0x220] sm:$0xff]
      %v3840 = vld [vmem:[#allocation3 + $0x228] sm:$0xff]
      %v3841 = vld [vmem:[#allocation3 + $0x230] sm:$0xff]
      %v3842 = vld [vmem:[#allocation3 + $0x238] sm:$0xff]
      %v3843 = vpack.c.bf16 %v3772, %v3771
      %v3844 = vpack.c.bf16 %v3774, %v3773
      %v3845 = vpack.c.bf16 %v3776, %v3775
      %v3846 = vpack.c.bf16 %v3778, %v3777
      %v3847 = vpack.c.bf16 %v3780, %v3779
      %v3848 = vpack.c.bf16 %v3782, %v3781
      %v3849 = vpack.c.bf16 %v3784, %v3783
      %v3850 = vpack.c.bf16 %v3786, %v3785
      %v3851 = vpack.c.bf16 %v3788, %v3787
      %v3852 = vpack.c.bf16 %v3790, %v3789
      %v3853 = vpack.c.bf16 %v3792, %v3791
      %v3854 = vpack.c.bf16 %v3794, %v3793
      %v3855 = vpack.c.bf16 %v3796, %v3795
      %v3856 = vpack.c.bf16 %v3798, %v3797
      %v3857 = vpack.c.bf16 %v3800, %v3799
      %v3858 = vpack.c.bf16 %v3802, %v3801
      %v3859 = vpack.c.bf16 %v3804, %v3803
      %v3860 = vpack.c.bf16 %v3806, %v3805
      %v3861 = vpack.c.bf16 %v3808, %v3807
      %v3862 = vpack.c.bf16 %v3810, %v3809
      %v3863 = vpack.c.bf16 %v3812, %v3811
      %v3864 = vpack.c.bf16 %v3814, %v3813
      %v3865 = vpack.c.bf16 %v3816, %v3815
      %v3866 = vpack.c.bf16 %v3818, %v3817
      %v3867 = vpack.c.bf16 %v3820, %v3819
      %v3868 = vpack.c.bf16 %v3822, %v3821
      %v3869 = vpack.c.bf16 %v3824, %v3823
      %v3870 = vpack.c.bf16 %v3826, %v3825
      %v3871 = vpack.c.bf16 %v3828, %v3827
      %v3872 = vpack.c.bf16 %v3830, %v3829
      %v3873 = vpack.c.bf16 %v3832, %v3831
      %v3874 = vpack.c.bf16 %v3834, %v3833
      %v3875 = vpack.c.bf16 %v3836, %v3835
      %v3876 = vpack.c.bf16 %v3838, %v3837
      %v3877 = vpack.c.bf16 %v3840, %v3839
      %v3878 = vpack.c.bf16 %v3842, %v3841
      %v3879 = vld [vmem:[%s8] sm:$0xff]
      %v3880 = vld [vmem:[%s8 + $0x8] sm:$0xff]
      %v3881 = vld [vmem:[%s8 + $0x10] sm:$0xff]
      %v3882 = vld [vmem:[%s8 + $0x18] sm:$0xff]
      %3884 = vset.pattern.permute.xlu0 0
      %3885 = vperm.xlu0 %3884, %v3879
      %v3886 = vpop.permute.xlu0 %3885
      %3889 = vset.pattern.permute.xlu0 0
      %3890 = vperm.xlu0 %3889, %v3880
      %v3891 = vpop.permute.xlu0 %3890
      %3894 = vset.pattern.permute.xlu0 0
      %3895 = vperm.xlu0 %3894, %v3881
      %v3896 = vpop.permute.xlu0 %3895
      %3899 = vset.pattern.permute.xlu0 0
      %3900 = vperm.xlu0 %3899, %v3882
      %v3901 = vpop.permute.xlu0 %3900
      %v3915 = vunpack.c.l.b16 %v3759
      %v3916 = vunpack.c.h.b16 %v3759
      %v3917 = vunpack.c.l.b16 %v3760
      %v3918 = vunpack.c.h.b16 %v3760
      %v3919 = vunpack.c.l.b16 %v3761
      %v3920 = vunpack.c.l.b16 %v3762
      %v3921 = vunpack.c.h.b16 %v3762
      %v3922 = vunpack.c.l.b16 %v3763
      %v3923 = vunpack.c.h.b16 %v3763
      %v3924 = vunpack.c.l.b16 %v3764
      %v3925 = vunpack.c.l.b16 %v3765
      %v3926 = vunpack.c.h.b16 %v3765
      %v3927 = vunpack.c.l.b16 %v3766
      %v3928 = vunpack.c.h.b16 %v3766
      %v3929 = vunpack.c.l.b16 %v3767
      %v3930 = vunpack.c.l.b16 %v3768
      %v3931 = vunpack.c.h.b16 %v3768
      %v3932 = vunpack.c.l.b16 %v3769
      %v3933 = vunpack.c.h.b16 %v3769
      %v3934 = vunpack.c.l.b16 %v3770
      %v3935 = vpack.c.b16 %v3920, %v3915
      %v3936 = vpack.c.b16 %v3921, %v3916
      %v3937 = vpack.c.b16 %v3922, %v3917
      %v3938 = vpack.c.b16 %v3923, %v3918
      %v3939 = vpack.c.b16 %v3924, %v3919
      %v3940 = vpack.c.b16 %v3930, %v3925
      %v3941 = vpack.c.b16 %v3931, %v3926
      %v3942 = vpack.c.b16 %v3932, %v3927
      %v3943 = vpack.c.b16 %v3933, %v3928
      %v3944 = vpack.c.b16 %v3934, %v3929
      %v3954 = vsel %vm2920, %v3939, 0
      %v3957 = vsel %vm2920, %v3944, 0
      %3959 = vmatprep.subr.bf16.mxu0 0
      %3960 = vmatpush1.bf16.msra.mxu0 %v3850
      %3961 = vmatprep.subr.bf16.mxu0 0
      %3962 = vmatpush1.bf16.msra.mxu0 %v3849
      %3963 = vmatprep.subr.bf16.mxu0 0
      %3964 = vmatpush1.bf16.msra.mxu0 %v3848
      %3965 = vmatprep.subr.bf16.mxu0 0
      %3966 = vmatpush1.bf16.msra.mxu0 %v3847
      %3967 = vmatprep.subr.bf16.mxu0 0
      %3968 = vmatpush1.bf16.msra.mxu0 %v3846
      %3969 = vmatprep.subr.bf16.mxu0 0
      %3970 = vmatpush1.bf16.msra.mxu0 %v3845
      %3971 = vmatprep.subr.bf16.mxu0 0
      %3972 = vmatpush1.bf16.msra.mxu0 %v3844
      %3973 = vmatprep.subr.bf16.mxu0 0
      %3974 = vmatpush1.bf16.msra.mxu0 %v3843
      %3975 = vmatprep.subr.bf16.mxu0 0
      %3976 = vmatpush2.bf16.msra.mxu0 %v3858
      %3977 = vmatprep.subr.bf16.mxu0 0
      %3978 = vmatpush2.bf16.msra.mxu0 %v3857
      %3979 = vmatprep.subr.bf16.mxu0 0
      %3980 = vmatpush2.bf16.msra.mxu0 %v3856
      %3981 = vmatprep.subr.bf16.mxu0 0
      %3982 = vmatpush2.bf16.msra.mxu0 %v3855
      %3983 = vmatprep.subr.bf16.mxu0 0
      %3984 = vmatpush2.bf16.msra.mxu0 %v3854
      %3985 = vmatprep.subr.bf16.mxu0 0
      %3986 = vmatpush2.bf16.msra.mxu0 %v3853
      %3987 = vmatprep.subr.bf16.mxu0 0
      %3988 = vmatpush2.bf16.msra.mxu0 %v3852
      %3989 = vmatprep.subr.bf16.mxu0 0
      %3990 = vmatpush2.bf16.msra.mxu0 %v3851
      %3991 = vmatprep.mubr.bf16.mxu0 %v3936
      %3992 = vmatmul.mubr.bf16.gmra.mxu0 %v3935
      %v3993 = vpop.f32.mrf.mxu0
      %v3994 = vadd.f32 %v3886, %v3993
      %v3995 = vpop.f32.mrf.mxu0
      %v3996 = vpop.f32.mrf.mxu0
      %v3997 = vadd.f32 %v3891, %v3996
      %v3998 = vpop.f32.mrf.mxu0
      %3999 = vmatprep.mubr.bf16.mxu0 %v3941
      %4000 = vmatmul.mubr.bf16.gmra.mxu0 %v3940
      %v4001 = vpop.f32.mrf.mxu0
      %v4002 = vadd.f32 %v3896, %v4001
      %v4003 = vpop.f32.mrf.mxu0
      %v4004 = vpop.f32.mrf.mxu0
      %v4005 = vadd.f32 %v3901, %v4004
      %v4006 = vpop.f32.mrf.mxu0
      %4007 = vdwg.mxu0
      %4008 = vmatprep.subr.bf16.mxu0 0
      %4009 = vmatpush1.bf16.msra.mxu0 %v3866
      %4010 = vmatprep.subr.bf16.mxu0 0
      %4011 = vmatpush1.bf16.msra.mxu0 %v3865
      %4012 = vmatprep.subr.bf16.mxu0 0
      %4013 = vmatpush1.bf16.msra.mxu0 %v3864
      %4014 = vmatprep.subr.bf16.mxu0 0
      %4015 = vmatpush1.bf16.msra.mxu0 %v3863
      %4016 = vmatprep.subr.bf16.mxu0 0
      %4017 = vmatpush1.bf16.msra.mxu0 %v3862
      %4018 = vmatprep.subr.bf16.mxu0 0
      %4019 = vmatpush1.bf16.msra.mxu0 %v3861
      %4020 = vmatprep.subr.bf16.mxu0 0
      %4021 = vmatpush1.bf16.msra.mxu0 %v3860
      %4022 = vmatprep.subr.bf16.mxu0 0
      %4023 = vmatpush1.bf16.msra.mxu0 %v3859
      %4024 = vmatprep.subr.bf16.mxu0 0
      %4025 = vmatpush2.bf16.msra.mxu0 %v3874
      %4026 = vmatprep.subr.bf16.mxu0 0
      %4027 = vmatpush2.bf16.msra.mxu0 %v3873
      %4028 = vmatprep.subr.bf16.mxu0 0
      %4029 = vmatpush2.bf16.msra.mxu0 %v3872
      %4030 = vmatprep.subr.bf16.mxu0 0
      %4031 = vmatpush2.bf16.msra.mxu0 %v3871
      %4032 = vmatprep.subr.bf16.mxu0 0
      %4033 = vmatpush2.bf16.msra.mxu0 %v3870
      %4034 = vmatprep.subr.bf16.mxu0 0
      %4035 = vmatpush2.bf16.msra.mxu0 %v3869
      %4036 = vmatprep.subr.bf16.mxu0 0
      %4037 = vmatpush2.bf16.msra.mxu0 %v3868
      %4038 = vmatprep.subr.bf16.mxu0 0
      %4039 = vmatpush2.bf16.msra.mxu0 %v3867
      %4040 = vmatprep.mubr.bf16.mxu0 %v3938
      %4041 = vmatmul.mubr.bf16.gmra.mxu0 %v3937
      %v4042 = vpop.f32.mrf.mxu0
      %v4043 = vadd.f32 %v3994, %v4042
      %v4044 = vpop.f32.mrf.mxu0
      %v4045 = vpop.f32.mrf.mxu0
      %v4046 = vadd.f32 %v3997, %v4045
      %v4047 = vpop.f32.mrf.mxu0
      %4048 = vmatprep.mubr.bf16.mxu0 %v3943
      %4049 = vmatmul.mubr.bf16.gmra.mxu0 %v3942
      %v4050 = vpop.f32.mrf.mxu0
      %v4051 = vadd.f32 %v4002, %v4050
      %v4052 = vpop.f32.mrf.mxu0
      %v4053 = vpop.f32.mrf.mxu0
      %v4054 = vadd.f32 %v4005, %v4053
      %v4055 = vpop.f32.mrf.mxu0
      %4056 = vdwg.mxu0
      %4057 = vmatprep.subr.bf16.mxu0 0
      %4058 = vmatpush1.bf16.msra.mxu0 0
      %4059 = vmatprep.subr.bf16.mxu0 0
      %4060 = vmatpush1.bf16.msra.mxu0 0
      %4061 = vmatprep.subr.bf16.mxu0 0
      %4062 = vmatpush1.bf16.msra.mxu0 0
      %4063 = vmatprep.subr.bf16.mxu0 0
      %4064 = vmatpush1.bf16.msra.mxu0 0
      %4065 = vmatprep.subr.bf16.mxu0 0
      %4066 = vmatpush1.bf16.msra.mxu0 %v3878
      %4067 = vmatprep.subr.bf16.mxu0 0
      %4068 = vmatpush1.bf16.msra.mxu0 %v3877
      %4069 = vmatprep.subr.bf16.mxu0 0
      %4070 = vmatpush1.bf16.msra.mxu0 %v3876
      %4071 = vmatprep.subr.bf16.mxu0 0
      %4072 = vmatpush1.bf16.msra.mxu0 %v3875
      %4073 = vmatprep.subr.bf16.mxu0 0
      %4074 = vmatpush2.bf16.msra.mxu0 0
      %4075 = vmatprep.subr.bf16.mxu0 0
      %4076 = vmatpush2.bf16.msra.mxu0 0
      %4077 = vmatprep.subr.bf16.mxu0 0
      %4078 = vmatpush2.bf16.msra.mxu0 0
      %4079 = vmatprep.subr.bf16.mxu0 0
      %4080 = vmatpush2.bf16.msra.mxu0 0
      %4081 = vmatprep.subr.bf16.mxu0 0
      %4082 = vmatpush2.bf16.msra.mxu0 0
      %4083 = vmatprep.subr.bf16.mxu0 0
      %4084 = vmatpush2.bf16.msra.mxu0 0
      %4085 = vmatprep.subr.bf16.mxu0 0
      %4086 = vmatpush2.bf16.msra.mxu0 0
      %4087 = vmatprep.subr.bf16.mxu0 0
      %4088 = vmatpush2.bf16.msra.mxu0 0
      %4089 = vmatprep.mubr.bf16.mxu0 0
      %4090 = vmatmul.mubr.bf16.gmra.mxu0 %v3954
      %v4091 = vpop.f32.mrf.mxu0
      %v4092 = vadd.f32 %v4043, %v4091
      %v4093 = vpop.f32.mrf.mxu0
      %v4094 = vpop.f32.mrf.mxu0
      %v4095 = vadd.f32 %v4046, %v4094
      %v4096 = vpop.f32.mrf.mxu0
      %4097 = vmatprep.mubr.bf16.mxu0 0
      %4098 = vmatmul.mubr.bf16.gmra.mxu0 %v3957
      %v4099 = vpop.f32.mrf.mxu0
      %v4100 = vadd.f32 %v4051, %v4099
      %v4101 = vpop.f32.mrf.mxu0
      %v4102 = vpop.f32.mrf.mxu0
      %v4103 = vadd.f32 %v4054, %v4102
      %v4104 = vpop.f32.mrf.mxu0
      %4105 = vdwg.mxu0
      %v4106 = vsel %vm3490, %v4092, 0.0
      %4107 = vadd.xlane.f32.xlu0 %v4106
      %v4108 = vpop.xlane.xlu0 %4107
      %v4109 = vsel %vm3490, %v4095, 0.0
      %4110 = vadd.xlane.f32.xlu0 %v4109
      %v4111 = vpop.xlane.xlu0 %4110
      %v4112 = vsel %vm3490, %v4100, 0.0
      %4113 = vadd.xlane.f32.xlu0 %v4112
      %v4114 = vpop.xlane.xlu0 %4113
      %v4115 = vsel %vm3490, %v4103, 0.0
      %4116 = vadd.xlane.f32.xlu0 %v4115
      %v4117 = vpop.xlane.xlu0 %4116
      %v4118 = vrcp.pop 16.0
      %v4119 = vmul.f32 %v4108, %v4118
      %v4120 = vmul.f32 %v4111, %v4118
      %v4121 = vmul.f32 %v4114, %v4118
      %v4122 = vmul.f32 %v4117, %v4118
      %v4123 = vsub.f32 %v4092, %v4119
      %v4124 = vsub.f32 %v4095, %v4120
      %v4125 = vsub.f32 %v4100, %v4121
      %v4126 = vsub.f32 %v4103, %v4122
      %v4127 = vmul.f32 %v4123, %v4123
      %v4128 = vmul.f32 %v4124, %v4124
      %v4129 = vmul.f32 %v4125, %v4125
      %v4130 = vmul.f32 %v4126, %v4126
      %v4131 = vsel %vm3490, %v4127, 0.0
      %4132 = vadd.xlane.f32.xlu0 %v4131
      %v4133 = vpop.xlane.xlu0 %4132
      %v4134 = vsel %vm3490, %v4128, 0.0
      %4135 = vadd.xlane.f32.xlu0 %v4134
      %v4136 = vpop.xlane.xlu0 %4135
      %v4137 = vsel %vm3490, %v4129, 0.0
      %4138 = vadd.xlane.f32.xlu0 %v4137
      %v4139 = vpop.xlane.xlu0 %4138
      %v4140 = vsel %vm3490, %v4130, 0.0
      %4141 = vadd.xlane.f32.xlu0 %v4140
      %v4142 = vpop.xlane.xlu0 %4141
      %v4143 = vmul.f32 %v4133, %v4118
      %v4144 = vmul.f32 %v4136, %v4118
      %v4145 = vmul.f32 %v4139, %v4118
      %v4146 = vmul.f32 %v4142, %v4118
      %v4147 = vadd.f32 %v4143, 1e-05
      %v4148 = vadd.f32 %v4144, 1e-05
      %v4149 = vadd.f32 %v4145, 1e-05
      %v4150 = vadd.f32 %v4146, 1e-05
      %v4151 = vrsqrt.pop %v4147
      %v4152 = vrsqrt.pop %v4148
      %v4153 = vrsqrt.pop %v4149
      %v4154 = vrsqrt.pop %v4150
      %v4155 = vmul.f32 %v4123, %v4151
      %v4156 = vmul.f32 %v4124, %v4152
      %v4157 = vmul.f32 %v4125, %v4153
      %v4158 = vmul.f32 %v4126, %v4154
      %v4159 = vmax.f32 %v4155, 0.0
      %v4160 = vmax.f32 %v4156, 0.0
      %v4161 = vmax.f32 %v4157, 0.0
      %v4162 = vmax.f32 %v4158, 0.0
      %v4163 = vpack.c.bf16 %v4160, %v4159
      %v4164 = vpack.c.bf16 %v4162, %v4161
      %v4165 = vld [vmem:[%s9] sm:$0xff]
      %v4166 = vld [vmem:[%s9 + $0x8] sm:$0xff]
      %v4169 = vunpack.c.l.b16 %v4165
      %v4170 = vunpack.c.h.b16 %v4165
      %v4171 = vunpack.c.l.b16 %v4166
      %v4172 = vunpack.c.h.b16 %v4166
      %v4173 = vpack.c.b16 %v4171, %v4169
      %v4174 = vpack.c.b16 %v4172, %v4170
      %v4178 = vsel %vm3490, %v4163, 0
      %v4181 = vsel %vm3490, %v4164, 0
      %4183 = vmatprep.subr.bf16.mxu0 0
      %4184 = vmatpush1.bf16.msra.mxu0 0
      %4185 = vmatprep.subr.bf16.mxu0 0
      %4186 = vmatpush1.bf16.msra.mxu0 0
      %4187 = vmatprep.subr.bf16.mxu0 0
      %4188 = vmatpush1.bf16.msra.mxu0 0
      %4189 = vmatprep.subr.bf16.mxu0 0
      %4190 = vmatpush1.bf16.msra.mxu0 0
      %4191 = vmatprep.subr.bf16.mxu0 0
      %4192 = vmatpush1.bf16.msra.mxu0 0
      %4193 = vmatprep.subr.bf16.mxu0 0
      %4194 = vmatpush1.bf16.msra.mxu0 0
      %4195 = vmatprep.subr.bf16.mxu0 0
      %4196 = vmatpush1.bf16.msra.mxu0 0
      %4197 = vmatprep.subr.bf16.mxu0 %v4174
      %4198 = vmatpush1.bf16.msra.mxu0 %v4173
      %4199 = vmatprep.subr.bf16.mxu0 0
      %4200 = vmatpush2.bf16.msra.mxu0 0
      %4201 = vmatprep.subr.bf16.mxu0 0
      %4202 = vmatpush2.bf16.msra.mxu0 0
      %4203 = vmatprep.subr.bf16.mxu0 0
      %4204 = vmatpush2.bf16.msra.mxu0 0
      %4205 = vmatprep.subr.bf16.mxu0 0
      %4206 = vmatpush2.bf16.msra.mxu0 0
      %4207 = vmatprep.subr.bf16.mxu0 0
      %4208 = vmatpush2.bf16.msra.mxu0 0
      %4209 = vmatprep.subr.bf16.mxu0 0
      %4210 = vmatpush2.bf16.msra.mxu0 0
      %4211 = vmatprep.subr.bf16.mxu0 0
      %4212 = vmatpush2.bf16.msra.mxu0 0
      %4213 = vmatprep.subr.bf16.mxu0 0
      %4214 = vmatpush2.bf16.msra.mxu0 0
      %4215 = vmatprep.mubr.bf16.mxu0 0
      %4216 = vmatmul.mubr.bf16.gmra.mxu0 %v4178
      %v4217 = vpop.f32.mrf.mxu0
      %v4218 = vadd.f32 0.0, %v4217
      %v4219 = vpop.f32.mrf.mxu0
      %v4220 = vadd.f32 0.0, %v4219
      %v4221 = vpop.f32.mrf.mxu0
      %v4222 = vadd.f32 0.0, %v4221
      %v4223 = vpop.f32.mrf.mxu0
      %v4224 = vadd.f32 0.0, %v4223
      %4225 = vmatprep.mubr.bf16.mxu0 0
      %4226 = vmatmul.mubr.bf16.gmra.mxu0 %v4181
      %v4227 = vpop.f32.mrf.mxu0
      %v4228 = vadd.f32 0.0, %v4227
      %v4229 = vpop.f32.mrf.mxu0
      %v4230 = vadd.f32 0.0, %v4229
      %v4231 = vpop.f32.mrf.mxu0
      %v4232 = vadd.f32 0.0, %v4231
      %v4233 = vpop.f32.mrf.mxu0
      %v4234 = vadd.f32 0.0, %v4233
      %4235 = vdwg.mxu0
      %4236 = vst.msk [vmem:[#allocation4] sm:$0xff] %vm3490, %v4218
      %4237 = vst.msk [vmem:[#allocation4 + $0x8] sm:$0xff] %vm3490, %v4222
      %4238 = vst.msk [vmem:[#allocation4 + $0x10] sm:$0xff] %vm3490, %v4228
      %4239 = vst.msk [vmem:[#allocation4 + $0x18] sm:$0xff] %vm3490, %v4232
      %4244 = vrot.lane.b32.xlu0 %v4218, 112
      %v4245 = vpop.permute.xlu0 %4244
      %4246 = vrot.lane.b32.xlu0 %v4222, 112
      %v4247 = vpop.permute.xlu0 %4246
      %4248 = vrot.lane.b32.xlu0 %v4228, 112
      %v4249 = vpop.permute.xlu0 %4248
      %4250 = vrot.lane.b32.xlu0 %v4232, 112
      %v4251 = vpop.permute.xlu0 %4250
      %4256 = vst.msk [vmem:[#allocation4 + $0x20] sm:$0xff] %vm3490, %v4245
      %4257 = vst.msk [vmem:[#allocation4 + $0x28] sm:$0xff] %vm3490, %v4247
      %4258 = vst.msk [vmem:[#allocation4 + $0x30] sm:$0xff] %vm3490, %v4249
      %4259 = vst.msk [vmem:[#allocation4 + $0x38] sm:$0xff] %vm3490, %v4251
      %4260 = vrot.lane.b32.xlu0 %v4218, 96
      %v4261 = vpop.permute.xlu0 %4260
      %4262 = vrot.lane.b32.xlu0 %v4222, 96
      %v4263 = vpop.permute.xlu0 %4262
      %4264 = vrot.lane.b32.xlu0 %v4228, 96
      %v4265 = vpop.permute.xlu0 %4264
      %4266 = vrot.lane.b32.xlu0 %v4232, 96
      %v4267 = vpop.permute.xlu0 %4266
      %4272 = vst.msk [vmem:[#allocation4 + $0x40] sm:$0xff] %vm3490, %v4261
      %4273 = vst.msk [vmem:[#allocation4 + $0x48] sm:$0xff] %vm3490, %v4263
      %4274 = vst.msk [vmem:[#allocation4 + $0x50] sm:$0xff] %vm3490, %v4265
      %4275 = vst.msk [vmem:[#allocation4 + $0x58] sm:$0xff] %vm3490, %v4267
      %4276 = vrot.lane.b32.xlu0 %v4218, 80
      %v4277 = vpop.permute.xlu0 %4276
      %4278 = vrot.lane.b32.xlu0 %v4222, 80
      %v4279 = vpop.permute.xlu0 %4278
      %4280 = vrot.lane.b32.xlu0 %v4228, 80
      %v4281 = vpop.permute.xlu0 %4280
      %4282 = vrot.lane.b32.xlu0 %v4232, 80
      %v4283 = vpop.permute.xlu0 %4282
      %4288 = vst.msk [vmem:[#allocation4 + $0x60] sm:$0xff] %vm3490, %v4277
      %4289 = vst.msk [vmem:[#allocation4 + $0x68] sm:$0xff] %vm3490, %v4279
      %4290 = vst.msk [vmem:[#allocation4 + $0x70] sm:$0xff] %vm3490, %v4281
      %4291 = vst.msk [vmem:[#allocation4 + $0x78] sm:$0xff] %vm3490, %v4283
      %4292 = vrot.lane.b32.xlu0 %v4218, 64
      %v4293 = vpop.permute.xlu0 %4292
      %4294 = vrot.lane.b32.xlu0 %v4222, 64
      %v4295 = vpop.permute.xlu0 %4294
      %4296 = vrot.lane.b32.xlu0 %v4228, 64
      %v4297 = vpop.permute.xlu0 %4296
      %4298 = vrot.lane.b32.xlu0 %v4232, 64
      %v4299 = vpop.permute.xlu0 %4298
      %4304 = vst.msk [vmem:[#allocation4 + $0x80] sm:$0xff] %vm3490, %v4293
      %4305 = vst.msk [vmem:[#allocation4 + $0x88] sm:$0xff] %vm3490, %v4295
      %4306 = vst.msk [vmem:[#allocation4 + $0x90] sm:$0xff] %vm3490, %v4297
      %4307 = vst.msk [vmem:[#allocation4 + $0x98] sm:$0xff] %vm3490, %v4299
      %4308 = vrot.lane.b32.xlu0 %v4218, 48
      %v4309 = vpop.permute.xlu0 %4308
      %4310 = vrot.lane.b32.xlu0 %v4222, 48
      %v4311 = vpop.permute.xlu0 %4310
      %4312 = vrot.lane.b32.xlu0 %v4228, 48
      %v4313 = vpop.permute.xlu0 %4312
      %4314 = vrot.lane.b32.xlu0 %v4232, 48
      %v4315 = vpop.permute.xlu0 %4314
      %4320 = vst.msk [vmem:[#allocation4 + $0xa0] sm:$0xff] %vm3490, %v4309
      %4321 = vst.msk [vmem:[#allocation4 + $0xa8] sm:$0xff] %vm3490, %v4311
      %4322 = vst.msk [vmem:[#allocation4 + $0xb0] sm:$0xff] %vm3490, %v4313
      %4323 = vst.msk [vmem:[#allocation4 + $0xb8] sm:$0xff] %vm3490, %v4315
      %4324 = vrot.lane.b32.xlu0 %v4218, 32
      %v4325 = vpop.permute.xlu0 %4324
      %4326 = vrot.lane.b32.xlu0 %v4222, 32
      %v4327 = vpop.permute.xlu0 %4326
      %4328 = vrot.lane.b32.xlu0 %v4228, 32
      %v4329 = vpop.permute.xlu0 %4328
      %4330 = vrot.lane.b32.xlu0 %v4232, 32
      %v4331 = vpop.permute.xlu0 %4330
      %4336 = vst.msk [vmem:[#allocation4 + $0xc0] sm:$0xff] %vm3490, %v4325
      %4337 = vst.msk [vmem:[#allocation4 + $0xc8] sm:$0xff] %vm3490, %v4327
      %4338 = vst.msk [vmem:[#allocation4 + $0xd0] sm:$0xff] %vm3490, %v4329
      %4339 = vst.msk [vmem:[#allocation4 + $0xd8] sm:$0xff] %vm3490, %v4331
      %4340 = vrot.lane.b32.xlu0 %v4218, 16
      %v4341 = vpop.permute.xlu0 %4340
      %4342 = vrot.lane.b32.xlu0 %v4222, 16
      %v4343 = vpop.permute.xlu0 %4342
      %4344 = vrot.lane.b32.xlu0 %v4228, 16
      %v4345 = vpop.permute.xlu0 %4344
      %4346 = vrot.lane.b32.xlu0 %v4232, 16
      %v4347 = vpop.permute.xlu0 %4346
      %4352 = vst.msk [vmem:[#allocation4 + $0xe0] sm:$0xff] %vm3490, %v4341
      %4353 = vst.msk [vmem:[#allocation4 + $0xe8] sm:$0xff] %vm3490, %v4343
      %4354 = vst.msk [vmem:[#allocation4 + $0xf0] sm:$0xff] %vm3490, %v4345
      %4355 = vst.msk [vmem:[#allocation4 + $0xf8] sm:$0xff] %vm3490, %v4347
      %4356 = vst.msk [vmem:[#allocation4 + $0x100] sm:$0xff] %vm3490, %v4220
      %4357 = vst.msk [vmem:[#allocation4 + $0x108] sm:$0xff] %vm3490, %v4224
      %4358 = vst.msk [vmem:[#allocation4 + $0x110] sm:$0xff] %vm3490, %v4230
      %4359 = vst.msk [vmem:[#allocation4 + $0x118] sm:$0xff] %vm3490, %v4234
      %v4360 = vld [vmem:[%s10] sm:$0xff]
      %v4361 = vld [vmem:[%s10 + $0x8] sm:$0xf]
      %v4362 = vld [vmem:[%s10 + $0xc] sm:$0xff]
      %v4363 = vld [vmem:[%s10 + $0x14] sm:$0xf]
      %v4364 = vld [vmem:[%s10 + $0x18] sm:$0xff]
      %v4365 = vld [vmem:[%s10 + $0x20] sm:$0xf]
      %v4366 = vld [vmem:[%s10 + $0x24] sm:$0xff]
      %v4367 = vld [vmem:[%s10 + $0x2c] sm:$0xf]
      %v4368 = vld [vmem:[#allocation4] sm:$0xff]
      %v4369 = vld [vmem:[#allocation4 + $0x8] sm:$0xff]
      %v4370 = vld [vmem:[#allocation4 + $0x10] sm:$0xff]
      %v4371 = vld [vmem:[#allocation4 + $0x18] sm:$0xff]
      %v4372 = vld [vmem:[#allocation4 + $0x20] sm:$0xff]
      %v4373 = vld [vmem:[#allocation4 + $0x28] sm:$0xff]
      %v4374 = vld [vmem:[#allocation4 + $0x30] sm:$0xff]
      %v4375 = vld [vmem:[#allocation4 + $0x38] sm:$0xff]
      %v4376 = vld [vmem:[#allocation4 + $0x40] sm:$0xff]
      %v4377 = vld [vmem:[#allocation4 + $0x48] sm:$0xff]
      %v4378 = vld [vmem:[#allocation4 + $0x50] sm:$0xff]
      %v4379 = vld [vmem:[#allocation4 + $0x58] sm:$0xff]
      %v4380 = vld [vmem:[#allocation4 + $0x60] sm:$0xff]
      %v4381 = vld [vmem:[#allocation4 + $0x68] sm:$0xff]
      %v4382 = vld [vmem:[#allocation4 + $0x70] sm:$0xff]
      %v4383 = vld [vmem:[#allocation4 + $0x78] sm:$0xff]
      %v4384 = vld [vmem:[#allocation4 + $0x80] sm:$0xff]
      %v4385 = vld [vmem:[#allocation4 + $0x88] sm:$0xff]
      %v4386 = vld [vmem:[#allocation4 + $0x90] sm:$0xff]
      %v4387 = vld [vmem:[#allocation4 + $0x98] sm:$0xff]
      %v4388 = vld [vmem:[#allocation4 + $0xa0] sm:$0xff]
      %v4389 = vld [vmem:[#allocation4 + $0xa8] sm:$0xff]
      %v4390 = vld [vmem:[#allocation4 + $0xb0] sm:$0xff]
      %v4391 = vld [vmem:[#allocation4 + $0xb8] sm:$0xff]
      %v4392 = vld [vmem:[#allocation4 + $0xc0] sm:$0xff]
      %v4393 = vld [vmem:[#allocation4 + $0xc8] sm:$0xff]
      %v4394 = vld [vmem:[#allocation4 + $0xd0] sm:$0xff]
      %v4395 = vld [vmem:[#allocation4 + $0xd8] sm:$0xff]
      %v4396 = vld [vmem:[#allocation4 + $0xe0] sm:$0xff]
      %v4397 = vld [vmem:[#allocation4 + $0xe8] sm:$0xff]
      %v4398 = vld [vmem:[#allocation4 + $0xf0] sm:$0xff]
      %v4399 = vld [vmem:[#allocation4 + $0xf8] sm:$0xff]
      %v4400 = vld [vmem:[#allocation4 + $0x100] sm:$0xff]
      %v4401 = vld [vmem:[#allocation4 + $0x108] sm:$0xff]
      %v4402 = vld [vmem:[#allocation4 + $0x110] sm:$0xff]
      %v4403 = vld [vmem:[#allocation4 + $0x118] sm:$0xff]
      %v4404 = vpack.c.bf16 %v4369, %v4368
      %v4405 = vpack.c.bf16 %v4371, %v4370
      %v4406 = vpack.c.bf16 %v4373, %v4372
      %v4407 = vpack.c.bf16 %v4375, %v4374
      %v4408 = vpack.c.bf16 %v4377, %v4376
      %v4409 = vpack.c.bf16 %v4379, %v4378
      %v4410 = vpack.c.bf16 %v4381, %v4380
      %v4411 = vpack.c.bf16 %v4383, %v4382
      %v4412 = vpack.c.bf16 %v4385, %v4384
      %v4413 = vpack.c.bf16 %v4387, %v4386
      %v4414 = vpack.c.bf16 %v4389, %v4388
      %v4415 = vpack.c.bf16 %v4391, %v4390
      %v4416 = vpack.c.bf16 %v4393, %v4392
      %v4417 = vpack.c.bf16 %v4395, %v4394
      %v4418 = vpack.c.bf16 %v4397, %v4396
      %v4419 = vpack.c.bf16 %v4399, %v4398
      %v4420 = vpack.c.bf16 %v4401, %v4400
      %v4421 = vpack.c.bf16 %v4403, %v4402
      %v4422 = vld [vmem:[%s11] sm:$0xff]
      %v4423 = vld [vmem:[%s11 + $0x8] sm:$0xff]
      %v4424 = vld [vmem:[%s11 + $0x10] sm:$0xff]
      %v4425 = vld [vmem:[%s11 + $0x18] sm:$0xff]
      %4427 = vset.pattern.permute.xlu0 0
      %4428 = vperm.xlu0 %4427, %v4422
      %v4429 = vpop.permute.xlu0 %4428
      %4432 = vset.pattern.permute.xlu0 0
      %4433 = vperm.xlu0 %4432, %v4423
      %v4434 = vpop.permute.xlu0 %4433
      %4437 = vset.pattern.permute.xlu0 0
      %4438 = vperm.xlu0 %4437, %v4424
      %v4439 = vpop.permute.xlu0 %4438
      %4442 = vset.pattern.permute.xlu0 0
      %4443 = vperm.xlu0 %4442, %v4425
      %v4444 = vpop.permute.xlu0 %4443
      %v4454 = vunpack.c.l.b16 %v4360
      %v4455 = vunpack.c.h.b16 %v4360
      %v4456 = vunpack.c.l.b16 %v4361
      %v4457 = vunpack.c.l.b16 %v4362
      %v4458 = vunpack.c.h.b16 %v4362
      %v4459 = vunpack.c.l.b16 %v4363
      %v4460 = vunpack.c.l.b16 %v4364
      %v4461 = vunpack.c.h.b16 %v4364
      %v4462 = vunpack.c.l.b16 %v4365
      %v4463 = vunpack.c.l.b16 %v4366
      %v4464 = vunpack.c.h.b16 %v4366
      %v4465 = vunpack.c.l.b16 %v4367
      %v4466 = vpack.c.b16 %v4457, %v4454
      %v4467 = vpack.c.b16 %v4458, %v4455
      %v4468 = vpack.c.b16 %v4459, %v4456
      %v4469 = vpack.c.b16 %v4463, %v4460
      %v4470 = vpack.c.b16 %v4464, %v4461
      %v4471 = vpack.c.b16 %v4465, %v4462
      %v4477 = vsel %vm3114, %v4468, 0
      %v4480 = vsel %vm3114, %v4471, 0
      %4482 = vmatprep.subr.bf16.mxu0 0
      %4483 = vmatpush1.bf16.msra.mxu0 %v4411
      %4484 = vmatprep.subr.bf16.mxu0 0
      %4485 = vmatpush1.bf16.msra.mxu0 %v4410
      %4486 = vmatprep.subr.bf16.mxu0 0
      %4487 = vmatpush1.bf16.msra.mxu0 %v4409
      %4488 = vmatprep.subr.bf16.mxu0 0
      %4489 = vmatpush1.bf16.msra.mxu0 %v4408
      %4490 = vmatprep.subr.bf16.mxu0 0
      %4491 = vmatpush1.bf16.msra.mxu0 %v4407
      %4492 = vmatprep.subr.bf16.mxu0 0
      %4493 = vmatpush1.bf16.msra.mxu0 %v4406
      %4494 = vmatprep.subr.bf16.mxu0 0
      %4495 = vmatpush1.bf16.msra.mxu0 %v4405
      %4496 = vmatprep.subr.bf16.mxu0 0
      %4497 = vmatpush1.bf16.msra.mxu0 %v4404
      %4498 = vmatprep.subr.bf16.mxu0 0
      %4499 = vmatpush2.bf16.msra.mxu0 %v4419
      %4500 = vmatprep.subr.bf16.mxu0 0
      %4501 = vmatpush2.bf16.msra.mxu0 %v4418
      %4502 = vmatprep.subr.bf16.mxu0 0
      %4503 = vmatpush2.bf16.msra.mxu0 %v4417
      %4504 = vmatprep.subr.bf16.mxu0 0
      %4505 = vmatpush2.bf16.msra.mxu0 %v4416
      %4506 = vmatprep.subr.bf16.mxu0 0
      %4507 = vmatpush2.bf16.msra.mxu0 %v4415
      %4508 = vmatprep.subr.bf16.mxu0 0
      %4509 = vmatpush2.bf16.msra.mxu0 %v4414
      %4510 = vmatprep.subr.bf16.mxu0 0
      %4511 = vmatpush2.bf16.msra.mxu0 %v4413
      %4512 = vmatprep.subr.bf16.mxu0 0
      %4513 = vmatpush2.bf16.msra.mxu0 %v4412
      %4514 = vmatprep.mubr.bf16.mxu0 %v4467
      %4515 = vmatmul.mubr.bf16.gmra.mxu0 %v4466
      %v4516 = vpop.f32.mrf.mxu0
      %v4517 = vadd.f32 %v4429, %v4516
      %v4518 = vpop.f32.mrf.mxu0
      %v4519 = vpop.f32.mrf.mxu0
      %v4520 = vadd.f32 %v4434, %v4519
      %v4521 = vpop.f32.mrf.mxu0
      %4522 = vmatprep.mubr.bf16.mxu0 %v4470
      %4523 = vmatmul.mubr.bf16.gmra.mxu0 %v4469
      %v4524 = vpop.f32.mrf.mxu0
      %v4525 = vadd.f32 %v4439, %v4524
      %v4526 = vpop.f32.mrf.mxu0
      %v4527 = vpop.f32.mrf.mxu0
      %v4528 = vadd.f32 %v4444, %v4527
      %v4529 = vpop.f32.mrf.mxu0
      %4530 = vdwg.mxu0
      %4531 = vmatprep.subr.bf16.mxu0 0
      %4532 = vmatpush1.bf16.msra.mxu0 0
      %4533 = vmatprep.subr.bf16.mxu0 0
      %4534 = vmatpush1.bf16.msra.mxu0 0
      %4535 = vmatprep.subr.bf16.mxu0 0
      %4536 = vmatpush1.bf16.msra.mxu0 0
      %4537 = vmatprep.subr.bf16.mxu0 0
      %4538 = vmatpush1.bf16.msra.mxu0 0
      %4539 = vmatprep.subr.bf16.mxu0 0
      %4540 = vmatpush1.bf16.msra.mxu0 0
      %4541 = vmatprep.subr.bf16.mxu0 0
      %4542 = vmatpush1.bf16.msra.mxu0 0
      %4543 = vmatprep.subr.bf16.mxu0 0
      %4544 = vmatpush1.bf16.msra.mxu0 %v4421
      %4545 = vmatprep.subr.bf16.mxu0 0
      %4546 = vmatpush1.bf16.msra.mxu0 %v4420
      %4547 = vmatprep.subr.bf16.mxu0 0
      %4548 = vmatpush2.bf16.msra.mxu0 0
      %4549 = vmatprep.subr.bf16.mxu0 0
      %4550 = vmatpush2.bf16.msra.mxu0 0
      %4551 = vmatprep.subr.bf16.mxu0 0
      %4552 = vmatpush2.bf16.msra.mxu0 0
      %4553 = vmatprep.subr.bf16.mxu0 0
      %4554 = vmatpush2.bf16.msra.mxu0 0
      %4555 = vmatprep.subr.bf16.mxu0 0
      %4556 = vmatpush2.bf16.msra.mxu0 0
      %4557 = vmatprep.subr.bf16.mxu0 0
      %4558 = vmatpush2.bf16.msra.mxu0 0
      %4559 = vmatprep.subr.bf16.mxu0 0
      %4560 = vmatpush2.bf16.msra.mxu0 0
      %4561 = vmatprep.subr.bf16.mxu0 0
      %4562 = vmatpush2.bf16.msra.mxu0 0
      %4563 = vmatprep.mubr.bf16.mxu0 0
      %4564 = vmatmul.mubr.bf16.gmra.mxu0 %v4477
      %v4565 = vpop.f32.mrf.mxu0
      %v4566 = vadd.f32 %v4517, %v4565
      %v4567 = vpop.f32.mrf.mxu0
      %v4568 = vpop.f32.mrf.mxu0
      %v4569 = vadd.f32 %v4520, %v4568
      %v4570 = vpop.f32.mrf.mxu0
      %4571 = vmatprep.mubr.bf16.mxu0 0
      %4572 = vmatmul.mubr.bf16.gmra.mxu0 %v4480
      %v4573 = vpop.f32.mrf.mxu0
      %v4574 = vadd.f32 %v4525, %v4573
      %v4575 = vpop.f32.mrf.mxu0
      %v4576 = vpop.f32.mrf.mxu0
      %v4577 = vadd.f32 %v4528, %v4576
      %v4578 = vpop.f32.mrf.mxu0
      %4579 = vdwg.mxu0
      %v4580 = vsel %vm3490, %v4566, 0.0
      %4581 = vadd.xlane.f32.xlu0 %v4580
      %v4582 = vpop.xlane.xlu0 %4581
      %v4583 = vsel %vm3490, %v4569, 0.0
      %4584 = vadd.xlane.f32.xlu0 %v4583
      %v4585 = vpop.xlane.xlu0 %4584
      %v4586 = vsel %vm3490, %v4574, 0.0
      %4587 = vadd.xlane.f32.xlu0 %v4586
      %v4588 = vpop.xlane.xlu0 %4587
      %v4589 = vsel %vm3490, %v4577, 0.0
      %4590 = vadd.xlane.f32.xlu0 %v4589
      %v4591 = vpop.xlane.xlu0 %4590
      %v4592 = vmul.f32 %v4582, %v4118
      %v4593 = vmul.f32 %v4585, %v4118
      %v4594 = vmul.f32 %v4588, %v4118
      %v4595 = vmul.f32 %v4591, %v4118
      %v4596 = vsub.f32 %v4566, %v4592
      %v4597 = vsub.f32 %v4569, %v4593
      %v4598 = vsub.f32 %v4574, %v4594
      %v4599 = vsub.f32 %v4577, %v4595
      %v4600 = vmul.f32 %v4596, %v4596
      %v4601 = vmul.f32 %v4597, %v4597
      %v4602 = vmul.f32 %v4598, %v4598
      %v4603 = vmul.f32 %v4599, %v4599
      %v4604 = vsel %vm3490, %v4600, 0.0
      %4605 = vadd.xlane.f32.xlu0 %v4604
      %v4606 = vpop.xlane.xlu0 %4605
      %v4607 = vsel %vm3490, %v4601, 0.0
      %4608 = vadd.xlane.f32.xlu0 %v4607
      %v4609 = vpop.xlane.xlu0 %4608
      %v4610 = vsel %vm3490, %v4602, 0.0
      %4611 = vadd.xlane.f32.xlu0 %v4610
      %v4612 = vpop.xlane.xlu0 %4611
      %v4613 = vsel %vm3490, %v4603, 0.0
      %4614 = vadd.xlane.f32.xlu0 %v4613
      %v4615 = vpop.xlane.xlu0 %4614
      %v4616 = vmul.f32 %v4606, %v4118
      %v4617 = vmul.f32 %v4609, %v4118
      %v4618 = vmul.f32 %v4612, %v4118
      %v4619 = vmul.f32 %v4615, %v4118
      %v4620 = vadd.f32 %v4616, 1e-05
      %v4621 = vadd.f32 %v4617, 1e-05
      %v4622 = vadd.f32 %v4618, 1e-05
      %v4623 = vadd.f32 %v4619, 1e-05
      %v4624 = vrsqrt.pop %v4620
      %v4625 = vrsqrt.pop %v4621
      %v4626 = vrsqrt.pop %v4622
      %v4627 = vrsqrt.pop %v4623
      %v4628 = vmul.f32 %v4596, %v4624
      %v4629 = vmul.f32 %v4597, %v4625
      %v4630 = vmul.f32 %v4598, %v4626
      %v4631 = vmul.f32 %v4599, %v4627
      %v4632 = vmax.f32 %v4628, 0.0
      %v4633 = vmax.f32 %v4629, 0.0
      %v4634 = vmax.f32 %v4630, 0.0
      %v4635 = vmax.f32 %v4631, 0.0
      %v4636 = vpack.c.bf16 %v4633, %v4632
      %v4637 = vpack.c.bf16 %v4635, %v4634
      %v4638 = vld [vmem:[%s9] sm:$0xff]
      %v4639 = vld [vmem:[%s9 + $0x8] sm:$0xff]
      %v4642 = vunpack.c.l.b16 %v4638
      %v4643 = vunpack.c.h.b16 %v4638
      %v4644 = vunpack.c.l.b16 %v4639
      %v4645 = vunpack.c.h.b16 %v4639
      %v4646 = vpack.c.b16 %v4644, %v4642
      %v4647 = vpack.c.b16 %v4645, %v4643
      %v4651 = vsel %vm3490, %v4636, 0
      %v4654 = vsel %vm3490, %v4637, 0
      %4656 = vmatprep.subr.bf16.mxu0 0
      %4657 = vmatpush1.bf16.msra.mxu0 0
      %4658 = vmatprep.subr.bf16.mxu0 0
      %4659 = vmatpush1.bf16.msra.mxu0 0
      %4660 = vmatprep.subr.bf16.mxu0 0
      %4661 = vmatpush1.bf16.msra.mxu0 0
      %4662 = vmatprep.subr.bf16.mxu0 0
      %4663 = vmatpush1.bf16.msra.mxu0 0
      %4664 = vmatprep.subr.bf16.mxu0 0
      %4665 = vmatpush1.bf16.msra.mxu0 0
      %4666 = vmatprep.subr.bf16.mxu0 0
      %4667 = vmatpush1.bf16.msra.mxu0 0
      %4668 = vmatprep.subr.bf16.mxu0 0
      %4669 = vmatpush1.bf16.msra.mxu0 0
      %4670 = vmatprep.subr.bf16.mxu0 %v4647
      %4671 = vmatpush1.bf16.msra.mxu0 %v4646
      %4672 = vmatprep.subr.bf16.mxu0 0
      %4673 = vmatpush2.bf16.msra.mxu0 0
      %4674 = vmatprep.subr.bf16.mxu0 0
      %4675 = vmatpush2.bf16.msra.mxu0 0
      %4676 = vmatprep.subr.bf16.mxu0 0
      %4677 = vmatpush2.bf16.msra.mxu0 0
      %4678 = vmatprep.subr.bf16.mxu0 0
      %4679 = vmatpush2.bf16.msra.mxu0 0
      %4680 = vmatprep.subr.bf16.mxu0 0
      %4681 = vmatpush2.bf16.msra.mxu0 0
      %4682 = vmatprep.subr.bf16.mxu0 0
      %4683 = vmatpush2.bf16.msra.mxu0 0
      %4684 = vmatprep.subr.bf16.mxu0 0
      %4685 = vmatpush2.bf16.msra.mxu0 0
      %4686 = vmatprep.subr.bf16.mxu0 0
      %4687 = vmatpush2.bf16.msra.mxu0 0
      %4688 = vmatprep.mubr.bf16.mxu0 0
      %4689 = vmatmul.mubr.bf16.gmra.mxu0 %v4651
      %v4690 = vpop.f32.mrf.mxu0
      %v4691 = vadd.f32 0.0, %v4690
      %v4692 = vpop.f32.mrf.mxu0
      %v4693 = vadd.f32 0.0, %v4692
      %v4694 = vpop.f32.mrf.mxu0
      %v4695 = vadd.f32 0.0, %v4694
      %v4696 = vpop.f32.mrf.mxu0
      %v4697 = vadd.f32 0.0, %v4696
      %4698 = vmatprep.mubr.bf16.mxu0 0
      %4699 = vmatmul.mubr.bf16.gmra.mxu0 %v4654
      %v4700 = vpop.f32.mrf.mxu0
      %v4701 = vadd.f32 0.0, %v4700
      %v4702 = vpop.f32.mrf.mxu0
      %v4703 = vadd.f32 0.0, %v4702
      %v4704 = vpop.f32.mrf.mxu0
      %v4705 = vadd.f32 0.0, %v4704
      %v4706 = vpop.f32.mrf.mxu0
      %v4707 = vadd.f32 0.0, %v4706
      %4708 = vdwg.mxu0
      %4709 = vst.msk [vmem:[#allocation4] sm:$0xff] %vm3490, %v4691
      %4710 = vst.msk [vmem:[#allocation4 + $0x8] sm:$0xff] %vm3490, %v4695
      %4711 = vst.msk [vmem:[#allocation4 + $0x10] sm:$0xff] %vm3490, %v4701
      %4712 = vst.msk [vmem:[#allocation4 + $0x18] sm:$0xff] %vm3490, %v4705
      %4717 = vrot.lane.b32.xlu0 %v4691, 112
      %v4718 = vpop.permute.xlu0 %4717
      %4719 = vrot.lane.b32.xlu0 %v4695, 112
      %v4720 = vpop.permute.xlu0 %4719
      %4721 = vrot.lane.b32.xlu0 %v4701, 112
      %v4722 = vpop.permute.xlu0 %4721
      %4723 = vrot.lane.b32.xlu0 %v4705, 112
      %v4724 = vpop.permute.xlu0 %4723
      %4729 = vst.msk [vmem:[#allocation4 + $0x20] sm:$0xff] %vm3490, %v4718
      %4730 = vst.msk [vmem:[#allocation4 + $0x28] sm:$0xff] %vm3490, %v4720
      %4731 = vst.msk [vmem:[#allocation4 + $0x30] sm:$0xff] %vm3490, %v4722
      %4732 = vst.msk [vmem:[#allocation4 + $0x38] sm:$0xff] %vm3490, %v4724
      %4733 = vrot.lane.b32.xlu0 %v4691, 96
      %v4734 = vpop.permute.xlu0 %4733
      %4735 = vrot.lane.b32.xlu0 %v4695, 96
      %v4736 = vpop.permute.xlu0 %4735
      %4737 = vrot.lane.b32.xlu0 %v4701, 96
      %v4738 = vpop.permute.xlu0 %4737
      %4739 = vrot.lane.b32.xlu0 %v4705, 96
      %v4740 = vpop.permute.xlu0 %4739
      %4745 = vst.msk [vmem:[#allocation4 + $0x40] sm:$0xff] %vm3490, %v4734
      %4746 = vst.msk [vmem:[#allocation4 + $0x48] sm:$0xff] %vm3490, %v4736
      %4747 = vst.msk [vmem:[#allocation4 + $0x50] sm:$0xff] %vm3490, %v4738
      %4748 = vst.msk [vmem:[#allocation4 + $0x58] sm:$0xff] %vm3490, %v4740
      %4749 = vrot.lane.b32.xlu0 %v4691, 80
      %v4750 = vpop.permute.xlu0 %4749
      %4751 = vrot.lane.b32.xlu0 %v4695, 80
      %v4752 = vpop.permute.xlu0 %4751
      %4753 = vrot.lane.b32.xlu0 %v4701, 80
      %v4754 = vpop.permute.xlu0 %4753
      %4755 = vrot.lane.b32.xlu0 %v4705, 80
      %v4756 = vpop.permute.xlu0 %4755
      %4761 = vst.msk [vmem:[#allocation4 + $0x60] sm:$0xff] %vm3490, %v4750
      %4762 = vst.msk [vmem:[#allocation4 + $0x68] sm:$0xff] %vm3490, %v4752
      %4763 = vst.msk [vmem:[#allocation4 + $0x70] sm:$0xff] %vm3490, %v4754
      %4764 = vst.msk [vmem:[#allocation4 + $0x78] sm:$0xff] %vm3490, %v4756
      %4765 = vrot.lane.b32.xlu0 %v4691, 64
      %v4766 = vpop.permute.xlu0 %4765
      %4767 = vrot.lane.b32.xlu0 %v4695, 64
      %v4768 = vpop.permute.xlu0 %4767
      %4769 = vrot.lane.b32.xlu0 %v4701, 64
      %v4770 = vpop.permute.xlu0 %4769
      %4771 = vrot.lane.b32.xlu0 %v4705, 64
      %v4772 = vpop.permute.xlu0 %4771
      %4777 = vst.msk [vmem:[#allocation4 + $0x80] sm:$0xff] %vm3490, %v4766
      %4778 = vst.msk [vmem:[#allocation4 + $0x88] sm:$0xff] %vm3490, %v4768
      %4779 = vst.msk [vmem:[#allocation4 + $0x90] sm:$0xff] %vm3490, %v4770
      %4780 = vst.msk [vmem:[#allocation4 + $0x98] sm:$0xff] %vm3490, %v4772
      %4781 = vrot.lane.b32.xlu0 %v4691, 48
      %v4782 = vpop.permute.xlu0 %4781
      %4783 = vrot.lane.b32.xlu0 %v4695, 48
      %v4784 = vpop.permute.xlu0 %4783
      %4785 = vrot.lane.b32.xlu0 %v4701, 48
      %v4786 = vpop.permute.xlu0 %4785
      %4787 = vrot.lane.b32.xlu0 %v4705, 48
      %v4788 = vpop.permute.xlu0 %4787
      %4793 = vst.msk [vmem:[#allocation4 + $0xa0] sm:$0xff] %vm3490, %v4782
      %4794 = vst.msk [vmem:[#allocation4 + $0xa8] sm:$0xff] %vm3490, %v4784
      %4795 = vst.msk [vmem:[#allocation4 + $0xb0] sm:$0xff] %vm3490, %v4786
      %4796 = vst.msk [vmem:[#allocation4 + $0xb8] sm:$0xff] %vm3490, %v4788
      %4797 = vrot.lane.b32.xlu0 %v4691, 32
      %v4798 = vpop.permute.xlu0 %4797
      %4799 = vrot.lane.b32.xlu0 %v4695, 32
      %v4800 = vpop.permute.xlu0 %4799
      %4801 = vrot.lane.b32.xlu0 %v4701, 32
      %v4802 = vpop.permute.xlu0 %4801
      %4803 = vrot.lane.b32.xlu0 %v4705, 32
      %v4804 = vpop.permute.xlu0 %4803
      %4809 = vst.msk [vmem:[#allocation4 + $0xc0] sm:$0xff] %vm3490, %v4798
      %4810 = vst.msk [vmem:[#allocation4 + $0xc8] sm:$0xff] %vm3490, %v4800
      %4811 = vst.msk [vmem:[#allocation4 + $0xd0] sm:$0xff] %vm3490, %v4802
      %4812 = vst.msk [vmem:[#allocation4 + $0xd8] sm:$0xff] %vm3490, %v4804
      %4813 = vrot.lane.b32.xlu0 %v4691, 16
      %v4814 = vpop.permute.xlu0 %4813
      %4815 = vrot.lane.b32.xlu0 %v4695, 16
      %v4816 = vpop.permute.xlu0 %4815
      %4817 = vrot.lane.b32.xlu0 %v4701, 16
      %v4818 = vpop.permute.xlu0 %4817
      %4819 = vrot.lane.b32.xlu0 %v4705, 16
      %v4820 = vpop.permute.xlu0 %4819
      %4825 = vst.msk [vmem:[#allocation4 + $0xe0] sm:$0xff] %vm3490, %v4814
      %4826 = vst.msk [vmem:[#allocation4 + $0xe8] sm:$0xff] %vm3490, %v4816
      %4827 = vst.msk [vmem:[#allocation4 + $0xf0] sm:$0xff] %vm3490, %v4818
      %4828 = vst.msk [vmem:[#allocation4 + $0xf8] sm:$0xff] %vm3490, %v4820
      %4829 = vst.msk [vmem:[#allocation4 + $0x100] sm:$0xff] %vm3490, %v4693
      %4830 = vst.msk [vmem:[#allocation4 + $0x108] sm:$0xff] %vm3490, %v4697
      %4831 = vst.msk [vmem:[#allocation4 + $0x110] sm:$0xff] %vm3490, %v4703
      %4832 = vst.msk [vmem:[#allocation4 + $0x118] sm:$0xff] %vm3490, %v4707
      %v4833 = vld [vmem:[%s12] sm:$0xff]
      %v4834 = vld [vmem:[%s12 + $0x8] sm:$0xf]
      %v4835 = vld [vmem:[%s12 + $0xc] sm:$0xff]
      %v4836 = vld [vmem:[%s12 + $0x14] sm:$0xf]
      %v4837 = vld [vmem:[%s12 + $0x18] sm:$0xff]
      %v4838 = vld [vmem:[%s12 + $0x20] sm:$0xf]
      %v4839 = vld [vmem:[%s12 + $0x24] sm:$0xff]
      %v4840 = vld [vmem:[%s12 + $0x2c] sm:$0xf]
      %v4841 = vld [vmem:[#allocation4] sm:$0xff]
      %v4842 = vld [vmem:[#allocation4 + $0x8] sm:$0xff]
      %v4843 = vld [vmem:[#allocation4 + $0x10] sm:$0xff]
      %v4844 = vld [vmem:[#allocation4 + $0x18] sm:$0xff]
      %v4845 = vld [vmem:[#allocation4 + $0x20] sm:$0xff]
      %v4846 = vld [vmem:[#allocation4 + $0x28] sm:$0xff]
      %v4847 = vld [vmem:[#allocation4 + $0x30] sm:$0xff]
      %v4848 = vld [vmem:[#allocation4 + $0x38] sm:$0xff]
      %v4849 = vld [vmem:[#allocation4 + $0x40] sm:$0xff]
      %v4850 = vld [vmem:[#allocation4 + $0x48] sm:$0xff]
      %v4851 = vld [vmem:[#allocation4 + $0x50] sm:$0xff]
      %v4852 = vld [vmem:[#allocation4 + $0x58] sm:$0xff]
      %v4853 = vld [vmem:[#allocation4 + $0x60] sm:$0xff]
      %v4854 = vld [vmem:[#allocation4 + $0x68] sm:$0xff]
      %v4855 = vld [vmem:[#allocation4 + $0x70] sm:$0xff]
      %v4856 = vld [vmem:[#allocation4 + $0x78] sm:$0xff]
      %v4857 = vld [vmem:[#allocation4 + $0x80] sm:$0xff]
      %v4858 = vld [vmem:[#allocation4 + $0x88] sm:$0xff]
      %v4859 = vld [vmem:[#allocation4 + $0x90] sm:$0xff]
      %v4860 = vld [vmem:[#allocation4 + $0x98] sm:$0xff]
      %v4861 = vld [vmem:[#allocation4 + $0xa0] sm:$0xff]
      %v4862 = vld [vmem:[#allocation4 + $0xa8] sm:$0xff]
      %v4863 = vld [vmem:[#allocation4 + $0xb0] sm:$0xff]
      %v4864 = vld [vmem:[#allocation4 + $0xb8] sm:$0xff]
      %v4865 = vld [vmem:[#allocation4 + $0xc0] sm:$0xff]
      %v4866 = vld [vmem:[#allocation4 + $0xc8] sm:$0xff]
      %v4867 = vld [vmem:[#allocation4 + $0xd0] sm:$0xff]
      %v4868 = vld [vmem:[#allocation4 + $0xd8] sm:$0xff]
      %v4869 = vld [vmem:[#allocation4 + $0xe0] sm:$0xff]
      %v4870 = vld [vmem:[#allocation4 + $0xe8] sm:$0xff]
      %v4871 = vld [vmem:[#allocation4 + $0xf0] sm:$0xff]
      %v4872 = vld [vmem:[#allocation4 + $0xf8] sm:$0xff]
      %v4873 = vld [vmem:[#allocation4 + $0x100] sm:$0xff]
      %v4874 = vld [vmem:[#allocation4 + $0x108] sm:$0xff]
      %v4875 = vld [vmem:[#allocation4 + $0x110] sm:$0xff]
      %v4876 = vld [vmem:[#allocation4 + $0x118] sm:$0xff]
      %v4877 = vpack.c.bf16 %v4842, %v4841
      %v4878 = vpack.c.bf16 %v4844, %v4843
      %v4879 = vpack.c.bf16 %v4846, %v4845
      %v4880 = vpack.c.bf16 %v4848, %v4847
      %v4881 = vpack.c.bf16 %v4850, %v4849
      %v4882 = vpack.c.bf16 %v4852, %v4851
      %v4883 = vpack.c.bf16 %v4854, %v4853
      %v4884 = vpack.c.bf16 %v4856, %v4855
      %v4885 = vpack.c.bf16 %v4858, %v4857
      %v4886 = vpack.c.bf16 %v4860, %v4859
      %v4887 = vpack.c.bf16 %v4862, %v4861
      %v4888 = vpack.c.bf16 %v4864, %v4863
      %v4889 = vpack.c.bf16 %v4866, %v4865
      %v4890 = vpack.c.bf16 %v4868, %v4867
      %v4891 = vpack.c.bf16 %v4870, %v4869
      %v4892 = vpack.c.bf16 %v4872, %v4871
      %v4893 = vpack.c.bf16 %v4874, %v4873
      %v4894 = vpack.c.bf16 %v4876, %v4875
      %v4895 = vld [vmem:[%s13] sm:$0xff]
      %v4896 = vld [vmem:[%s13 + $0x8] sm:$0xff]
      %v4897 = vld [vmem:[%s13 + $0x10] sm:$0xff]
      %v4898 = vld [vmem:[%s13 + $0x18] sm:$0xff]
      %4900 = vset.pattern.permute.xlu0 0
      %4901 = vperm.xlu0 %4900, %v4895
      %v4902 = vpop.permute.xlu0 %4901
      %4905 = vset.pattern.permute.xlu0 0
      %4906 = vperm.xlu0 %4905, %v4896
      %v4907 = vpop.permute.xlu0 %4906
      %4910 = vset.pattern.permute.xlu0 0
      %4911 = vperm.xlu0 %4910, %v4897
      %v4912 = vpop.permute.xlu0 %4911
      %4915 = vset.pattern.permute.xlu0 0
      %4916 = vperm.xlu0 %4915, %v4898
      %v4917 = vpop.permute.xlu0 %4916
      %v4927 = vunpack.c.l.b16 %v4833
      %v4928 = vunpack.c.h.b16 %v4833
      %v4929 = vunpack.c.l.b16 %v4834
      %v4930 = vunpack.c.l.b16 %v4835
      %v4931 = vunpack.c.h.b16 %v4835
      %v4932 = vunpack.c.l.b16 %v4836
      %v4933 = vunpack.c.l.b16 %v4837
      %v4934 = vunpack.c.h.b16 %v4837
      %v4935 = vunpack.c.l.b16 %v4838
      %v4936 = vunpack.c.l.b16 %v4839
      %v4937 = vunpack.c.h.b16 %v4839
      %v4938 = vunpack.c.l.b16 %v4840
      %v4939 = vpack.c.b16 %v4930, %v4927
      %v4940 = vpack.c.b16 %v4931, %v4928
      %v4941 = vpack.c.b16 %v4932, %v4929
      %v4942 = vpack.c.b16 %v4936, %v4933
      %v4943 = vpack.c.b16 %v4937, %v4934
      %v4944 = vpack.c.b16 %v4938, %v4935
      %v4950 = vsel %vm3114, %v4941, 0
      %v4953 = vsel %vm3114, %v4944, 0
      %4955 = vmatprep.subr.bf16.mxu0 0
      %4956 = vmatpush1.bf16.msra.mxu0 %v4884
      %4957 = vmatprep.subr.bf16.mxu0 0
      %4958 = vmatpush1.bf16.msra.mxu0 %v4883
      %4959 = vmatprep.subr.bf16.mxu0 0
      %4960 = vmatpush1.bf16.msra.mxu0 %v4882
      %4961 = vmatprep.subr.bf16.mxu0 0
      %4962 = vmatpush1.bf16.msra.mxu0 %v4881
      %4963 = vmatprep.subr.bf16.mxu0 0
      %4964 = vmatpush1.bf16.msra.mxu0 %v4880
      %4965 = vmatprep.subr.bf16.mxu0 0
      %4966 = vmatpush1.bf16.msra.mxu0 %v4879
      %4967 = vmatprep.subr.bf16.mxu0 0
      %4968 = vmatpush1.bf16.msra.mxu0 %v4878
      %4969 = vmatprep.subr.bf16.mxu0 0
      %4970 = vmatpush1.bf16.msra.mxu0 %v4877
      %4971 = vmatprep.subr.bf16.mxu0 0
      %4972 = vmatpush2.bf16.msra.mxu0 %v4892
      %4973 = vmatprep.subr.bf16.mxu0 0
      %4974 = vmatpush2.bf16.msra.mxu0 %v4891
      %4975 = vmatprep.subr.bf16.mxu0 0
      %4976 = vmatpush2.bf16.msra.mxu0 %v4890
      %4977 = vmatprep.subr.bf16.mxu0 0
      %4978 = vmatpush2.bf16.msra.mxu0 %v4889
      %4979 = vmatprep.subr.bf16.mxu0 0
      %4980 = vmatpush2.bf16.msra.mxu0 %v4888
      %4981 = vmatprep.subr.bf16.mxu0 0
      %4982 = vmatpush2.bf16.msra.mxu0 %v4887
      %4983 = vmatprep.subr.bf16.mxu0 0
      %4984 = vmatpush2.bf16.msra.mxu0 %v4886
      %4985 = vmatprep.subr.bf16.mxu0 0
      %4986 = vmatpush2.bf16.msra.mxu0 %v4885
      %4987 = vmatprep.mubr.bf16.mxu0 %v4940
      %4988 = vmatmul.mubr.bf16.gmra.mxu0 %v4939
      %v4989 = vpop.f32.mrf.mxu0
      %v4990 = vadd.f32 %v4902, %v4989
      %v4991 = vpop.f32.mrf.mxu0
      %v4992 = vpop.f32.mrf.mxu0
      %v4993 = vadd.f32 %v4907, %v4992
      %v4994 = vpop.f32.mrf.mxu0
      %4995 = vmatprep.mubr.bf16.mxu0 %v4943
      %4996 = vmatmul.mubr.bf16.gmra.mxu0 %v4942
      %v4997 = vpop.f32.mrf.mxu0
      %v4998 = vadd.f32 %v4912, %v4997
      %v4999 = vpop.f32.mrf.mxu0
      %v5000 = vpop.f32.mrf.mxu0
      %v5001 = vadd.f32 %v4917, %v5000
      %v5002 = vpop.f32.mrf.mxu0
      %5003 = vdwg.mxu0
      %5004 = vmatprep.subr.bf16.mxu0 0
      %5005 = vmatpush1.bf16.msra.mxu0 0
      %5006 = vmatprep.subr.bf16.mxu0 0
      %5007 = vmatpush1.bf16.msra.mxu0 0
      %5008 = vmatprep.subr.bf16.mxu0 0
      %5009 = vmatpush1.bf16.msra.mxu0 0
      %5010 = vmatprep.subr.bf16.mxu0 0
      %5011 = vmatpush1.bf16.msra.mxu0 0
      %5012 = vmatprep.subr.bf16.mxu0 0
      %5013 = vmatpush1.bf16.msra.mxu0 0
      %5014 = vmatprep.subr.bf16.mxu0 0
      %5015 = vmatpush1.bf16.msra.mxu0 0
      %5016 = vmatprep.subr.bf16.mxu0 0
      %5017 = vmatpush1.bf16.msra.mxu0 %v4894
      %5018 = vmatprep.subr.bf16.mxu0 0
      %5019 = vmatpush1.bf16.msra.mxu0 %v4893
      %5020 = vmatprep.subr.bf16.mxu0 0
      %5021 = vmatpush2.bf16.msra.mxu0 0
      %5022 = vmatprep.subr.bf16.mxu0 0
      %5023 = vmatpush2.bf16.msra.mxu0 0
      %5024 = vmatprep.subr.bf16.mxu0 0
      %5025 = vmatpush2.bf16.msra.mxu0 0
      %5026 = vmatprep.subr.bf16.mxu0 0
      %5027 = vmatpush2.bf16.msra.mxu0 0
      %5028 = vmatprep.subr.bf16.mxu0 0
      %5029 = vmatpush2.bf16.msra.mxu0 0
      %5030 = vmatprep.subr.bf16.mxu0 0
      %5031 = vmatpush2.bf16.msra.mxu0 0
      %5032 = vmatprep.subr.bf16.mxu0 0
      %5033 = vmatpush2.bf16.msra.mxu0 0
      %5034 = vmatprep.subr.bf16.mxu0 0
      %5035 = vmatpush2.bf16.msra.mxu0 0
      %5036 = vmatprep.mubr.bf16.mxu0 0
      %5037 = vmatmul.mubr.bf16.gmra.mxu0 %v4950
      %v5038 = vpop.f32.mrf.mxu0
      %v5039 = vadd.f32 %v4990, %v5038
      %v5040 = vpop.f32.mrf.mxu0
      %v5041 = vpop.f32.mrf.mxu0
      %v5042 = vadd.f32 %v4993, %v5041
      %v5043 = vpop.f32.mrf.mxu0
      %5044 = vmatprep.mubr.bf16.mxu0 0
      %5045 = vmatmul.mubr.bf16.gmra.mxu0 %v4953
      %v5046 = vpop.f32.mrf.mxu0
      %v5047 = vadd.f32 %v4998, %v5046
      %v5048 = vpop.f32.mrf.mxu0
      %v5049 = vpop.f32.mrf.mxu0
      %v5050 = vadd.f32 %v5001, %v5049
      %v5051 = vpop.f32.mrf.mxu0
      %5052 = vdwg.mxu0
      %v5053 = vsel %vm3490, %v5039, 0.0
      %5054 = vadd.xlane.f32.xlu0 %v5053
      %v5055 = vpop.xlane.xlu0 %5054
      %v5056 = vsel %vm3490, %v5042, 0.0
      %5057 = vadd.xlane.f32.xlu0 %v5056
      %v5058 = vpop.xlane.xlu0 %5057
      %v5059 = vsel %vm3490, %v5047, 0.0
      %5060 = vadd.xlane.f32.xlu0 %v5059
      %v5061 = vpop.xlane.xlu0 %5060
      %v5062 = vsel %vm3490, %v5050, 0.0
      %5063 = vadd.xlane.f32.xlu0 %v5062
      %v5064 = vpop.xlane.xlu0 %5063
      %v5065 = vmul.f32 %v5055, %v4118
      %v5066 = vmul.f32 %v5058, %v4118
      %v5067 = vmul.f32 %v5061, %v4118
      %v5068 = vmul.f32 %v5064, %v4118
      %v5069 = vsub.f32 %v5039, %v5065
      %v5070 = vsub.f32 %v5042, %v5066
      %v5071 = vsub.f32 %v5047, %v5067
      %v5072 = vsub.f32 %v5050, %v5068
      %v5073 = vmul.f32 %v5069, %v5069
      %v5074 = vmul.f32 %v5070, %v5070
      %v5075 = vmul.f32 %v5071, %v5071
      %v5076 = vmul.f32 %v5072, %v5072
      %v5077 = vsel %vm3490, %v5073, 0.0
      %5078 = vadd.xlane.f32.xlu0 %v5077
      %v5079 = vpop.xlane.xlu0 %5078
      %v5080 = vsel %vm3490, %v5074, 0.0
      %5081 = vadd.xlane.f32.xlu0 %v5080
      %v5082 = vpop.xlane.xlu0 %5081
      %v5083 = vsel %vm3490, %v5075, 0.0
      %5084 = vadd.xlane.f32.xlu0 %v5083
      %v5085 = vpop.xlane.xlu0 %5084
      %v5086 = vsel %vm3490, %v5076, 0.0
      %5087 = vadd.xlane.f32.xlu0 %v5086
      %v5088 = vpop.xlane.xlu0 %5087
      %v5089 = vmul.f32 %v5079, %v4118
      %v5090 = vmul.f32 %v5082, %v4118
      %v5091 = vmul.f32 %v5085, %v4118
      %v5092 = vmul.f32 %v5088, %v4118
      %v5093 = vadd.f32 %v5089, 1e-05
      %v5094 = vadd.f32 %v5090, 1e-05
      %v5095 = vadd.f32 %v5091, 1e-05
      %v5096 = vadd.f32 %v5092, 1e-05
      %v5097 = vrsqrt.pop %v5093
      %v5098 = vrsqrt.pop %v5094
      %v5099 = vrsqrt.pop %v5095
      %v5100 = vrsqrt.pop %v5096
      %v5101 = vmul.f32 %v5069, %v5097
      %v5102 = vmul.f32 %v5070, %v5098
      %v5103 = vmul.f32 %v5071, %v5099
      %v5104 = vmul.f32 %v5072, %v5100
      %v5105 = vadd.f32 %v5101, %v4159
      %v5106 = vadd.f32 %v5102, %v4160
      %v5107 = vadd.f32 %v5103, %v4161
      %v5108 = vadd.f32 %v5104, %v4162
      %5109 = vst.msk [vmem:[%s544] sm:$0xff] %vm3490, %v5105
      %5110 = vst.msk [vmem:[%s544 + $0x8] sm:$0xff] %vm3490, %v5106
      %5111 = vst.msk [vmem:[%s544 + $0x10] sm:$0xff] %vm3490, %v5107
      %5112 = vst.msk [vmem:[%s544 + $0x18] sm:$0xff] %vm3490, %v5108
      %p5113 = scmp.lt.s32.totalorder %s28, 1
      %s5114 = scalar_select %p5113, %s28, 1
      %s5115 = smul.addr %s5114, 2
      %s5116 = smul.addr %s5115, 8
      %s5117 = scalar_lea.vmem %s14, %s5116
      %p5118 = scmp.lt.s32.totalorder %s28, 1
      %s5119 = scalar_select %p5118, %s28, 1
      %s5120 = smul.addr %s5119, 8
      %s5121 = scalar_lea.vmem %s15, %s5120
      %p5122 = scmp.lt.s32.totalorder %s28, 1
      %s5123 = scalar_select %p5122, %s28, 1
      %s5124 = smul.addr %s5123, 4
      %s5125 = smul.addr %s5124, 8
      %s5126 = scalar_lea.vmem %s16, %s5125
      // Predicated region
      $region77: #{forward.1} parent=75 // pred_check
        %p5127 = pneg %p345
      $region78: #{forward.1} parent=75 // pred_check_branch
        %5129 = sbr.rel (%p5127) target = $region80
      $region79: #{forward.1} parent=75 // pred_region
        _
      $region80: #{forward.1} parent=75 // pred_fallthru
        _
      // Predicated region
      $region81: #{forward.1} parent=75 // pred_check
        %p5130 = pneg %p371
      $region82: #{forward.1} parent=75 // pred_check_branch
        %5132 = sbr.rel (%p5130) target = $region84
      $region83: #{forward.1} parent=75 // pred_region
        _
      $region84: #{forward.1} parent=75 // pred_fallthru
        _
      // Predicated region
      $region85: #{forward.1} parent=75 // pred_check
        %p5133 = pneg %p397
      $region86: #{forward.1} parent=75 // pred_check_branch
        %5135 = sbr.rel (%p5133) target = $region88
      $region87: #{forward.1} parent=75 // pred_region
        _
      $region88: #{forward.1} parent=75 // pred_fallthru
        _
    $region76: #{forward.1} parent=5 // pred_fallthru
      _
    %p5136 = scmp.le.s32.totalorder 2, %s23
    // Predicated region
    $region89: #{forward.1} parent=5 // pred_check
      %p5137 = pneg %p5136
    $region90: #{forward.1} parent=5 // pred_check_branch
      %5139 = sbr.rel (%p5137) target = $region92
    $region91: #{forward.1} parent=5 // pred_region
      %s5140 = ssub.s32 %s23, 2
      // Predicated region
      $region93: #{forward.1} parent=91 // pred_check
        %p5141 = pneg %p351
      $region94: #{forward.1} parent=91 // pred_check_branch
        %5143 = sbr.rel (%p5141) target = $region96
      $region95: #{forward.1} parent=91 // pred_region
        %p5144 = scmp.lt.s32.totalorder %s29, 1
        %s5145 = scalar_select %p5144, %s29, 1
        %s5146 = smul.addr %s5145, 2
        %s5147 = smul.addr %s5146, 8
        %s5148 = scalar_lea.vmem %s14, %s5147
      $region96: #{forward.1} parent=91 // pred_fallthru
        _
      // Predicated region
      $region97: #{forward.1} parent=91 // pred_check
        %p5149 = pneg %p377
      $region98: #{forward.1} parent=91 // pred_check_branch
        %5151 = sbr.rel (%p5149) target = $region100
      $region99: #{forward.1} parent=91 // pred_region
        %p5152 = scmp.lt.s32.totalorder %s29, 1
        %s5153 = scalar_select %p5152, %s29, 1
        %s5154 = smul.addr %s5153, 8
        %s5155 = scalar_lea.vmem %s15, %s5154
      $region100: #{forward.1} parent=91 // pred_fallthru
        _
      // Predicated region
      $region101: #{forward.1} parent=91 // pred_check
        %p5156 = pneg %p403
      $region102: #{forward.1} parent=91 // pred_check_branch
        %5158 = sbr.rel (%p5156) target = $region104
      $region103: #{forward.1} parent=91 // pred_region
        %p5159 = scmp.lt.s32.totalorder %s29, 1
        %s5160 = scalar_select %p5159, %s29, 1
        %s5161 = smul.addr %s5160, 4
        %s5162 = smul.addr %s5161, 8
        %s5163 = scalar_lea.vmem %s16, %s5162
      $region104: #{forward.1} parent=91 // pred_fallthru
        _
    $region92: #{forward.1} parent=5 // pred_fallthru
      _
  $region6: #{forward.1} parent=0 // loop_footer
    %s27 = sadd.s32 1, %s23
  $region7: #{forward.1} parent=0 // loop_footer_branch
    %22 = sbr.rel target = $region3
  $region8: #{forward.1} parent=0 // loop_exit
    _

</llo_original>
